<compile_context>
chip_gen: v5e
topology: v5e:2x2
jax: 0.10.0
libtpu: 0.0.40
codegen_flags: <defaults>
</compile_context>

<pallas_src>
import functools

import jax
import jax.numpy as jnp
from jax import lax
from jax.experimental import pallas as pl
from jax.experimental.pallas import tpu as pltpu

LANE = 128


def _round_up(v, m):
    return (v + m - 1) // m * m


def _halo_rows(W):
    # Two valid 3x3 convs need 4 extra image rows of context; the flat-slab
    # trick additionally reads up to 4 flat elements past the last needed row,
    # i.e. ceil(4 / W) extra image rows (1 when W >= 4).  Handles any W >= 1.
    return 4 + -(-4 // W)


def _tile_geometry(TH, W):
    HT = TH + _halo_rows(W)          # image rows per tile (with halo)
    R0 = HT * W                      # flat input rows per tile
    R1 = (TH + 2) * W + 2            # conv1 output rows consumed by conv2
    R2 = TH * W                      # conv2 / deconv output rows per tile
    return HT, R0, R1, R2


def _estimate_vmem_bytes(TH, W, Cp, Cm, Co, io_bytes):
    """Rough per-grid-step VMEM footprint used to pick the row tile."""
    _, R0, R1, R2 = _tile_geometry(TH, W)
    b = io_bytes
    scratch = R0 * Cp * b + R1 * Cm * b + R1 * Cm * 4        # xbuf + a1buf + f32 acc
    transient = R1 * max(Cp, Cm) * b + R1 * Cm * 4 + R2 * Cm * b   # tap slab / dot temp / a2
    out = 2 * R2 * 4 * Co * b + R2 * 4 * Co * 4              # dbl-buffered out + f32 deconv temp
    weights = (9 * Cp * Cm + 9 * Cm * Cm + Cm * 4 * Co) * b + (6 * Cm + 4 * Co) * 4
    return scratch + transient + out + weights


# --------------------------------------------------------------------------- kernel
def _decoder_block_kernel(x_hbm, w1_ref, s1_ref, b1_ref, w2_ref, s2_ref, b2_ref,
                          wd_ref, bd_ref, o_ref, xbuf, a1buf, acc_ref, sem,
                          *, W, TH, R0, R1, R2):
    """One (batch, row-tile) grid step.

    x_hbm : (N, H_pad*W, Cp) HBM ref (memory_space=pl.ANY)
    w1/w2 : (9, Cin_pad, Cout_pad) per-tap conv weights (io dtype)
    s*/b* : (1, C) folded BN scale / bias (f32)
    wd    : (Cm, 4*Co) deconv weight, columns ordered (di, dj, cout)
    o_ref : (1, 1, R2, 4*Co) output block (io dtype)
    xbuf  : (R0, Cp) VMEM input slab     a1buf: (R1, Cm) conv1 activations
    acc_ref: (R1, Cm) f32 accumulator shared by conv1 (R1 rows) and conv2 (R2 rows)
    """
    n = pl.program_id(0)
    r = pl.program_id(1)
    f32 = jnp.float32

    # Fetch the overlapping flat input window for this row tile straight from
    # HBM (no stacked / duplicated halo tiles in HBM).
    start = pl.multiple_of(r * (TH * W), (TH * W) & -(TH * W))
    cp = pltpu.make_async_copy(x_hbm.at[n, pl.ds(start, R0), :], xbuf, sem)
    cp.start()
    acc_ref[...] = jnp.zeros_like(acc_ref)     # overlap the zero-fill with the DMA
    cp.wait()

    # conv1 (3x3 valid) + BN + ReLU: nine accumulated K=Cp matmuls.  Each tap
    # slice is loaded from VMEM and consumed immediately; the ref accumulation
    # serializes the taps so only one shifted slab is live at a time.
    for di in range(3):
        for dj in range(3):
            off = di * W + dj
            xs = xbuf[off:off + R1, :]
            acc_ref[...] += jnp.dot(xs, w1_ref[3 * di + dj],
                                    preferred_element_type=f32)
    a1buf[...] = jnp.maximum(acc_ref[...] * s1_ref[...] + b1_ref[...], 0.0
                             ).astype(a1buf.dtype)

    # conv2 (3x3 valid) + BN + ReLU, reusing the first R2 rows of the same
    # f32 accumulator (same flat layout, same row stride W).
    acc_ref[0:R2, :] = jnp.zeros((R2, acc_ref.shape[1]), f32)
    for di in range(3):
        for dj in range(3):
            off = di * W + dj
            xs = a1buf[off:off + R2, :]
            acc_ref[0:R2, :] += jnp.dot(xs, w2_ref[3 * di + dj],
                                        preferred_element_type=f32)
    a2 = jnp.maximum(acc_ref[0:R2, :] * s2_ref[...] + b2_ref[...], 0.0
                     ).astype(a1buf.dtype)

    # ConvTranspose2d(k=2, s=2): one matmul emitting the four (di, dj)
    # sub-pixel planes; the stride-2 interleave is a reshape in the wrapper.
    yd = jnp.dot(a2, wd_ref[...], preferred_element_type=f32) + bd_ref[...]
    o_ref[0, 0] = yd.astype(o_ref.dtype)


# --------------------------------------------------------------------------- wrapper
def decoder_block_forward(x_nchw, p, *, eps=1e-5, row_tile=None,
                          io_dtype=jnp.bfloat16):
    """Forward pass of _DecoderBlock: (N, Cin, H, W) -> (N, Cout, 2(H-4), 2(W-4)).

    With the default io_dtype=bfloat16, inter-stage activations are rounded to
    bf16 (accumulation stays f32); expect ~1e-2 relative deviation from an f32
    PyTorch reference.  Pass io_dtype=jnp.float32 for tighter numerics.
    """
    N, Cin, H, W = x_nchw.shape
    Cmid = p["conv1_w"].shape[0]
    Cout = p["deconv_w"].shape[1]
    Ho, Wo = H - 4, W - 4
    assert Ho >= 1 and Wo >= 1, "input too small for two valid 3x3 convolutions"

    Cp = _round_up(Cin, LANE)
    Cm = _round_up(Cmid, LANE)
    Co = _round_up(Cout, LANE)
    io_bytes = jnp.dtype(io_dtype).itemsize

    # ---- per-generation VMEM budget -> largest row tile that fits.
    try:
        vmem_cap = int(getattr(pltpu.get_tpu_info(), "vmem_capacity_bytes",
                               64 * 1024 * 1024))
    except Exception:
        vmem_cap = 64 * 1024 * 1024        # conservative (v7x-sized) fallback
    budget = vmem_cap // 2

    TH = min(Ho, row_tile) if row_tile else min(Ho, 128)
    TH = max(TH, 1)
    while TH > 1 and _estimate_vmem_bytes(TH, W, Cp, Cm, Co, io_bytes) > budget:
        TH = max(1, TH // 2)
    if N * pl.cdiv(Ho, TH) < 2 and Ho >= 2:
        TH = -(-Ho // 2)                   # >= 2 grid steps for v7x's two cores
    n_t = pl.cdiv(Ho, TH)
    HT, R0, R1, R2 = _tile_geometry(TH, W)
    H_pad = (n_t - 1) * TH + HT

    # ---- activations: NCHW -> NHWC (io dtype), pad channels to a lane
    #      multiple and rows for the last tile's halo, flatten (H, W) -> rows.
    x = jnp.transpose(x_nchw, (0, 2, 3, 1)).astype(io_dtype)
    x = jnp.pad(x, ((0, 0), (0, H_pad - H), (0, 0), (0, Cp - Cin)))
    x_flat = x.reshape(N, H_pad * W, Cp)

    # ---- weights: fold inference-mode BN into per-channel scale/bias, and lay
    #      conv weights out as (tap, Cin_pad, Cout_pad) per-tap matmul operands.
    def conv_w(w_oihw, cin_p, cout_p):
        w = jnp.transpose(w_oihw, (2, 3, 1, 0))                  # OIHW -> HWIO
        w = jnp.pad(w, ((0, 0), (0, 0),
                        (0, cin_p - w.shape[2]), (0, cout_p - w.shape[3])))
        return w.reshape(9, cin_p, cout_p).astype(io_dtype)

    def bn_fold(gamma, beta, mean, var, conv_b, cout_p):
        s = gamma / jnp.sqrt(var + eps)
        b = beta + (conv_b - mean) * s
        s = jnp.pad(s, (0, cout_p - s.shape[0])).reshape(1, cout_p).astype(jnp.float32)
        b = jnp.pad(b, (0, cout_p - b.shape[0])).reshape(1, cout_p).astype(jnp.float32)
        return s, b

    w1 = conv_w(p["conv1_w"], Cp, Cm)
    s1, b1 = bn_fold(p["bn1_gamma"], p["bn1_beta"], p["bn1_mean"], p["bn1_var"],
                     p["conv1_b"], Cm)
    w2 = conv_w(p["conv2_w"], Cm, Cm)
    s2, b2 = bn_fold(p["bn2_gamma"], p["bn2_beta"], p["bn2_mean"], p["bn2_var"],
                     p["conv2_b"], Cm)

    wd = jnp.transpose(p["deconv_w"], (0, 2, 3, 1))              # (Cmid, 2, 2, Cout)
    wd = jnp.pad(wd, ((0, Cm - Cmid), (0, 0), (0, 0), (0, Co - Cout)))
    wd = wd.reshape(Cm, 4 * Co).astype(io_dtype)                 # cols: (di, dj, co)
    bd = jnp.tile(jnp.pad(p["deconv_b"], (0, Co - Cout)), 4)
    bd = bd.reshape(1, 4 * Co).astype(jnp.float32)

    kernel = functools.partial(_decoder_block_kernel,
                               W=W, TH=TH, R0=R0, R1=R1, R2=R2)
    const = pl.Buffered(1)       # constant operands: fetched once, single buffer

    y = pl.pallas_call(
        kernel,
        out_shape=jax.ShapeDtypeStruct((N, n_t, R2, 4 * Co), io_dtype),
        grid=(N, n_t),
        in_specs=[
            pl.BlockSpec(memory_space=pl.ANY),                   # raw HBM input
            pl.BlockSpec((9, Cp, Cm), lambda n, r: (0, 0, 0), pipeline_mode=const),
            pl.BlockSpec((1, Cm), lambda n, r: (0, 0), pipeline_mode=const),
            pl.BlockSpec((1, Cm), lambda n, r: (0, 0), pipeline_mode=const),
            pl.BlockSpec((9, Cm, Cm), lambda n, r: (0, 0, 0), pipeline_mode=const),
            pl.BlockSpec((1, Cm), lambda n, r: (0, 0), pipeline_mode=const),
            pl.BlockSpec((1, Cm), lambda n, r: (0, 0), pipeline_mode=const),
            pl.BlockSpec((Cm, 4 * Co), lambda n, r: (0, 0), pipeline_mode=const),
            pl.BlockSpec((1, 4 * Co), lambda n, r: (0, 0), pipeline_mode=const),
        ],
        out_specs=pl.BlockSpec((1, 1, R2, 4 * Co), lambda n, r: (n, r, 0, 0)),
        scratch_shapes=[
            pltpu.VMEM((R0, Cp), io_dtype),          # input slab (with halo)
            pltpu.VMEM((R1, Cm), io_dtype),          # conv1 activations
            pltpu.VMEM((R1, Cm), jnp.float32),       # shared f32 conv accumulator
            pltpu.SemaphoreType.DMA,
        ],
        compiler_params=pltpu.CompilerParams(
            dimension_semantics=("parallel", "parallel"),
            vmem_limit_bytes=int(vmem_cap * 3 // 4),
        ),
    )(x_flat, w1, s1, b1, w2, s2, b2, wd, bd)

    # ---- stride-2 sub-pixel interleave + NHWC->NCHW, done in io_dtype; the
    #      cast back to the caller dtype fuses into the transpose.  (Garbage
    #      rows/cols from zero row padding and flat-slab wraparound are finite
    #      and sliced away here.)
    y = y.reshape(N, n_t * TH, W, 2, 2, Co)[:, :Ho, :Wo, :, :, :Cout]
    y = jnp.transpose(y, (0, 5, 1, 3, 2, 4)).reshape(N, Cout, 2 * Ho, 2 * Wo)
    return y.astype(x_nchw.dtype)


# --------------------------------------------------------------------------- reference & init
def reference_forward(x_nchw, p, eps=1e-5):
    """Pure-XLA reference (inference-mode BN) used for a numerical self-check."""
    def conv_bn_relu(x, w, cb, g, b, m, v):
        y = lax.conv_general_dilated(x, w, (1, 1), "VALID",
                                     dimension_numbers=("NCHW", "OIHW", "NCHW"))
        y = y + cb[None, :, None, None]
        y = (y - m[None, :, None, None]) * (g / jnp.sqrt(v + eps))[None, :, None, None] \
            + b[None, :, None, None]
        return jnp.maximum(y, 0.0)

    y = conv_bn_relu(x_nchw, p["conv1_w"], p["conv1_b"], p["bn1_gamma"],
                     p["bn1_beta"], p["bn1_mean"], p["bn1_var"])
    y = conv_bn_relu(y, p["conv2_w"], p["conv2_b"], p["bn2_gamma"],
                     p["bn2_beta"], p["bn2_mean"], p["bn2_var"])
    w = p["deconv_w"]                                            # (Cmid, Cout, 2, 2)
    yd = jnp.einsum("nchw,cokl->nohkwl", y, w)
    n, co, hh, _, ww, _ = yd.shape
    return yd.reshape(n, co, 2 * hh, 2 * ww) + p["deconv_b"][None, :, None, None]


def init_params(key, in_channels, middle_channels, out_channels):
    """Parameters in PyTorch layouts: conv OIHW, deconv (in, out, kH, kW)."""
    ks = jax.random.split(key, 14)
    f32 = jnp.float32
    return {
        "conv1_w": 0.1 * jax.random.normal(ks[0], (middle_channels, in_channels, 3, 3), f32),
        "conv1_b": 0.1 * jax.random.normal(ks[1], (middle_channels,), f32),
        "bn1_gamma": 1.0 + 0.1 * jax.random.normal(ks[2], (middle_channels,), f32),
        "bn1_beta": 0.1 * jax.random.normal(ks[3], (middle_channels,), f32),
        "bn1_mean": 0.1 * jax.random.normal(ks[4], (middle_channels,), f32),
        "bn1_var": 0.5 + jnp.abs(jax.random.normal(ks[5], (middle_channels,), f32)),
        "conv2_w": 0.1 * jax.random.normal(ks[6], (middle_channels, middle_channels, 3, 3), f32),
        "conv2_b": 0.1 * jax.random.normal(ks[7], (middle_channels,), f32),
        "bn2_gamma": 1.0 + 0.1 * jax.random.normal(ks[8], (middle_channels,), f32),
        "bn2_beta": 0.1 * jax.random.normal(ks[9], (middle_channels,), f32),
        "bn2_mean": 0.1 * jax.random.normal(ks[10], (middle_channels,), f32),
        "bn2_var": 0.5 + jnp.abs(jax.random.normal(ks[11], (middle_channels,), f32)),
        "deconv_w": 0.1 * jax.random.normal(ks[12], (middle_channels, out_channels, 2, 2), f32),
        "deconv_b": 0.1 * jax.random.normal(ks[13], (out_channels,), f32),
    }


if __name__ == "__main__":
    N, Cin, H, W = 2, 4, 16, 16
    Cmid, Cout = 8, 4

    key = jax.random.PRNGKey(0)
    kx, kp = jax.random.split(key)
    x = jax.random.normal(kx, (N, Cin, H, W), jnp.float32)       # NCHW, like PyTorch
    params = init_params(kp, Cin, Cmid, Cout)

    # row_tile=8 -> two row tiles (exercises the ragged last tile, the
    # multi-step grid and the overlapping manual DMA windows); bf16 I/O default.
    fwd = jax.jit(functools.partial(decoder_block_forward, row_tile=8))
    out = jax.block_until_ready(fwd(x, params))

    # 16 --conv3--> 14 --conv3--> 12 --deconv2,s2--> 24
    assert out.shape == (N, Cout, 2 * (H - 4), 2 * (W - 4)), out.shape
    assert bool(jnp.all(jnp.isfinite(out)))

    # Numerical self-check against a pure-XLA f32 reference (tolerance covers
    # bf16 I/O rounding and the MXU's default matmul precision).
    ref = reference_forward(x, params)
    err = float(jnp.max(jnp.abs(out - ref)))
    tol = 5e-2 * (float(jnp.max(jnp.abs(ref))) + 1e-6)
    assert err <= tol, (err, tol)

    print("KERNEL_OK")
</pallas_src>

<mosaic_0001>
module attributes {stable_mosaic.version = 11 : i64} {
  func.func @_decoder_block_kernel(%arg0: i32, %arg1: i32, %arg2: memref<2x336x128xbf16, #tpu.memory_space<any>>, %arg3: memref<9x128x128xbf16, #tpu.memory_space<vmem>>, %arg4: memref<1x128xf32, #tpu.memory_space<vmem>>, %arg5: memref<1x128xf32, #tpu.memory_space<vmem>>, %arg6: memref<9x128x128xbf16, #tpu.memory_space<vmem>>, %arg7: memref<1x128xf32, #tpu.memory_space<vmem>>, %arg8: memref<1x128xf32, #tpu.memory_space<vmem>>, %arg9: memref<128x512xbf16, #tpu.memory_space<vmem>>, %arg10: memref<1x512xf32, #tpu.memory_space<vmem>>, %arg11: memref<1x1x128x512xbf16, #tpu.memory_space<vmem>>, %arg12: memref<208x128xbf16, #tpu.memory_space<vmem>>, %arg13: memref<162x128xbf16, #tpu.memory_space<vmem>>, %arg14: memref<162x128xf32, #tpu.memory_space<vmem>>, %arg15: memref<!tpu.dma_semaphore, #tpu.memory_space<semaphore_mem>>) attributes {dimension_semantics = [#tpu.dimension_semantics<parallel>, #tpu.dimension_semantics<parallel>], iteration_bounds = array<i64: 2, 2>, scalar_prefetch = 0 : i64, scratch_operands = 4 : i64, tpu.core_type = #tpu.core_type<tc>, window_params = [{}, {pipeline_mode = #tpu.pipeline_mode<synchronous>, transform_indices = @transform_1, window_bounds = array<i64: 9, 128, 128>}, {pipeline_mode = #tpu.pipeline_mode<synchronous>, transform_indices = @transform_2, window_bounds = array<i64: 1, 128>}, {pipeline_mode = #tpu.pipeline_mode<synchronous>, transform_indices = @transform_3, window_bounds = array<i64: 1, 128>}, {pipeline_mode = #tpu.pipeline_mode<synchronous>, transform_indices = @transform_4, window_bounds = array<i64: 9, 128, 128>}, {pipeline_mode = #tpu.pipeline_mode<synchronous>, transform_indices = @transform_5, window_bounds = array<i64: 1, 128>}, {pipeline_mode = #tpu.pipeline_mode<synchronous>, transform_indices = @transform_6, window_bounds = array<i64: 1, 128>}, {pipeline_mode = #tpu.pipeline_mode<synchronous>, transform_indices = @transform_7, window_bounds = array<i64: 128, 512>}, {pipeline_mode = #tpu.pipeline_mode<synchronous>, transform_indices = @transform_8, window_bounds = array<i64: 1, 512>}, {transform_indices = @transform_9, window_bounds = array<i64: 1, 1, 128, 512>}]} {
    %c128_i32 = arith.constant 128 : i32
    %0 = arith.muli %arg1, %c128_i32 : i32
    %1 = tpu.assume_multiple %0, 128 : i32
    %c0_i32 = arith.constant 0 : i32
    %2 = tpu.memref_slice %arg2[%arg0, %1, %c0_i32] : memref<2x336x128xbf16, #tpu.memory_space<any>> -> memref<1x208x128xbf16, #tpu.memory_space<any>>
    %3 = tpu.memref_squeeze %2 : memref<1x208x128xbf16, #tpu.memory_space<any>> -> memref<208x128xbf16, #tpu.memory_space<any>>
    tpu.enqueue_dma source(%3 : memref<208x128xbf16, #tpu.memory_space<any>>) target(%arg12 : memref<208x128xbf16, #tpu.memory_space<vmem>>) target_semaphore(%arg15 : memref<!tpu.dma_semaphore, #tpu.memory_space<semaphore_mem>>)
    %cst = arith.constant 0.000000e+00 : f32
    %4 = vector.broadcast %cst : f32 to vector<162x128xf32>
    %c0 = arith.constant 0 : index
    %c0_0 = arith.constant 0 : index
    %5 = vector.load %arg14[%c0, %c0_0] : memref<162x128xf32, #tpu.memory_space<vmem>>, vector<162x128xf32>
    tpu.vector_store %arg14[%c0, %c0_0], %4 {strides = array<i32>} : memref<162x128xf32, #tpu.memory_space<vmem>>, vector<162x128xf32>,
    %c0_i32_1 = arith.constant 0 : i32
    %6 = tpu.memref_slice %arg2[%arg0, %1, %c0_i32_1] : memref<2x336x128xbf16, #tpu.memory_space<any>> -> memref<1x208x128xbf16, #tpu.memory_space<any>>
    %7 = tpu.memref_squeeze %6 : memref<1x208x128xbf16, #tpu.memory_space<any>> -> memref<208x128xbf16, #tpu.memory_space<any>>
    tpu.wait_dma2 semaphore(%arg15 : memref<!tpu.dma_semaphore, #tpu.memory_space<semaphore_mem>>) src(%7 : memref<208x128xbf16, #tpu.memory_space<any>>) dst(%arg12 : memref<208x128xbf16, #tpu.memory_space<vmem>>)
    %c0_2 = arith.constant 0 : index
    %c0_3 = arith.constant 0 : index
    %8 = vector.load %arg12[%c0_2, %c0_3] : memref<208x128xbf16, #tpu.memory_space<vmem>>, vector<162x128xbf16>
    %c0_4 = arith.constant 0 : index
    %c0_5 = arith.constant 0 : index
    %9 = vector.load %arg14[%c0_4, %c0_5] : memref<162x128xf32, #tpu.memory_space<vmem>>, vector<162x128xf32>
    %c0_6 = arith.constant 0 : index
    %c0_7 = arith.constant 0 : index
    %c0_8 = arith.constant 0 : index
    %10 = vector.load %arg3[%c0_6, %c0_7, %c0_8] : memref<9x128x128xbf16, #tpu.memory_space<vmem>>, vector<1x128x128xbf16>
    %11 = vector.shape_cast %10 : vector<1x128x128xbf16> to vector<128x128xbf16>
    %cst_9 = arith.constant dense<0.000000e+00> : vector<162x128xf32>
    %12 = tpu.matmul %8, %11, %cst_9 {dimension_numbers = #tpu.dot_dimension_numbers<[1], [0], [0], [1], [0, 0, 1, 1], [], []>} : vector<162x128xbf16>, vector<128x128xbf16>, vector<162x128xf32> -> vector<162x128xf32>
    %13 = arith.addf %9, %12 : vector<162x128xf32>
    %c0_10 = arith.constant 0 : index
    %c0_11 = arith.constant 0 : index
    %14 = vector.load %arg14[%c0_10, %c0_11] : memref<162x128xf32, #tpu.memory_space<vmem>>, vector<162x128xf32>
    tpu.vector_store %arg14[%c0_10, %c0_11], %13 {strides = array<i32>} : memref<162x128xf32, #tpu.memory_space<vmem>>, vector<162x128xf32>,
    %c1 = arith.constant 1 : index
    %c0_12 = arith.constant 0 : index
    %15 = vector.load %arg12[%c1, %c0_12] : memref<208x128xbf16, #tpu.memory_space<vmem>>, vector<162x128xbf16>
    %c0_13 = arith.constant 0 : index
    %c0_14 = arith.constant 0 : index
    %16 = vector.load %arg14[%c0_13, %c0_14] : memref<162x128xf32, #tpu.memory_space<vmem>>, vector<162x128xf32>
    %c1_15 = arith.constant 1 : index
    %c0_16 = arith.constant 0 : index
    %c0_17 = arith.constant 0 : index
    %17 = vector.load %arg3[%c1_15, %c0_16, %c0_17] : memref<9x128x128xbf16, #tpu.memory_space<vmem>>, vector<1x128x128xbf16>
    %18 = vector.shape_cast %17 : vector<1x128x128xbf16> to vector<128x128xbf16>
    %cst_18 = arith.constant dense<0.000000e+00> : vector<162x128xf32>
    %19 = tpu.matmul %15, %18, %cst_18 {dimension_numbers = #tpu.dot_dimension_numbers<[1], [0], [0], [1], [0, 0, 1, 1], [], []>} : vector<162x128xbf16>, vector<128x128xbf16>, vector<162x128xf32> -> vector<162x128xf32>
    %20 = arith.addf %16, %19 : vector<162x128xf32>
    %c0_19 = arith.constant 0 : index
    %c0_20 = arith.constant 0 : index
    %21 = vector.load %arg14[%c0_19, %c0_20] : memref<162x128xf32, #tpu.memory_space<vmem>>, vector<162x128xf32>
    tpu.vector_store %arg14[%c0_19, %c0_20], %20 {strides = array<i32>} : memref<162x128xf32, #tpu.memory_space<vmem>>, vector<162x128xf32>,
    %c2 = arith.constant 2 : index
    %c0_21 = arith.constant 0 : index
    %22 = vector.load %arg12[%c2, %c0_21] : memref<208x128xbf16, #tpu.memory_space<vmem>>, vector<162x128xbf16>
    %c0_22 = arith.constant 0 : index
    %c0_23 = arith.constant 0 : index
    %23 = vector.load %arg14[%c0_22, %c0_23] : memref<162x128xf32, #tpu.memory_space<vmem>>, vector<162x128xf32>
    %c2_24 = arith.constant 2 : index
    %c0_25 = arith.constant 0 : index
    %c0_26 = arith.constant 0 : index
    %24 = vector.load %arg3[%c2_24, %c0_25, %c0_26] : memref<9x128x128xbf16, #tpu.memory_space<vmem>>, vector<1x128x128xbf16>
    %25 = vector.shape_cast %24 : vector<1x128x128xbf16> to vector<128x128xbf16>
    %cst_27 = arith.constant dense<0.000000e+00> : vector<162x128xf32>
    %26 = tpu.matmul %22, %25, %cst_27 {dimension_numbers = #tpu.dot_dimension_numbers<[1], [0], [0], [1], [0, 0, 1, 1], [], []>} : vector<162x128xbf16>, vector<128x128xbf16>, vector<162x128xf32> -> vector<162x128xf32>
    %27 = arith.addf %23, %26 : vector<162x128xf32>
    %c0_28 = arith.constant 0 : index
    %c0_29 = arith.constant 0 : index
    %28 = vector.load %arg14[%c0_28, %c0_29] : memref<162x128xf32, #tpu.memory_space<vmem>>, vector<162x128xf32>
    tpu.vector_store %arg14[%c0_28, %c0_29], %27 {strides = array<i32>} : memref<162x128xf32, #tpu.memory_space<vmem>>, vector<162x128xf32>,
    %c16 = arith.constant 16 : index
    %c0_30 = arith.constant 0 : index
    %29 = vector.load %arg12[%c16, %c0_30] : memref<208x128xbf16, #tpu.memory_space<vmem>>, vector<162x128xbf16>
    %c0_31 = arith.constant 0 : index
    %c0_32 = arith.constant 0 : index
    %30 = vector.load %arg14[%c0_31, %c0_32] : memref<162x128xf32, #tpu.memory_space<vmem>>, vector<162x128xf32>
    %c3 = arith.constant 3 : index
    %c0_33 = arith.constant 0 : index
    %c0_34 = arith.constant 0 : index
    %31 = vector.load %arg3[%c3, %c0_33, %c0_34] : memref<9x128x128xbf16, #tpu.memory_space<vmem>>, vector<1x128x128xbf16>
    %32 = vector.shape_cast %31 : vector<1x128x128xbf16> to vector<128x128xbf16>
    %cst_35 = arith.constant dense<0.000000e+00> : vector<162x128xf32>
    %33 = tpu.matmul %29, %32, %cst_35 {dimension_numbers = #tpu.dot_dimension_numbers<[1], [0], [0], [1], [0, 0, 1, 1], [], []>} : vector<162x128xbf16>, vector<128x128xbf16>, vector<162x128xf32> -> vector<162x128xf32>
    %34 = arith.addf %30, %33 : vector<162x128xf32>
    %c0_36 = arith.constant 0 : index
    %c0_37 = arith.constant 0 : index
    %35 = vector.load %arg14[%c0_36, %c0_37] : memref<162x128xf32, #tpu.memory_space<vmem>>, vector<162x128xf32>
    tpu.vector_store %arg14[%c0_36, %c0_37], %34 {strides = array<i32>} : memref<162x128xf32, #tpu.memory_space<vmem>>, vector<162x128xf32>,
    %c17 = arith.constant 17 : index
    %c0_38 = arith.constant 0 : index
    %36 = vector.load %arg12[%c17, %c0_38] : memref<208x128xbf16, #tpu.memory_space<vmem>>, vector<162x128xbf16>
    %c0_39 = arith.constant 0 : index
    %c0_40 = arith.constant 0 : index
    %37 = vector.load %arg14[%c0_39, %c0_40] : memref<162x128xf32, #tpu.memory_space<vmem>>, vector<162x128xf32>
    %c4 = arith.constant 4 : index
    %c0_41 = arith.constant 0 : index
    %c0_42 = arith.constant 0 : index
    %38 = vector.load %arg3[%c4, %c0_41, %c0_42] : memref<9x128x128xbf16, #tpu.memory_space<vmem>>, vector<1x128x128xbf16>
    %39 = vector.shape_cast %38 : vector<1x128x128xbf16> to vector<128x128xbf16>
    %cst_43 = arith.constant dense<0.000000e+00> : vector<162x128xf32>
    %40 = tpu.matmul %36, %39, %cst_43 {dimension_numbers = #tpu.dot_dimension_numbers<[1], [0], [0], [1], [0, 0, 1, 1], [], []>} : vector<162x128xbf16>, vector<128x128xbf16>, vector<162x128xf32> -> vector<162x128xf32>
    %41 = arith.addf %37, %40 : vector<162x128xf32>
    %c0_44 = arith.constant 0 : index
    %c0_45 = arith.constant 0 : index
    %42 = vector.load %arg14[%c0_44, %c0_45] : memref<162x128xf32, #tpu.memory_space<vmem>>, vector<162x128xf32>
    tpu.vector_store %arg14[%c0_44, %c0_45], %41 {strides = array<i32>} : memref<162x128xf32, #tpu.memory_space<vmem>>, vector<162x128xf32>,
    %c18 = arith.constant 18 : index
    %c0_46 = arith.constant 0 : index
    %43 = vector.load %arg12[%c18, %c0_46] : memref<208x128xbf16, #tpu.memory_space<vmem>>, vector<162x128xbf16>
    %c0_47 = arith.constant 0 : index
    %c0_48 = arith.constant 0 : index
    %44 = vector.load %arg14[%c0_47, %c0_48] : memref<162x128xf32, #tpu.memory_space<vmem>>, vector<162x128xf32>
    %c5 = arith.constant 5 : index
    %c0_49 = arith.constant 0 : index
    %c0_50 = arith.constant 0 : index
    %45 = vector.load %arg3[%c5, %c0_49, %c0_50] : memref<9x128x128xbf16, #tpu.memory_space<vmem>>, vector<1x128x128xbf16>
    %46 = vector.shape_cast %45 : vector<1x128x128xbf16> to vector<128x128xbf16>
    %cst_51 = arith.constant dense<0.000000e+00> : vector<162x128xf32>
    %47 = tpu.matmul %43, %46, %cst_51 {dimension_numbers = #tpu.dot_dimension_numbers<[1], [0], [0], [1], [0, 0, 1, 1], [], []>} : vector<162x128xbf16>, vector<128x128xbf16>, vector<162x128xf32> -> vector<162x128xf32>
    %48 = arith.addf %44, %47 : vector<162x128xf32>
    %c0_52 = arith.constant 0 : index
    %c0_53 = arith.constant 0 : index
    %49 = vector.load %arg14[%c0_52, %c0_53] : memref<162x128xf32, #tpu.memory_space<vmem>>, vector<162x128xf32>
    tpu.vector_store %arg14[%c0_52, %c0_53], %48 {strides = array<i32>} : memref<162x128xf32, #tpu.memory_space<vmem>>, vector<162x128xf32>,
    %c32 = arith.constant 32 : index
    %c0_54 = arith.constant 0 : index
    %50 = vector.load %arg12[%c32, %c0_54] : memref<208x128xbf16, #tpu.memory_space<vmem>>, vector<162x128xbf16>
    %c0_55 = arith.constant 0 : index
    %c0_56 = arith.constant 0 : index
    %51 = vector.load %arg14[%c0_55, %c0_56] : memref<162x128xf32, #tpu.memory_space<vmem>>, vector<162x128xf32>
    %c6 = arith.constant 6 : index
    %c0_57 = arith.constant 0 : index
    %c0_58 = arith.constant 0 : index
    %52 = vector.load %arg3[%c6, %c0_57, %c0_58] : memref<9x128x128xbf16, #tpu.memory_space<vmem>>, vector<1x128x128xbf16>
    %53 = vector.shape_cast %52 : vector<1x128x128xbf16> to vector<128x128xbf16>
    %cst_59 = arith.constant dense<0.000000e+00> : vector<162x128xf32>
    %54 = tpu.matmul %50, %53, %cst_59 {dimension_numbers = #tpu.dot_dimension_numbers<[1], [0], [0], [1], [0, 0, 1, 1], [], []>} : vector<162x128xbf16>, vector<128x128xbf16>, vector<162x128xf32> -> vector<162x128xf32>
    %55 = arith.addf %51, %54 : vector<162x128xf32>
    %c0_60 = arith.constant 0 : index
    %c0_61 = arith.constant 0 : index
    %56 = vector.load %arg14[%c0_60, %c0_61] : memref<162x128xf32, #tpu.memory_space<vmem>>, vector<162x128xf32>
    tpu.vector_store %arg14[%c0_60, %c0_61], %55 {strides = array<i32>} : memref<162x128xf32, #tpu.memory_space<vmem>>, vector<162x128xf32>,
    %c33 = arith.constant 33 : index
    %c0_62 = arith.constant 0 : index
    %57 = vector.load %arg12[%c33, %c0_62] : memref<208x128xbf16, #tpu.memory_space<vmem>>, vector<162x128xbf16>
    %c0_63 = arith.constant 0 : index
    %c0_64 = arith.constant 0 : index
    %58 = vector.load %arg14[%c0_63, %c0_64] : memref<162x128xf32, #tpu.memory_space<vmem>>, vector<162x128xf32>
    %c7 = arith.constant 7 : index
    %c0_65 = arith.constant 0 : index
    %c0_66 = arith.constant 0 : index
    %59 = vector.load %arg3[%c7, %c0_65, %c0_66] : memref<9x128x128xbf16, #tpu.memory_space<vmem>>, vector<1x128x128xbf16>
    %60 = vector.shape_cast %59 : vector<1x128x128xbf16> to vector<128x128xbf16>
    %cst_67 = arith.constant dense<0.000000e+00> : vector<162x128xf32>
    %61 = tpu.matmul %57, %60, %cst_67 {dimension_numbers = #tpu.dot_dimension_numbers<[1], [0], [0], [1], [0, 0, 1, 1], [], []>} : vector<162x128xbf16>, vector<128x128xbf16>, vector<162x128xf32> -> vector<162x128xf32>
    %62 = arith.addf %58, %61 : vector<162x128xf32>
    %c0_68 = arith.constant 0 : index
    %c0_69 = arith.constant 0 : index
    %63 = vector.load %arg14[%c0_68, %c0_69] : memref<162x128xf32, #tpu.memory_space<vmem>>, vector<162x128xf32>
    tpu.vector_store %arg14[%c0_68, %c0_69], %62 {strides = array<i32>} : memref<162x128xf32, #tpu.memory_space<vmem>>, vector<162x128xf32>,
    %c34 = arith.constant 34 : index
    %c0_70 = arith.constant 0 : index
    %64 = vector.load %arg12[%c34, %c0_70] : memref<208x128xbf16, #tpu.memory_space<vmem>>, vector<162x128xbf16>
    %c0_71 = arith.constant 0 : index
    %c0_72 = arith.constant 0 : index
    %65 = vector.load %arg14[%c0_71, %c0_72] : memref<162x128xf32, #tpu.memory_space<vmem>>, vector<162x128xf32>
    %c8 = arith.constant 8 : index
    %c0_73 = arith.constant 0 : index
    %c0_74 = arith.constant 0 : index
    %66 = vector.load %arg3[%c8, %c0_73, %c0_74] : memref<9x128x128xbf16, #tpu.memory_space<vmem>>, vector<1x128x128xbf16>
    %67 = vector.shape_cast %66 : vector<1x128x128xbf16> to vector<128x128xbf16>
    %cst_75 = arith.constant dense<0.000000e+00> : vector<162x128xf32>
    %68 = tpu.matmul %64, %67, %cst_75 {dimension_numbers = #tpu.dot_dimension_numbers<[1], [0], [0], [1], [0, 0, 1, 1], [], []>} : vector<162x128xbf16>, vector<128x128xbf16>, vector<162x128xf32> -> vector<162x128xf32>
    %69 = arith.addf %65, %68 : vector<162x128xf32>
    %c0_76 = arith.constant 0 : index
    %c0_77 = arith.constant 0 : index
    %70 = vector.load %arg14[%c0_76, %c0_77] : memref<162x128xf32, #tpu.memory_space<vmem>>, vector<162x128xf32>
    tpu.vector_store %arg14[%c0_76, %c0_77], %69 {strides = array<i32>} : memref<162x128xf32, #tpu.memory_space<vmem>>, vector<162x128xf32>,
    %c0_78 = arith.constant 0 : index
    %c0_79 = arith.constant 0 : index
    %71 = vector.load %arg14[%c0_78, %c0_79] : memref<162x128xf32, #tpu.memory_space<vmem>>, vector<162x128xf32>
    %c0_80 = arith.constant 0 : index
    %c0_81 = arith.constant 0 : index
    %72 = vector.load %arg4[%c0_80, %c0_81] : memref<1x128xf32, #tpu.memory_space<vmem>>, vector<1x128xf32>
    %73 = vector.broadcast %72 : vector<1x128xf32> to vector<162x128xf32>
    %74 = arith.mulf %71, %73 : vector<162x128xf32>
    %c0_82 = arith.constant 0 : index
    %c0_83 = arith.constant 0 : index
    %75 = vector.load %arg5[%c0_82, %c0_83] : memref<1x128xf32, #tpu.memory_space<vmem>>, vector<1x128xf32>
    %76 = vector.broadcast %75 : vector<1x128xf32> to vector<162x128xf32>
    %77 = arith.addf %74, %76 : vector<162x128xf32>
    %cst_84 = arith.constant 0.000000e+00 : f32
    %78 = vector.broadcast %cst_84 : f32 to vector<162x128xf32>
    %79 = arith.maximumf %77, %78 : vector<162x128xf32>
    %80 = arith.truncf %79 : vector<162x128xf32> to vector<162x128xbf16>
    %c0_85 = arith.constant 0 : index
    %c0_86 = arith.constant 0 : index
    %81 = vector.load %arg13[%c0_85, %c0_86] : memref<162x128xbf16, #tpu.memory_space<vmem>>, vector<162x128xbf16>
    tpu.vector_store %arg13[%c0_85, %c0_86], %80 {strides = array<i32>} : memref<162x128xbf16, #tpu.memory_space<vmem>>, vector<162x128xbf16>,
    %cst_87 = arith.constant 0.000000e+00 : f32
    %82 = vector.broadcast %cst_87 : f32 to vector<128x128xf32>
    %c0_88 = arith.constant 0 : index
    %c0_89 = arith.constant 0 : index
    %83 = vector.load %arg14[%c0_88, %c0_89] : memref<162x128xf32, #tpu.memory_space<vmem>>, vector<128x128xf32>
    tpu.vector_store %arg14[%c0_88, %c0_89], %82 {strides = array<i32>} : memref<162x128xf32, #tpu.memory_space<vmem>>, vector<128x128xf32>,
    %c0_90 = arith.constant 0 : index
    %c0_91 = arith.constant 0 : index
    %84 = vector.load %arg13[%c0_90, %c0_91] : memref<162x128xbf16, #tpu.memory_space<vmem>>, vector<128x128xbf16>
    %c0_92 = arith.constant 0 : index
    %c0_93 = arith.constant 0 : index
    %85 = vector.load %arg14[%c0_92, %c0_93] : memref<162x128xf32, #tpu.memory_space<vmem>>, vector<128x128xf32>
    %c0_94 = arith.constant 0 : index
    %c0_95 = arith.constant 0 : index
    %c0_96 = arith.constant 0 : index
    %86 = vector.load %arg6[%c0_94, %c0_95, %c0_96] : memref<9x128x128xbf16, #tpu.memory_space<vmem>>, vector<1x128x128xbf16>
    %87 = vector.shape_cast %86 : vector<1x128x128xbf16> to vector<128x128xbf16>
    %cst_97 = arith.constant dense<0.000000e+00> : vector<128x128xf32>
    %88 = tpu.matmul %84, %87, %cst_97 {dimension_numbers = #tpu.dot_dimension_numbers<[1], [0], [0], [1], [0, 0, 1, 1], [], []>} : vector<128x128xbf16>, vector<128x128xbf16>, vector<128x128xf32> -> vector<128x128xf32>
    %89 = arith.addf %85, %88 : vector<128x128xf32>
    %c0_98 = arith.constant 0 : index
    %c0_99 = arith.constant 0 : index
    %90 = vector.load %arg14[%c0_98, %c0_99] : memref<162x128xf32, #tpu.memory_space<vmem>>, vector<128x128xf32>
    tpu.vector_store %arg14[%c0_98, %c0_99], %89 {strides = array<i32>} : memref<162x128xf32, #tpu.memory_space<vmem>>, vector<128x128xf32>,
    %c1_100 = arith.constant 1 : index
    %c0_101 = arith.constant 0 : index
    %91 = vector.load %arg13[%c1_100, %c0_101] : memref<162x128xbf16, #tpu.memory_space<vmem>>, vector<128x128xbf16>
    %c0_102 = arith.constant 0 : index
    %c0_103 = arith.constant 0 : index
    %92 = vector.load %arg14[%c0_102, %c0_103] : memref<162x128xf32, #tpu.memory_space<vmem>>, vector<128x128xf32>
    %c1_104 = arith.constant 1 : index
    %c0_105 = arith.constant 0 : index
    %c0_106 = arith.constant 0 : index
    %93 = vector.load %arg6[%c1_104, %c0_105, %c0_106] : memref<9x128x128xbf16, #tpu.memory_space<vmem>>, vector<1x128x128xbf16>
    %94 = vector.shape_cast %93 : vector<1x128x128xbf16> to vector<128x128xbf16>
    %cst_107 = arith.constant dense<0.000000e+00> : vector<128x128xf32>
    %95 = tpu.matmul %91, %94, %cst_107 {dimension_numbers = #tpu.dot_dimension_numbers<[1], [0], [0], [1], [0, 0, 1, 1], [], []>} : vector<128x128xbf16>, vector<128x128xbf16>, vector<128x128xf32> -> vector<128x128xf32>
    %96 = arith.addf %92, %95 : vector<128x128xf32>
    %c0_108 = arith.constant 0 : index
    %c0_109 = arith.constant 0 : index
    %97 = vector.load %arg14[%c0_108, %c0_109] : memref<162x128xf32, #tpu.memory_space<vmem>>, vector<128x128xf32>
    tpu.vector_store %arg14[%c0_108, %c0_109], %96 {strides = array<i32>} : memref<162x128xf32, #tpu.memory_space<vmem>>, vector<128x128xf32>,
    %c2_110 = arith.constant 2 : index
    %c0_111 = arith.constant 0 : index
    %98 = vector.load %arg13[%c2_110, %c0_111] : memref<162x128xbf16, #tpu.memory_space<vmem>>, vector<128x128xbf16>
    %c0_112 = arith.constant 0 : index
    %c0_113 = arith.constant 0 : index
    %99 = vector.load %arg14[%c0_112, %c0_113] : memref<162x128xf32, #tpu.memory_space<vmem>>, vector<128x128xf32>
    %c2_114 = arith.constant 2 : index
    %c0_115 = arith.constant 0 : index
    %c0_116 = arith.constant 0 : index
    %100 = vector.load %arg6[%c2_114, %c0_115, %c0_116] : memref<9x128x128xbf16, #tpu.memory_space<vmem>>, vector<1x128x128xbf16>
    %101 = vector.shape_cast %100 : vector<1x128x128xbf16> to vector<128x128xbf16>
    %cst_117 = arith.constant dense<0.000000e+00> : vector<128x128xf32>
    %102 = tpu.matmul %98, %101, %cst_117 {dimension_numbers = #tpu.dot_dimension_numbers<[1], [0], [0], [1], [0, 0, 1, 1], [], []>} : vector<128x128xbf16>, vector<128x128xbf16>, vector<128x128xf32> -> vector<128x128xf32>
    %103 = arith.addf %99, %102 : vector<128x128xf32>
    %c0_118 = arith.constant 0 : index
    %c0_119 = arith.constant 0 : index
    %104 = vector.load %arg14[%c0_118, %c0_119] : memref<162x128xf32, #tpu.memory_space<vmem>>, vector<128x128xf32>
    tpu.vector_store %arg14[%c0_118, %c0_119], %103 {strides = array<i32>} : memref<162x128xf32, #tpu.memory_space<vmem>>, vector<128x128xf32>,
    %c16_120 = arith.constant 16 : index
    %c0_121 = arith.constant 0 : index
    %105 = vector.load %arg13[%c16_120, %c0_121] : memref<162x128xbf16, #tpu.memory_space<vmem>>, vector<128x128xbf16>
    %c0_122 = arith.constant 0 : index
    %c0_123 = arith.constant 0 : index
    %106 = vector.load %arg14[%c0_122, %c0_123] : memref<162x128xf32, #tpu.memory_space<vmem>>, vector<128x128xf32>
    %c3_124 = arith.constant 3 : index
    %c0_125 = arith.constant 0 : index
    %c0_126 = arith.constant 0 : index
    %107 = vector.load %arg6[%c3_124, %c0_125, %c0_126] : memref<9x128x128xbf16, #tpu.memory_space<vmem>>, vector<1x128x128xbf16>
    %108 = vector.shape_cast %107 : vector<1x128x128xbf16> to vector<128x128xbf16>
    %cst_127 = arith.constant dense<0.000000e+00> : vector<128x128xf32>
    %109 = tpu.matmul %105, %108, %cst_127 {dimension_numbers = #tpu.dot_dimension_numbers<[1], [0], [0], [1], [0, 0, 1, 1], [], []>} : vector<128x128xbf16>, vector<128x128xbf16>, vector<128x128xf32> -> vector<128x128xf32>
    %110 = arith.addf %106, %109 : vector<128x128xf32>
    %c0_128 = arith.constant 0 : index
    %c0_129 = arith.constant 0 : index
    %111 = vector.load %arg14[%c0_128, %c0_129] : memref<162x128xf32, #tpu.memory_space<vmem>>, vector<128x128xf32>
    tpu.vector_store %arg14[%c0_128, %c0_129], %110 {strides = array<i32>} : memref<162x128xf32, #tpu.memory_space<vmem>>, vector<128x128xf32>,
    %c17_130 = arith.constant 17 : index
    %c0_131 = arith.constant 0 : index
    %112 = vector.load %arg13[%c17_130, %c0_131] : memref<162x128xbf16, #tpu.memory_space<vmem>>, vector<128x128xbf16>
    %c0_132 = arith.constant 0 : index
    %c0_133 = arith.constant 0 : index
    %113 = vector.load %arg14[%c0_132, %c0_133] : memref<162x128xf32, #tpu.memory_space<vmem>>, vector<128x128xf32>
    %c4_134 = arith.constant 4 : index
    %c0_135 = arith.constant 0 : index
    %c0_136 = arith.constant 0 : index
    %114 = vector.load %arg6[%c4_134, %c0_135, %c0_136] : memref<9x128x128xbf16, #tpu.memory_space<vmem>>, vector<1x128x128xbf16>
    %115 = vector.shape_cast %114 : vector<1x128x128xbf16> to vector<128x128xbf16>
    %cst_137 = arith.constant dense<0.000000e+00> : vector<128x128xf32>
    %116 = tpu.matmul %112, %115, %cst_137 {dimension_numbers = #tpu.dot_dimension_numbers<[1], [0], [0], [1], [0, 0, 1, 1], [], []>} : vector<128x128xbf16>, vector<128x128xbf16>, vector<128x128xf32> -> vector<128x128xf32>
    %117 = arith.addf %113, %116 : vector<128x128xf32>
    %c0_138 = arith.constant 0 : index
    %c0_139 = arith.constant 0 : index
    %118 = vector.load %arg14[%c0_138, %c0_139] : memref<162x128xf32, #tpu.memory_space<vmem>>, vector<128x128xf32>
    tpu.vector_store %arg14[%c0_138, %c0_139], %117 {strides = array<i32>} : memref<162x128xf32, #tpu.memory_space<vmem>>, vector<128x128xf32>,
    %c18_140 = arith.constant 18 : index
    %c0_141 = arith.constant 0 : index
    %119 = vector.load %arg13[%c18_140, %c0_141] : memref<162x128xbf16, #tpu.memory_space<vmem>>, vector<128x128xbf16>
    %c0_142 = arith.constant 0 : index
    %c0_143 = arith.constant 0 : index
    %120 = vector.load %arg14[%c0_142, %c0_143] : memref<162x128xf32, #tpu.memory_space<vmem>>, vector<128x128xf32>
    %c5_144 = arith.constant 5 : index
    %c0_145 = arith.constant 0 : index
    %c0_146 = arith.constant 0 : index
    %121 = vector.load %arg6[%c5_144, %c0_145, %c0_146] : memref<9x128x128xbf16, #tpu.memory_space<vmem>>, vector<1x128x128xbf16>
    %122 = vector.shape_cast %121 : vector<1x128x128xbf16> to vector<128x128xbf16>
    %cst_147 = arith.constant dense<0.000000e+00> : vector<128x128xf32>
    %123 = tpu.matmul %119, %122, %cst_147 {dimension_numbers = #tpu.dot_dimension_numbers<[1], [0], [0], [1], [0, 0, 1, 1], [], []>} : vector<128x128xbf16>, vector<128x128xbf16>, vector<128x128xf32> -> vector<128x128xf32>
    %124 = arith.addf %120, %123 : vector<128x128xf32>
    %c0_148 = arith.constant 0 : index
    %c0_149 = arith.constant 0 : index
    %125 = vector.load %arg14[%c0_148, %c0_149] : memref<162x128xf32, #tpu.memory_space<vmem>>, vector<128x128xf32>
    tpu.vector_store %arg14[%c0_148, %c0_149], %124 {strides = array<i32>} : memref<162x128xf32, #tpu.memory_space<vmem>>, vector<128x128xf32>,
    %c32_150 = arith.constant 32 : index
    %c0_151 = arith.constant 0 : index
    %126 = vector.load %arg13[%c32_150, %c0_151] : memref<162x128xbf16, #tpu.memory_space<vmem>>, vector<128x128xbf16>
    %c0_152 = arith.constant 0 : index
    %c0_153 = arith.constant 0 : index
    %127 = vector.load %arg14[%c0_152, %c0_153] : memref<162x128xf32, #tpu.memory_space<vmem>>, vector<128x128xf32>
    %c6_154 = arith.constant 6 : index
    %c0_155 = arith.constant 0 : index
    %c0_156 = arith.constant 0 : index
    %128 = vector.load %arg6[%c6_154, %c0_155, %c0_156] : memref<9x128x128xbf16, #tpu.memory_space<vmem>>, vector<1x128x128xbf16>
    %129 = vector.shape_cast %128 : vector<1x128x128xbf16> to vector<128x128xbf16>
    %cst_157 = arith.constant dense<0.000000e+00> : vector<128x128xf32>
    %130 = tpu.matmul %126, %129, %cst_157 {dimension_numbers = #tpu.dot_dimension_numbers<[1], [0], [0], [1], [0, 0, 1, 1], [], []>} : vector<128x128xbf16>, vector<128x128xbf16>, vector<128x128xf32> -> vector<128x128xf32>
    %131 = arith.addf %127, %130 : vector<128x128xf32>
    %c0_158 = arith.constant 0 : index
    %c0_159 = arith.constant 0 : index
    %132 = vector.load %arg14[%c0_158, %c0_159] : memref<162x128xf32, #tpu.memory_space<vmem>>, vector<128x128xf32>
    tpu.vector_store %arg14[%c0_158, %c0_159], %131 {strides = array<i32>} : memref<162x128xf32, #tpu.memory_space<vmem>>, vector<128x128xf32>,
    %c33_160 = arith.constant 33 : index
    %c0_161 = arith.constant 0 : index
    %133 = vector.load %arg13[%c33_160, %c0_161] : memref<162x128xbf16, #tpu.memory_space<vmem>>, vector<128x128xbf16>
    %c0_162 = arith.constant 0 : index
    %c0_163 = arith.constant 0 : index
    %134 = vector.load %arg14[%c0_162, %c0_163] : memref<162x128xf32, #tpu.memory_space<vmem>>, vector<128x128xf32>
    %c7_164 = arith.constant 7 : index
    %c0_165 = arith.constant 0 : index
    %c0_166 = arith.constant 0 : index
    %135 = vector.load %arg6[%c7_164, %c0_165, %c0_166] : memref<9x128x128xbf16, #tpu.memory_space<vmem>>, vector<1x128x128xbf16>
    %136 = vector.shape_cast %135 : vector<1x128x128xbf16> to vector<128x128xbf16>
    %cst_167 = arith.constant dense<0.000000e+00> : vector<128x128xf32>
    %137 = tpu.matmul %133, %136, %cst_167 {dimension_numbers = #tpu.dot_dimension_numbers<[1], [0], [0], [1], [0, 0, 1, 1], [], []>} : vector<128x128xbf16>, vector<128x128xbf16>, vector<128x128xf32> -> vector<128x128xf32>
    %138 = arith.addf %134, %137 : vector<128x128xf32>
    %c0_168 = arith.constant 0 : index
    %c0_169 = arith.constant 0 : index
    %139 = vector.load %arg14[%c0_168, %c0_169] : memref<162x128xf32, #tpu.memory_space<vmem>>, vector<128x128xf32>
    tpu.vector_store %arg14[%c0_168, %c0_169], %138 {strides = array<i32>} : memref<162x128xf32, #tpu.memory_space<vmem>>, vector<128x128xf32>,
    %c34_170 = arith.constant 34 : index
    %c0_171 = arith.constant 0 : index
    %140 = vector.load %arg13[%c34_170, %c0_171] : memref<162x128xbf16, #tpu.memory_space<vmem>>, vector<128x128xbf16>
    %c0_172 = arith.constant 0 : index
    %c0_173 = arith.constant 0 : index
    %141 = vector.load %arg14[%c0_172, %c0_173] : memref<162x128xf32, #tpu.memory_space<vmem>>, vector<128x128xf32>
    %c8_174 = arith.constant 8 : index
    %c0_175 = arith.constant 0 : index
    %c0_176 = arith.constant 0 : index
    %142 = vector.load %arg6[%c8_174, %c0_175, %c0_176] : memref<9x128x128xbf16, #tpu.memory_space<vmem>>, vector<1x128x128xbf16>
    %143 = vector.shape_cast %142 : vector<1x128x128xbf16> to vector<128x128xbf16>
    %cst_177 = arith.constant dense<0.000000e+00> : vector<128x128xf32>
    %144 = tpu.matmul %140, %143, %cst_177 {dimension_numbers = #tpu.dot_dimension_numbers<[1], [0], [0], [1], [0, 0, 1, 1], [], []>} : vector<128x128xbf16>, vector<128x128xbf16>, vector<128x128xf32> -> vector<128x128xf32>
    %145 = arith.addf %141, %144 : vector<128x128xf32>
    %c0_178 = arith.constant 0 : index
    %c0_179 = arith.constant 0 : index
    %146 = vector.load %arg14[%c0_178, %c0_179] : memref<162x128xf32, #tpu.memory_space<vmem>>, vector<128x128xf32>
    tpu.vector_store %arg14[%c0_178, %c0_179], %145 {strides = array<i32>} : memref<162x128xf32, #tpu.memory_space<vmem>>, vector<128x128xf32>,
    %c0_180 = arith.constant 0 : index
    %c0_181 = arith.constant 0 : index
    %147 = vector.load %arg14[%c0_180, %c0_181] : memref<162x128xf32, #tpu.memory_space<vmem>>, vector<128x128xf32>
    %c0_182 = arith.constant 0 : index
    %c0_183 = arith.constant 0 : index
    %148 = vector.load %arg7[%c0_182, %c0_183] : memref<1x128xf32, #tpu.memory_space<vmem>>, vector<1x128xf32>
    %149 = vector.broadcast %148 : vector<1x128xf32> to vector<128x128xf32>
    %150 = arith.mulf %147, %149 : vector<128x128xf32>
    %c0_184 = arith.constant 0 : index
    %c0_185 = arith.constant 0 : index
    %151 = vector.load %arg8[%c0_184, %c0_185] : memref<1x128xf32, #tpu.memory_space<vmem>>, vector<1x128xf32>
    %152 = vector.broadcast %151 : vector<1x128xf32> to vector<128x128xf32>
    %153 = arith.addf %150, %152 : vector<128x128xf32>
    %cst_186 = arith.constant 0.000000e+00 : f32
    %154 = vector.broadcast %cst_186 : f32 to vector<128x128xf32>
    %155 = arith.maximumf %153, %154 : vector<128x128xf32>
    %156 = arith.truncf %155 : vector<128x128xf32> to vector<128x128xbf16>
    %c0_187 = arith.constant 0 : index
    %c0_188 = arith.constant 0 : index
    %157 = vector.load %arg9[%c0_187, %c0_188] : memref<128x512xbf16, #tpu.memory_space<vmem>>, vector<128x512xbf16>
    %cst_189 = arith.constant dense<0.000000e+00> : vector<128x512xf32>
    %158 = tpu.matmul %156, %157, %cst_189 {dimension_numbers = #tpu.dot_dimension_numbers<[1], [0], [0], [1], [0, 0, 1, 1], [], []>} : vector<128x128xbf16>, vector<128x512xbf16>, vector<128x512xf32> -> vector<128x512xf32>
    %c0_190 = arith.constant 0 : index
    %c0_191 = arith.constant 0 : index
    %159 = vector.load %arg10[%c0_190, %c0_191] : memref<1x512xf32, #tpu.memory_space<vmem>>, vector<1x512xf32>
    %160 = vector.broadcast %159 : vector<1x512xf32> to vector<128x512xf32>
    %161 = arith.addf %158, %160 : vector<128x512xf32>
    %162 = arith.truncf %161 : vector<128x512xf32> to vector<128x512xbf16>
    %c0_192 = arith.constant 0 : index
    %c0_193 = arith.constant 0 : index
    %c0_194 = arith.constant 0 : index
    %c0_195 = arith.constant 0 : index
    %163 = vector.load %arg11[%c0_192, %c0_193, %c0_194, %c0_195] : memref<1x1x128x512xbf16, #tpu.memory_space<vmem>>, vector<1x1x128x512xbf16>
    %164 = vector.shape_cast %163 : vector<1x1x128x512xbf16> to vector<128x512xbf16>
    %165 = vector.shape_cast %162 : vector<128x512xbf16> to vector<1x1x128x512xbf16>
    tpu.vector_store %arg11[%c0_192, %c0_193, %c0_194, %c0_195], %165 {strides = array<i32>} : memref<1x1x128x512xbf16, #tpu.memory_space<vmem>>, vector<1x1x128x512xbf16>,
    return
  }
  func.func @transform_1(%arg0: i32, %arg1: i32) -> (i32, i32, i32) {
    %c0_i32 = arith.constant 0 : i32
    %c0_i32_0 = arith.constant 0 : i32
    %c0_i32_1 = arith.constant 0 : i32
    %c0_i32_2 = arith.constant 0 : i32
    return %c0_i32, %c0_i32_0, %c0_i32_1 : i32, i32, i32
  }
  func.func @transform_2(%arg0: i32, %arg1: i32) -> (i32, i32) {
    %c0_i32 = arith.constant 0 : i32
    %c0_i32_0 = arith.constant 0 : i32
    %c0_i32_1 = arith.constant 0 : i32
    return %c0_i32, %c0_i32_0 : i32, i32
  }
  func.func @transform_3(%arg0: i32, %arg1: i32) -> (i32, i32) {
    %c0_i32 = arith.constant 0 : i32
    %c0_i32_0 = arith.constant 0 : i32
    %c0_i32_1 = arith.constant 0 : i32
    return %c0_i32, %c0_i32_0 : i32, i32
  }
  func.func @transform_4(%arg0: i32, %arg1: i32) -> (i32, i32, i32) {
    %c0_i32 = arith.constant 0 : i32
    %c0_i32_0 = arith.constant 0 : i32
    %c0_i32_1 = arith.constant 0 : i32
    %c0_i32_2 = arith.constant 0 : i32
    return %c0_i32, %c0_i32_0, %c0_i32_1 : i32, i32, i32
  }
  func.func @transform_5(%arg0: i32, %arg1: i32) -> (i32, i32) {
    %c0_i32 = arith.constant 0 : i32
    %c0_i32_0 = arith.constant 0 : i32
    %c0_i32_1 = arith.constant 0 : i32
    return %c0_i32, %c0_i32_0 : i32, i32
  }
  func.func @transform_6(%arg0: i32, %arg1: i32) -> (i32, i32) {
    %c0_i32 = arith.constant 0 : i32
    %c0_i32_0 = arith.constant 0 : i32
    %c0_i32_1 = arith.constant 0 : i32
    return %c0_i32, %c0_i32_0 : i32, i32
  }
  func.func @transform_7(%arg0: i32, %arg1: i32) -> (i32, i32) {
    %c0_i32 = arith.constant 0 : i32
    %c0_i32_0 = arith.constant 0 : i32
    %c0_i32_1 = arith.constant 0 : i32
    return %c0_i32, %c0_i32_0 : i32, i32
  }
  func.func @transform_8(%arg0: i32, %arg1: i32) -> (i32, i32) {
    %c0_i32 = arith.constant 0 : i32
    %c0_i32_0 = arith.constant 0 : i32
    %c0_i32_1 = arith.constant 0 : i32
    return %c0_i32, %c0_i32_0 : i32, i32
  }
  func.func @transform_9(%arg0: i32, %arg1: i32) -> (i32, i32, i32, i32) {
    %c0_i32 = arith.constant 0 : i32
    %c0_i32_0 = arith.constant 0 : i32
    %c0_i32_1 = arith.constant 0 : i32
    return %arg0, %arg1, %c0_i32, %c0_i32_0 : i32, i32, i32, i32
  }
}

</mosaic_0001>

<llo_original>
// kernel: tile.8
$region0: #{tile.8}
  #allocation0 [shape = 's32[1]{0}', space=sflag, size = 0x4, scoped, tag = 'scoped memory for tile.8']
  %s0 = inlined_call_operand.vmem [shape: f32[128], index: 0, kind: input, shape index: {}]
  %s1 = inlined_call_operand.vmem [shape: f32[4,128], index: 1, kind: output, shape index: {}]
  // Predicated region
  $region2: #{tile.8} parent=0 // pred_check
    _
  $region3: #{tile.8} parent=0 // pred_check_branch
    %3 = sbr.rel (0) target = $region5
  $region4: #{tile.8} parent=0 // pred_region
    _
  $region5: #{tile.8} parent=0 // pred_fallthru
    _
  %v4 = vld [vmem:[%s0] ss:$0 sm:$0xff]
  %5 = vst [vmem:[%s1] sm:$0xf] %v4

// kernel: decoder_block_forward.1
$region0: #{decoder_block_forward.1}
  #allocation0 [shape = 'u32[]', space=smem, size = 0x4, offset = 0x4, fixed_abs, tag = 'smem constant byte address 0x4 - core index']
  #allocation1 [shape = 'u32[72,128]{1,0:T(1,128)}', space=vmem, size = 0x9000, scoped, tag = 'internal scratch']
  #allocation2 [shape = 'bf16[208,128]{1,0:T(8,128)(2,1)}', space=vmem, size = 0xd000, scoped, tag = 'scratch operand']
  #allocation3 [shape = 'bf16[162,128]{1,0:T(8,128)(2,1)}', space=vmem, size = 0xa800, scoped, tag = 'scratch operand']
  #allocation4 [shape = 'f32[162,128]{1,0:T(8,128)}', space=vmem, size = 0x15000, scoped, tag = 'scratch operand']
  #allocation5 [shape = 's32[1]{0}', space=sflag, size = 0x4, scoped, tag = 'scratch operand']
  #allocation6 [shape = 's32[]', space=sflag, size = 0x4, offset = 0, fixed_abs, tag = 'sflag constant byte address 0x0 - dummy sync flag']
  %s0 = inlined_call_operand.vmem [shape: bf16[2,336,128], index: 0, kind: input, shape index: {}]
  %s1 = inlined_call_operand.vmem [shape: bf16[9,128,128], index: 1, kind: input, shape index: {}]
  %s2 = inlined_call_operand.vmem [shape: f32[1,128], index: 2, kind: input, shape index: {}]
  %s3 = inlined_call_operand.vmem [shape: f32[1,128], index: 3, kind: input, shape index: {}]
  %s4 = inlined_call_operand.vmem [shape: bf16[9,128,128], index: 4, kind: input, shape index: {}]
  %s5 = inlined_call_operand.vmem [shape: f32[1,128], index: 5, kind: input, shape index: {}]
  %s6 = inlined_call_operand.vmem [shape: f32[1,128], index: 6, kind: input, shape index: {}]
  %s7 = inlined_call_operand.vmem [shape: bf16[128,512], index: 7, kind: input, shape index: {}]
  %s8 = inlined_call_operand.vmem [shape: f32[1,512], index: 8, kind: input, shape index: {}]
  %s9 = inlined_call_operand.vmem [shape: bf16[2,2,128,512], index: 9, kind: output, shape index: {}]
  %s10 = sld [smem:[#allocation0]]
  $region84: #{decoder_block_forward.1} parent=0
    _
  %s12 = ssub.s32 1, %s10
  %s13 = scalar_select 0, %s12, %s10
  loop: start=0, step=1, limit=6
  $region2: #{decoder_block_forward.1} parent=0 // loop_pre_header
    _
  $region3: #{decoder_block_forward.1} parent=0 // loop_header
    %s15 = sphi 0, %s19
    %p16 = scmp.ge.s32.totalorder %s15, 6
    %s22 = sphi 0, %s34
    %s23 = sphi 0, %s30
    %s24 = sphi 0, %s22
    %s25 = sphi 0, %s23
    %s26 = sphi 0, %s24
    %s27 = sphi 0, %s25
    %s35 = sphi 0, %s35
    %s37 = sphi 0, %s35
    %s38 = sphi 0, %s37
    %s52 = sphi 0, %s38
    %s56 = sphi 0, %s56
    %s58 = sphi 0, %s56
    %s59 = sphi 0, %s58
    %s73 = sphi 0, %s59
    %s77 = sphi 0, %s77
    %s79 = sphi 0, %s77
    %s80 = sphi 0, %s79
    %s94 = sphi 0, %s80
    %s98 = sphi 0, %s98
    %s100 = sphi 0, %s98
    %s101 = sphi 0, %s100
    %s115 = sphi 0, %s101
    %s119 = sphi 0, %s119
    %s121 = sphi 0, %s119
    %s122 = sphi 0, %s121
    %s136 = sphi 0, %s122
    %s140 = sphi 0, %s140
    %s142 = sphi 0, %s140
    %s143 = sphi 0, %s142
    %s157 = sphi 0, %s143
    %s161 = sphi 0, %s161
    %s163 = sphi 0, %s161
    %s164 = sphi 0, %s163
    %s178 = sphi 0, %s164
    %s182 = sphi 0, %s182
    %s184 = sphi 0, %s182
    %s185 = sphi 0, %s184
    %s199 = sphi 0, %s185
    %s207 = sphi 0, %s209
    %s210 = sphi 0, %s207
    %s211 = sphi 0, %s210
    %s227 = sphi 0, %s211
  $region4: #{decoder_block_forward.1} parent=0 // loop_header_branch
    %18 = sbr.rel (%p16) target = $region8
  $region5: #{decoder_block_forward.1} parent=0 // loop_body
    %s20 = ssub.s32 %s15, 1
    %s21 = ssub.s32 %s15, 2
    %s28 = sadd.s32 1, %s23
    %p29 = scmp.ge.s32.totalorder %s28, 2
    %s30 = scalar_select %p29, 0, %s28
    %s31 = sadd.s32 1, %s22
    %s32 = scalar_select %p29, %s31, %s22
    %p33 = scmp.ge.s32.totalorder %s32, 2
    %s34 = scalar_select %p33, 0, %s32
    %s36 = sadd.s32 %s35, 1
    %p39 = scmp.eq.s32.totalorder %s15, 3
    %p40 = scmp.ne.s32.totalorder %s35, %s37
    %p41 = scmp.eq.s32.totalorder %s15, 0
    %p42 = por %p40, %p41
    %p43 = scmp.ne.s32.totalorder %s35, %s37
    %p44 = scmp.eq.s32.totalorder %s20, 3
    %p45 = por %p43, %p44
    %p46 = scmp.ne.s32.totalorder %s37, %s38
    %p47 = scmp.eq.s32.totalorder %s20, 0
    %p48 = por %p46, %p47
    %p49 = scmp.ne.s32.totalorder %s37, %s38
    %p50 = scmp.eq.s32.totalorder %s21, 3
    %p51 = por %p49, %p50
    %p53 = scmp.ne.s32.totalorder %s38, %s52
    %p54 = scmp.eq.s32.totalorder %s21, 0
    %p55 = por %p53, %p54
    %s57 = sadd.s32 %s56, 1
    %p60 = scmp.eq.s32.totalorder %s15, 3
    %p61 = scmp.ne.s32.totalorder %s56, %s58
    %p62 = scmp.eq.s32.totalorder %s15, 0
    %p63 = por %p61, %p62
    %p64 = scmp.ne.s32.totalorder %s56, %s58
    %p65 = scmp.eq.s32.totalorder %s20, 3
    %p66 = por %p64, %p65
    %p67 = scmp.ne.s32.totalorder %s58, %s59
    %p68 = scmp.eq.s32.totalorder %s20, 0
    %p69 = por %p67, %p68
    %p70 = scmp.ne.s32.totalorder %s58, %s59
    %p71 = scmp.eq.s32.totalorder %s21, 3
    %p72 = por %p70, %p71
    %p74 = scmp.ne.s32.totalorder %s59, %s73
    %p75 = scmp.eq.s32.totalorder %s21, 0
    %p76 = por %p74, %p75
    %s78 = sadd.s32 %s77, 1
    %p81 = scmp.eq.s32.totalorder %s15, 3
    %p82 = scmp.ne.s32.totalorder %s77, %s79
    %p83 = scmp.eq.s32.totalorder %s15, 0
    %p84 = por %p82, %p83
    %p85 = scmp.ne.s32.totalorder %s77, %s79
    %p86 = scmp.eq.s32.totalorder %s20, 3
    %p87 = por %p85, %p86
    %p88 = scmp.ne.s32.totalorder %s79, %s80
    %p89 = scmp.eq.s32.totalorder %s20, 0
    %p90 = por %p88, %p89
    %p91 = scmp.ne.s32.totalorder %s79, %s80
    %p92 = scmp.eq.s32.totalorder %s21, 3
    %p93 = por %p91, %p92
    %p95 = scmp.ne.s32.totalorder %s80, %s94
    %p96 = scmp.eq.s32.totalorder %s21, 0
    %p97 = por %p95, %p96
    %s99 = sadd.s32 %s98, 1
    %p102 = scmp.eq.s32.totalorder %s15, 3
    %p103 = scmp.ne.s32.totalorder %s98, %s100
    %p104 = scmp.eq.s32.totalorder %s15, 0
    %p105 = por %p103, %p104
    %p106 = scmp.ne.s32.totalorder %s98, %s100
    %p107 = scmp.eq.s32.totalorder %s20, 3
    %p108 = por %p106, %p107
    %p109 = scmp.ne.s32.totalorder %s100, %s101
    %p110 = scmp.eq.s32.totalorder %s20, 0
    %p111 = por %p109, %p110
    %p112 = scmp.ne.s32.totalorder %s100, %s101
    %p113 = scmp.eq.s32.totalorder %s21, 3
    %p114 = por %p112, %p113
    %p116 = scmp.ne.s32.totalorder %s101, %s115
    %p117 = scmp.eq.s32.totalorder %s21, 0
    %p118 = por %p116, %p117
    %s120 = sadd.s32 %s119, 1
    %p123 = scmp.eq.s32.totalorder %s15, 3
    %p124 = scmp.ne.s32.totalorder %s119, %s121
    %p125 = scmp.eq.s32.totalorder %s15, 0
    %p126 = por %p124, %p125
    %p127 = scmp.ne.s32.totalorder %s119, %s121
    %p128 = scmp.eq.s32.totalorder %s20, 3
    %p129 = por %p127, %p128
    %p130 = scmp.ne.s32.totalorder %s121, %s122
    %p131 = scmp.eq.s32.totalorder %s20, 0
    %p132 = por %p130, %p131
    %p133 = scmp.ne.s32.totalorder %s121, %s122
    %p134 = scmp.eq.s32.totalorder %s21, 3
    %p135 = por %p133, %p134
    %p137 = scmp.ne.s32.totalorder %s122, %s136
    %p138 = scmp.eq.s32.totalorder %s21, 0
    %p139 = por %p137, %p138
    %s141 = sadd.s32 %s140, 1
    %p144 = scmp.eq.s32.totalorder %s15, 3
    %p145 = scmp.ne.s32.totalorder %s140, %s142
    %p146 = scmp.eq.s32.totalorder %s15, 0
    %p147 = por %p145, %p146
    %p148 = scmp.ne.s32.totalorder %s140, %s142
    %p149 = scmp.eq.s32.totalorder %s20, 3
    %p150 = por %p148, %p149
    %p151 = scmp.ne.s32.totalorder %s142, %s143
    %p152 = scmp.eq.s32.totalorder %s20, 0
    %p153 = por %p151, %p152
    %p154 = scmp.ne.s32.totalorder %s142, %s143
    %p155 = scmp.eq.s32.totalorder %s21, 3
    %p156 = por %p154, %p155
    %p158 = scmp.ne.s32.totalorder %s143, %s157
    %p159 = scmp.eq.s32.totalorder %s21, 0
    %p160 = por %p158, %p159
    %s162 = sadd.s32 %s161, 1
    %p165 = scmp.eq.s32.totalorder %s15, 3
    %p166 = scmp.ne.s32.totalorder %s161, %s163
    %p167 = scmp.eq.s32.totalorder %s15, 0
    %p168 = por %p166, %p167
    %p169 = scmp.ne.s32.totalorder %s161, %s163
    %p170 = scmp.eq.s32.totalorder %s20, 3
    %p171 = por %p169, %p170
    %p172 = scmp.ne.s32.totalorder %s163, %s164
    %p173 = scmp.eq.s32.totalorder %s20, 0
    %p174 = por %p172, %p173
    %p175 = scmp.ne.s32.totalorder %s163, %s164
    %p176 = scmp.eq.s32.totalorder %s21, 3
    %p177 = por %p175, %p176
    %p179 = scmp.ne.s32.totalorder %s164, %s178
    %p180 = scmp.eq.s32.totalorder %s21, 0
    %p181 = por %p179, %p180
    %s183 = sadd.s32 %s182, 1
    %p186 = scmp.eq.s32.totalorder %s15, 3
    %p187 = scmp.ne.s32.totalorder %s182, %s184
    %p188 = scmp.eq.s32.totalorder %s15, 0
    %p189 = por %p187, %p188
    %p190 = scmp.ne.s32.totalorder %s182, %s184
    %p191 = scmp.eq.s32.totalorder %s20, 3
    %p192 = por %p190, %p191
    %p193 = scmp.ne.s32.totalorder %s184, %s185
    %p194 = scmp.eq.s32.totalorder %s20, 0
    %p195 = por %p193, %p194
    %p196 = scmp.ne.s32.totalorder %s184, %s185
    %p197 = scmp.eq.s32.totalorder %s21, 3
    %p198 = por %p196, %p197
    %p200 = scmp.ne.s32.totalorder %s185, %s199
    %p201 = scmp.eq.s32.totalorder %s21, 0
    %p202 = por %p200, %p201
    %s203 = ssub.s32 %s22, %s34
    %s204 = ssub.s32 %s23, %s30
    %s205 = sor.u32 %s203, %s204
    %p206 = scmp.eq.s32.totalorder %s205, 0
    %s208 = sadd.s32 %s207, 1
    %s209 = scalar_select %p206, %s207, %s208
    %p212 = pneg %p206
    %p213 = scmp.eq.s32.totalorder %s15, 3
    %p214 = por %p212, %p213
    %p215 = scmp.ne.s32.totalorder %s207, %s210
    %p216 = scmp.eq.s32.totalorder %s15, 0
    %p217 = por %p215, %p216
    %p218 = scmp.ne.s32.totalorder %s207, %s210
    %p219 = scmp.eq.s32.totalorder %s20, 3
    %p220 = por %p218, %p219
    %p221 = scmp.ne.s32.totalorder %s210, %s211
    %p222 = scmp.eq.s32.totalorder %s20, 0
    %p223 = por %p221, %p222
    %p224 = scmp.ne.s32.totalorder %s210, %s211
    %p225 = scmp.eq.s32.totalorder %s21, 3
    %p226 = por %p224, %p225
    %p228 = scmp.ne.s32.totalorder %s211, %s227
    %p229 = scmp.eq.s32.totalorder %s21, 0
    %p230 = por %p228, %p229
    %p231 = scmp.le.s32.totalorder 1, %s15
    %p232 = scmp.lt.s32.totalorder %s15, 5
    %p233 = pnand %p231, %p232
    %p234 = pneg %p233
    // Predicated region
    $region9: #{decoder_block_forward.1} parent=5 // pred_check
      _
    $region10: #{decoder_block_forward.1} parent=5 // pred_check_branch
      %236 = sbr.rel (%p233) target = $region12
    $region11: #{decoder_block_forward.1} parent=5 // pred_region
      %s237 = ssub.s32 %s15, 1
      // Predicated region
      $region13: #{decoder_block_forward.1} parent=11 // pred_check
        %p238 = pneg %p48
      $region14: #{decoder_block_forward.1} parent=11 // pred_check_branch
        %240 = sbr.rel (%p238) target = $region16
      $region15: #{decoder_block_forward.1} parent=11 // pred_region
        _
      $region16: #{decoder_block_forward.1} parent=11 // pred_fallthru
        _
      // Predicated region
      $region17: #{decoder_block_forward.1} parent=11 // pred_check
        %p241 = pneg %p69
      $region18: #{decoder_block_forward.1} parent=11 // pred_check_branch
        %243 = sbr.rel (%p241) target = $region20
      $region19: #{decoder_block_forward.1} parent=11 // pred_region
        _
      $region20: #{decoder_block_forward.1} parent=11 // pred_fallthru
        _
      // Predicated region
      $region21: #{decoder_block_forward.1} parent=11 // pred_check
        %p244 = pneg %p90
      $region22: #{decoder_block_forward.1} parent=11 // pred_check_branch
        %246 = sbr.rel (%p244) target = $region24
      $region23: #{decoder_block_forward.1} parent=11 // pred_region
        _
      $region24: #{decoder_block_forward.1} parent=11 // pred_fallthru
        _
      // Predicated region
      $region25: #{decoder_block_forward.1} parent=11 // pred_check
        %p247 = pneg %p111
      $region26: #{decoder_block_forward.1} parent=11 // pred_check_branch
        %249 = sbr.rel (%p247) target = $region28
      $region27: #{decoder_block_forward.1} parent=11 // pred_region
        _
      $region28: #{decoder_block_forward.1} parent=11 // pred_fallthru
        _
      // Predicated region
      $region29: #{decoder_block_forward.1} parent=11 // pred_check
        %p250 = pneg %p132
      $region30: #{decoder_block_forward.1} parent=11 // pred_check_branch
        %252 = sbr.rel (%p250) target = $region32
      $region31: #{decoder_block_forward.1} parent=11 // pred_region
        _
      $region32: #{decoder_block_forward.1} parent=11 // pred_fallthru
        _
      // Predicated region
      $region33: #{decoder_block_forward.1} parent=11 // pred_check
        %p253 = pneg %p153
      $region34: #{decoder_block_forward.1} parent=11 // pred_check_branch
        %255 = sbr.rel (%p253) target = $region36
      $region35: #{decoder_block_forward.1} parent=11 // pred_region
        _
      $region36: #{decoder_block_forward.1} parent=11 // pred_fallthru
        _
      // Predicated region
      $region37: #{decoder_block_forward.1} parent=11 // pred_check
        %p256 = pneg %p174
      $region38: #{decoder_block_forward.1} parent=11 // pred_check_branch
        %258 = sbr.rel (%p256) target = $region40
      $region39: #{decoder_block_forward.1} parent=11 // pred_region
        _
      $region40: #{decoder_block_forward.1} parent=11 // pred_fallthru
        _
      // Predicated region
      $region41: #{decoder_block_forward.1} parent=11 // pred_check
        %p259 = pneg %p195
      $region42: #{decoder_block_forward.1} parent=11 // pred_check_branch
        %261 = sbr.rel (%p259) target = $region44
      $region43: #{decoder_block_forward.1} parent=11 // pred_region
        _
      $region44: #{decoder_block_forward.1} parent=11 // pred_fallthru
        _
    $region12: #{decoder_block_forward.1} parent=5 // pred_fallthru
      _
    %p262 = scmp.lt.s32.totalorder %s15, 4
    // Predicated region
    $region45: #{decoder_block_forward.1} parent=5 // pred_check
      %p263 = pneg %p262
    $region46: #{decoder_block_forward.1} parent=5 // pred_check_branch
      %265 = sbr.rel (%p263) target = $region48
    $region47: #{decoder_block_forward.1} parent=5 // pred_region
      _
    $region48: #{decoder_block_forward.1} parent=5 // pred_fallthru
      _
    %p266 = scmp.le.s32.totalorder 1, %s15
    %p267 = scmp.lt.s32.totalorder %s15, 5
    %p268 = pnand %p266, %p267
    %p269 = pneg %p268
    // Predicated region
    $region49: #{decoder_block_forward.1} parent=5 // pred_check
      _
    $region50: #{decoder_block_forward.1} parent=5 // pred_check_branch
      %271 = sbr.rel (%p268) target = $region52
    $region51: #{decoder_block_forward.1} parent=5 // pred_region
      %s272 = ssub.s32 %s15, 1
      %p273 = pneg %p48
      %p274 = pneg %p45
      %p275 = pneg %p69
      %p276 = pneg %p66
      %p277 = pneg %p90
      %p278 = pneg %p87
      %p279 = pneg %p111
      %p280 = pneg %p108
      %p281 = pneg %p132
      %p282 = pneg %p129
      %p283 = pneg %p153
      %p284 = pneg %p150
      %p285 = pneg %p174
      %p286 = pneg %p171
      %p287 = pneg %p195
      %p288 = pneg %p192
      %p289 = pneg %p223
      %p290 = pneg %p220
      %p291 = scmp.lt.s32.totalorder %s24, 1
      %s292 = scalar_select %p291, %s24, 1
      %p293 = scmp.lt.s32.totalorder %s25, 1
      %s294 = scalar_select %p293, %s25, 1
      %s295 = smul.addr %s294, 64
      %s296 = smul.addr %s292, 128
      %s297 = sadd.s32 %s295, %s296
      %s298 = smul.addr %s297, 4
      %s299 = scalar_lea.vmem %s9, %s298
      %p300 = scmp.lt.s32.totalorder %s24, 1
      %s301 = scalar_select %p300, %s24, 1
      %p302 = scmp.lt.s32.totalorder %s25, 1
      %s303 = scalar_select %p302, %s25, 1
      %s304 = smul.addr %s303, 64
      %s305 = smul.addr %s301, 128
      %s306 = sadd.s32 %s304, %s305
      %s307 = smul.addr %s306, 4
      %s308 = scalar_lea.vmem %s9, %s307
      %s309 = smul.u32 %s25, 128
      %s310 = sshra.s32 %s309, 3
      %s311 = sand.u32 %s309, 7
      %s312 = smul.u32 %s24, 42
      %s313 = sadd.s32 %s310, %s312
      %s314 = smul.addr %s313, 4
      %s315 = scalar_lea.vmem %s0, %s314
      // Predicated region
      $region53: #{decoder_block_forward.1} parent=51 // pred_check
        _
      $region54: #{decoder_block_forward.1} parent=51 // pred_check_branch
        %317 = sbr.rel (0) target = $region56
      $region55: #{decoder_block_forward.1} parent=51 // pred_region
        loop: start=0, step=1, limit=1
        $region57: #{decoder_block_forward.1} parent=55 // loop_pre_header
          _
        $region58: #{decoder_block_forward.1} parent=55 // loop_header
          %s319 = sphi 0, %s323
          %p320 = scmp.ge.s32.totalorder %s319, 1
          %s324 = sphi %s315, %s315
          %s325 = sphi [#allocation2], [#allocation2]
        $region59: #{decoder_block_forward.1} parent=55 // loop_header_branch
          %322 = sbr.rel (%p320) target = $region63
        $region60: #{decoder_block_forward.1} parent=55 // loop_body
          %v326 = vld [vmem:[%s324] sm:$0xff]
          %327 = vst [vmem:[%s325] sm:$0xff] %v326
          %v328 = vld [vmem:[%s324 + $0x8] sm:$0xff]
          %329 = vst [vmem:[%s325 + $0x8] sm:$0xff] %v328
          %v330 = vld [vmem:[%s324 + $0x10] sm:$0xff]
          %331 = vst [vmem:[%s325 + $0x10] sm:$0xff] %v330
          %v332 = vld [vmem:[%s324 + $0x18] sm:$0xff]
          %333 = vst [vmem:[%s325 + $0x18] sm:$0xff] %v332
          %v334 = vld [vmem:[%s324 + $0x20] sm:$0xff]
          %335 = vst [vmem:[%s325 + $0x20] sm:$0xff] %v334
          %v336 = vld [vmem:[%s324 + $0x28] sm:$0xff]
          %337 = vst [vmem:[%s325 + $0x28] sm:$0xff] %v336
          %v338 = vld [vmem:[%s324 + $0x30] sm:$0xff]
          %339 = vst [vmem:[%s325 + $0x30] sm:$0xff] %v338
          %v340 = vld [vmem:[%s324 + $0x38] sm:$0xff]
          %341 = vst [vmem:[%s325 + $0x38] sm:$0xff] %v340
          %v342 = vld [vmem:[%s324 + $0x40] sm:$0xff]
          %343 = vst [vmem:[%s325 + $0x40] sm:$0xff] %v342
          %v344 = vld [vmem:[%s324 + $0x48] sm:$0xff]
          %345 = vst [vmem:[%s325 + $0x48] sm:$0xff] %v344
          %v346 = vld [vmem:[%s324 + $0x50] sm:$0xff]
          %347 = vst [vmem:[%s325 + $0x50] sm:$0xff] %v346
          %v348 = vld [vmem:[%s324 + $0x58] sm:$0xff]
          %349 = vst [vmem:[%s325 + $0x58] sm:$0xff] %v348
          %v350 = vld [vmem:[%s324 + $0x60] sm:$0xff]
          %351 = vst [vmem:[%s325 + $0x60] sm:$0xff] %v350
        $region61: #{decoder_block_forward.1} parent=55 // loop_footer
          %s323 = sadd.s32 1, %s319
        $region62: #{decoder_block_forward.1} parent=55 // loop_footer_branch
          %318 = sbr.rel target = $region58
        $region63: #{decoder_block_forward.1} parent=55 // loop_exit
          _
      $region56: #{decoder_block_forward.1} parent=51 // pred_fallthru
        _
      // Predicated region
      $region64: #{decoder_block_forward.1} parent=51 // pred_check
        _
      $region65: #{decoder_block_forward.1} parent=51 // pred_check_branch
        %353 = sbr.rel target = $region67
      $region66: #{decoder_block_forward.1} parent=51 // pred_region
        _
      $region67: #{decoder_block_forward.1} parent=51 // pred_fallthru
        _
      // Predicated region
      $region68: #{decoder_block_forward.1} parent=51 // pred_check
        _
      $region69: #{decoder_block_forward.1} parent=51 // pred_check_branch
        %356 = sbr.rel (0) target = $region71
      $region70: #{decoder_block_forward.1} parent=51 // pred_region
        %357 = vsyncadd [#allocation5], 1664
      $region71: #{decoder_block_forward.1} parent=51 // pred_fallthru
        _
      %358 = vst [vmem:[#allocation4] sm:$0xff] 0.0
      %359 = vst [vmem:[#allocation4 + $0x8] sm:$0xff] 0.0
      %360 = vst [vmem:[#allocation4 + $0x10] sm:$0xff] 0.0
      %361 = vst [vmem:[#allocation4 + $0x18] sm:$0xff] 0.0
      %362 = vst [vmem:[#allocation4 + $0x20] sm:$0xff] 0.0
      %363 = vst [vmem:[#allocation4 + $0x28] sm:$0xff] 0.0
      %364 = vst [vmem:[#allocation4 + $0x30] sm:$0xff] 0.0
      %365 = vst [vmem:[#allocation4 + $0x38] sm:$0xff] 0.0
      %366 = vst [vmem:[#allocation4 + $0x40] sm:$0xff] 0.0
      %367 = vst [vmem:[#allocation4 + $0x48] sm:$0xff] 0.0
      %368 = vst [vmem:[#allocation4 + $0x50] sm:$0xff] 0.0
      %369 = vst [vmem:[#allocation4 + $0x58] sm:$0xff] 0.0
      %370 = vst [vmem:[#allocation4 + $0x60] sm:$0xff] 0.0
      %371 = vst [vmem:[#allocation4 + $0x68] sm:$0xff] 0.0
      %372 = vst [vmem:[#allocation4 + $0x70] sm:$0xff] 0.0
      %373 = vst [vmem:[#allocation4 + $0x78] sm:$0xff] 0.0
      %374 = vst [vmem:[#allocation4 + $0x80] sm:$0xff] 0.0
      %375 = vst [vmem:[#allocation4 + $0x88] sm:$0xff] 0.0
      %376 = vst [vmem:[#allocation4 + $0x90] sm:$0xff] 0.0
      %377 = vst [vmem:[#allocation4 + $0x98] sm:$0xff] 0.0
      %378 = vst [vmem:[#allocation4 + $0xa0] sm:$0x3] 0.0
      %s379 = smul.u32 4, 26
      %s380 = smul.u32 %s379, 1
      %s381 = sshll.u32 %s380, 4
      %382 = dma.done [#allocation5], %s381
      %v383 = vld [vmem:[#allocation2] sm:$0xf]
      %v384 = vld [vmem:[#allocation2 + $0x4] sm:$0xf]
      %v385 = vld [vmem:[#allocation2 + $0x8] sm:$0xf]
      %v386 = vld [vmem:[#allocation2 + $0xc] sm:$0xf]
      %v387 = vld [vmem:[#allocation2 + $0x10] sm:$0xf]
      %v388 = vld [vmem:[#allocation2 + $0x14] sm:$0xf]
      %v389 = vld [vmem:[#allocation2 + $0x18] sm:$0xf]
      %v390 = vld [vmem:[#allocation2 + $0x1c] sm:$0xf]
      %v391 = vld [vmem:[#allocation2 + $0x20] sm:$0xf]
      %v392 = vld [vmem:[#allocation2 + $0x24] sm:$0xf]
      %v393 = vld [vmem:[#allocation2 + $0x28] sm:$0xf]
      %v394 = vld [vmem:[#allocation2 + $0x2c] sm:$0xf]
      %v395 = vld [vmem:[#allocation2 + $0x30] sm:$0xf]
      %v396 = vld [vmem:[#allocation2 + $0x34] sm:$0xf]
      %v397 = vld [vmem:[#allocation2 + $0x38] sm:$0xf]
      %v398 = vld [vmem:[#allocation2 + $0x3c] sm:$0xf]
      %v399 = vld [vmem:[#allocation2 + $0x40] sm:$0xf]
      %v400 = vld [vmem:[#allocation2 + $0x44] sm:$0xf]
      %v401 = vld [vmem:[#allocation2 + $0x48] sm:$0xf]
      %v402 = vld [vmem:[#allocation2 + $0x4c] sm:$0xf]
      %v403 = vld [vmem:[#allocation2 + $0x50] sm:$0x1]
      %v404 = vld [vmem:[#allocation4] sm:$0xff]
      %v405 = vld [vmem:[#allocation4 + $0x8] sm:$0xff]
      %v406 = vld [vmem:[#allocation4 + $0x10] sm:$0xff]
      %v407 = vld [vmem:[#allocation4 + $0x18] sm:$0xff]
      %v408 = vld [vmem:[#allocation4 + $0x20] sm:$0xff]
      %v409 = vld [vmem:[#allocation4 + $0x28] sm:$0xff]
      %v410 = vld [vmem:[#allocation4 + $0x30] sm:$0xff]
      %v411 = vld [vmem:[#allocation4 + $0x38] sm:$0xff]
      %v412 = vld [vmem:[#allocation4 + $0x40] sm:$0xff]
      %v413 = vld [vmem:[#allocation4 + $0x48] sm:$0xff]
      %v414 = vld [vmem:[#allocation4 + $0x50] sm:$0xff]
      %v415 = vld [vmem:[#allocation4 + $0x58] sm:$0xff]
      %v416 = vld [vmem:[#allocation4 + $0x60] sm:$0xff]
      %v417 = vld [vmem:[#allocation4 + $0x68] sm:$0xff]
      %v418 = vld [vmem:[#allocation4 + $0x70] sm:$0xff]
      %v419 = vld [vmem:[#allocation4 + $0x78] sm:$0xff]
      %v420 = vld [vmem:[#allocation4 + $0x80] sm:$0xff]
      %v421 = vld [vmem:[#allocation4 + $0x88] sm:$0xff]
      %v422 = vld [vmem:[#allocation4 + $0x90] sm:$0xff]
      %v423 = vld [vmem:[#allocation4 + $0x98] sm:$0xff]
      %v424 = vld [vmem:[#allocation4 + $0xa0] sm:$0x3]
      %v425 = vld [vmem:[%s1] sm:$0xf]
      %v426 = vld [vmem:[%s1 + $0x4] sm:$0xf]
      %v427 = vld [vmem:[%s1 + $0x8] sm:$0xf]
      %v428 = vld [vmem:[%s1 + $0xc] sm:$0xf]
      %v429 = vld [vmem:[%s1 + $0x10] sm:$0xf]
      %v430 = vld [vmem:[%s1 + $0x14] sm:$0xf]
      %v431 = vld [vmem:[%s1 + $0x18] sm:$0xf]
      %v432 = vld [vmem:[%s1 + $0x1c] sm:$0xf]
      %v433 = vld [vmem:[%s1 + $0x20] sm:$0xf]
      %v434 = vld [vmem:[%s1 + $0x24] sm:$0xf]
      %v435 = vld [vmem:[%s1 + $0x28] sm:$0xf]
      %v436 = vld [vmem:[%s1 + $0x2c] sm:$0xf]
      %v437 = vld [vmem:[%s1 + $0x30] sm:$0xf]
      %v438 = vld [vmem:[%s1 + $0x34] sm:$0xf]
      %v439 = vld [vmem:[%s1 + $0x38] sm:$0xf]
      %v440 = vld [vmem:[%s1 + $0x3c] sm:$0xf]
      %v462 = vunpack.c.l.b16 %v383
      %v463 = vunpack.c.l.b16 %v384
      %v464 = vunpack.c.l.b16 %v385
      %v465 = vunpack.c.l.b16 %v386
      %v466 = vunpack.c.l.b16 %v387
      %v467 = vunpack.c.l.b16 %v388
      %v468 = vunpack.c.l.b16 %v389
      %v469 = vunpack.c.l.b16 %v390
      %v470 = vunpack.c.l.b16 %v391
      %v471 = vunpack.c.l.b16 %v392
      %v472 = vunpack.c.l.b16 %v393
      %v473 = vunpack.c.l.b16 %v394
      %v474 = vunpack.c.l.b16 %v395
      %v475 = vunpack.c.l.b16 %v396
      %v476 = vunpack.c.l.b16 %v397
      %v477 = vunpack.c.l.b16 %v398
      %v478 = vunpack.c.l.b16 %v399
      %v479 = vunpack.c.l.b16 %v400
      %v480 = vunpack.c.l.b16 %v401
      %v481 = vunpack.c.l.b16 %v402
      %v482 = vunpack.c.l.b16 %v403
      %v483 = vpack.c.b16 %v463, %v462
      %v484 = vpack.c.b16 %v465, %v464
      %v485 = vpack.c.b16 %v467, %v466
      %v486 = vpack.c.b16 %v469, %v468
      %v487 = vpack.c.b16 %v471, %v470
      %v488 = vpack.c.b16 %v473, %v472
      %v489 = vpack.c.b16 %v475, %v474
      %v490 = vpack.c.b16 %v477, %v476
      %v491 = vpack.c.b16 %v479, %v478
      %v492 = vpack.c.b16 %v481, %v480
      %v493 = vpack.c.b16 %v482, %v482
      %v521 = vunpack.c.l.b16 %v425
      %v522 = vunpack.c.l.b16 %v426
      %v523 = vunpack.c.l.b16 %v427
      %v524 = vunpack.c.l.b16 %v428
      %v525 = vunpack.c.l.b16 %v429
      %v526 = vunpack.c.l.b16 %v430
      %v527 = vunpack.c.l.b16 %v431
      %v528 = vunpack.c.l.b16 %v432
      %v529 = vunpack.c.l.b16 %v433
      %v530 = vunpack.c.l.b16 %v434
      %v531 = vunpack.c.l.b16 %v435
      %v532 = vunpack.c.l.b16 %v436
      %v533 = vunpack.c.l.b16 %v437
      %v534 = vunpack.c.l.b16 %v438
      %v535 = vunpack.c.l.b16 %v439
      %v536 = vunpack.c.l.b16 %v440
      %v537 = vpack.c.b16 %v522, %v521
      %v538 = vpack.c.b16 %v524, %v523
      %v539 = vpack.c.b16 %v526, %v525
      %v540 = vpack.c.b16 %v528, %v527
      %v541 = vpack.c.b16 %v530, %v529
      %v542 = vpack.c.b16 %v532, %v531
      %v543 = vpack.c.b16 %v534, %v533
      %v544 = vpack.c.b16 %v536, %v535
      %553 = vmatpush.bf16.msra.mxu0 %v544
      %554 = vmatpush.bf16.msra.mxu0 %v543
      %555 = vmatpush.bf16.msra.mxu0 %v542
      %556 = vmatpush.bf16.msra.mxu0 %v541
      %557 = vmatpush.bf16.msra.mxu0 %v540
      %558 = vmatpush.bf16.msra.mxu0 %v539
      %559 = vmatpush.bf16.msra.mxu0 %v538
      %560 = vmatpush.bf16.msra.mxu0 %v537
      %561 = vmatmul.bf16.gmra.mxu0 %v483
      %v562 = vpop.f32.mrf.mxu0
      %v563 = vadd.f32 0.0, %v562
      %v564 = vpop.f32.mrf.mxu0
      %v565 = vadd.f32 0.0, %v564
      %566 = vmatmul.bf16.gmra.mxu0 %v484
      %v567 = vpop.f32.mrf.mxu0
      %v568 = vadd.f32 0.0, %v567
      %v569 = vpop.f32.mrf.mxu0
      %v570 = vadd.f32 0.0, %v569
      %571 = vmatmul.bf16.gmra.mxu0 %v485
      %v572 = vpop.f32.mrf.mxu0
      %v573 = vadd.f32 0.0, %v572
      %v574 = vpop.f32.mrf.mxu0
      %v575 = vadd.f32 0.0, %v574
      %576 = vmatmul.bf16.gmra.mxu0 %v486
      %v577 = vpop.f32.mrf.mxu0
      %v578 = vadd.f32 0.0, %v577
      %v579 = vpop.f32.mrf.mxu0
      %v580 = vadd.f32 0.0, %v579
      %581 = vmatmul.bf16.gmra.mxu0 %v487
      %v582 = vpop.f32.mrf.mxu0
      %v583 = vadd.f32 0.0, %v582
      %v584 = vpop.f32.mrf.mxu0
      %v585 = vadd.f32 0.0, %v584
      %586 = vmatmul.bf16.gmra.mxu0 %v488
      %v587 = vpop.f32.mrf.mxu0
      %v588 = vadd.f32 0.0, %v587
      %v589 = vpop.f32.mrf.mxu0
      %v590 = vadd.f32 0.0, %v589
      %591 = vmatmul.bf16.gmra.mxu0 %v489
      %v592 = vpop.f32.mrf.mxu0
      %v593 = vadd.f32 0.0, %v592
      %v594 = vpop.f32.mrf.mxu0
      %v595 = vadd.f32 0.0, %v594
      %596 = vmatmul.bf16.gmra.mxu0 %v490
      %v597 = vpop.f32.mrf.mxu0
      %v598 = vadd.f32 0.0, %v597
      %v599 = vpop.f32.mrf.mxu0
      %v600 = vadd.f32 0.0, %v599
      %601 = vmatmul.bf16.gmra.mxu0 %v491
      %v602 = vpop.f32.mrf.mxu0
      %v603 = vadd.f32 0.0, %v602
      %v604 = vpop.f32.mrf.mxu0
      %v605 = vadd.f32 0.0, %v604
      %606 = vmatmul.bf16.gmra.mxu0 %v492
      %v607 = vpop.f32.mrf.mxu0
      %v608 = vadd.f32 0.0, %v607
      %v609 = vpop.f32.mrf.mxu0
      %v610 = vadd.f32 0.0, %v609
      %611 = vmatmul.bf16.gmra.mxu0 %v493
      %v612 = vpop.f32.mrf.mxu0
      %v613 = vadd.f32 0.0, %v612
      %v614 = vpop.f32.mrf.mxu0
      %615 = vdwg.mxu0
      %v616 = vadd.f32 %v404, %v563
      %v617 = vadd.f32 %v405, %v565
      %v618 = vadd.f32 %v406, %v568
      %v619 = vadd.f32 %v407, %v570
      %v620 = vadd.f32 %v408, %v573
      %v621 = vadd.f32 %v409, %v575
      %v622 = vadd.f32 %v410, %v578
      %v623 = vadd.f32 %v411, %v580
      %v624 = vadd.f32 %v412, %v583
      %v625 = vadd.f32 %v413, %v585
      %v626 = vadd.f32 %v414, %v588
      %v627 = vadd.f32 %v415, %v590
      %v628 = vadd.f32 %v416, %v593
      %v629 = vadd.f32 %v417, %v595
      %v630 = vadd.f32 %v418, %v598
      %v631 = vadd.f32 %v419, %v600
      %v632 = vadd.f32 %v420, %v603
      %v633 = vadd.f32 %v421, %v605
      %v634 = vadd.f32 %v422, %v608
      %v635 = vadd.f32 %v423, %v610
      %v636 = vadd.f32 %v424, %v613
      %637 = vst [vmem:[#allocation4] sm:$0xff] %v616
      %638 = vst [vmem:[#allocation4 + $0x8] sm:$0xff] %v617
      %639 = vst [vmem:[#allocation4 + $0x10] sm:$0xff] %v618
      %640 = vst [vmem:[#allocation4 + $0x18] sm:$0xff] %v619
      %641 = vst [vmem:[#allocation4 + $0x20] sm:$0xff] %v620
      %642 = vst [vmem:[#allocation4 + $0x28] sm:$0xff] %v621
      %643 = vst [vmem:[#allocation4 + $0x30] sm:$0xff] %v622
      %644 = vst [vmem:[#allocation4 + $0x38] sm:$0xff] %v623
      %645 = vst [vmem:[#allocation4 + $0x40] sm:$0xff] %v624
      %646 = vst [vmem:[#allocation4 + $0x48] sm:$0xff] %v625
      %647 = vst [vmem:[#allocation4 + $0x50] sm:$0xff] %v626
      %648 = vst [vmem:[#allocation4 + $0x58] sm:$0xff] %v627
      %649 = vst [vmem:[#allocation4 + $0x60] sm:$0xff] %v628
      %650 = vst [vmem:[#allocation4 + $0x68] sm:$0xff] %v629
      %651 = vst [vmem:[#allocation4 + $0x70] sm:$0xff] %v630
      %652 = vst [vmem:[#allocation4 + $0x78] sm:$0xff] %v631
      %653 = vst [vmem:[#allocation4 + $0x80] sm:$0xff] %v632
      %654 = vst [vmem:[#allocation4 + $0x88] sm:$0xff] %v633
      %655 = vst [vmem:[#allocation4 + $0x90] sm:$0xff] %v634
      %656 = vst [vmem:[#allocation4 + $0x98] sm:$0xff] %v635
      %657 = vst [vmem:[#allocation4 + $0xa0] sm:$0x3] %v636
      %v658 = vld [vmem:[#allocation2] sm:$0xf]
      %v659 = vld [vmem:[#allocation2 + $0x4] sm:$0xf]
      %v660 = vld [vmem:[#allocation2 + $0x8] sm:$0xf]
      %v661 = vld [vmem:[#allocation2 + $0xc] sm:$0xf]
      %v662 = vld [vmem:[#allocation2 + $0x10] sm:$0xf]
      %v663 = vld [vmem:[#allocation2 + $0x14] sm:$0xf]
      %v664 = vld [vmem:[#allocation2 + $0x18] sm:$0xf]
      %v665 = vld [vmem:[#allocation2 + $0x1c] sm:$0xf]
      %v666 = vld [vmem:[#allocation2 + $0x20] sm:$0xf]
      %v667 = vld [vmem:[#allocation2 + $0x24] sm:$0xf]
      %v668 = vld [vmem:[#allocation2 + $0x28] sm:$0xf]
      %v669 = vld [vmem:[#allocation2 + $0x2c] sm:$0xf]
      %v670 = vld [vmem:[#allocation2 + $0x30] sm:$0xf]
      %v671 = vld [vmem:[#allocation2 + $0x34] sm:$0xf]
      %v672 = vld [vmem:[#allocation2 + $0x38] sm:$0xf]
      %v673 = vld [vmem:[#allocation2 + $0x3c] sm:$0xf]
      %v674 = vld [vmem:[#allocation2 + $0x40] sm:$0xf]
      %v675 = vld [vmem:[#allocation2 + $0x44] sm:$0xf]
      %v676 = vld [vmem:[#allocation2 + $0x48] sm:$0xf]
      %v677 = vld [vmem:[#allocation2 + $0x4c] sm:$0xf]
      %v678 = vld [vmem:[#allocation2 + $0x50] sm:$0x3]
      %v679 = vld [vmem:[#allocation4] sm:$0xff]
      %v680 = vld [vmem:[#allocation4 + $0x8] sm:$0xff]
      %v681 = vld [vmem:[#allocation4 + $0x10] sm:$0xff]
      %v682 = vld [vmem:[#allocation4 + $0x18] sm:$0xff]
      %v683 = vld [vmem:[#allocation4 + $0x20] sm:$0xff]
      %v684 = vld [vmem:[#allocation4 + $0x28] sm:$0xff]
      %v685 = vld [vmem:[#allocation4 + $0x30] sm:$0xff]
      %v686 = vld [vmem:[#allocation4 + $0x38] sm:$0xff]
      %v687 = vld [vmem:[#allocation4 + $0x40] sm:$0xff]
      %v688 = vld [vmem:[#allocation4 + $0x48] sm:$0xff]
      %v689 = vld [vmem:[#allocation4 + $0x50] sm:$0xff]
      %v690 = vld [vmem:[#allocation4 + $0x58] sm:$0xff]
      %v691 = vld [vmem:[#allocation4 + $0x60] sm:$0xff]
      %v692 = vld [vmem:[#allocation4 + $0x68] sm:$0xff]
      %v693 = vld [vmem:[#allocation4 + $0x70] sm:$0xff]
      %v694 = vld [vmem:[#allocation4 + $0x78] sm:$0xff]
      %v695 = vld [vmem:[#allocation4 + $0x80] sm:$0xff]
      %v696 = vld [vmem:[#allocation4 + $0x88] sm:$0xff]
      %v697 = vld [vmem:[#allocation4 + $0x90] sm:$0xff]
      %v698 = vld [vmem:[#allocation4 + $0x98] sm:$0xff]
      %v699 = vld [vmem:[#allocation4 + $0xa0] sm:$0x3]
      %s700 = scalar_lea.vmem %s1, 64
      %v701 = vld [vmem:[%s700] sm:$0xf]
      %v702 = vld [vmem:[%s700 + $0x4] sm:$0xf]
      %v703 = vld [vmem:[%s700 + $0x8] sm:$0xf]
      %v704 = vld [vmem:[%s700 + $0xc] sm:$0xf]
      %v705 = vld [vmem:[%s700 + $0x10] sm:$0xf]
      %v706 = vld [vmem:[%s700 + $0x14] sm:$0xf]
      %v707 = vld [vmem:[%s700 + $0x18] sm:$0xf]
      %v708 = vld [vmem:[%s700 + $0x1c] sm:$0xf]
      %v709 = vld [vmem:[%s700 + $0x20] sm:$0xf]
      %v710 = vld [vmem:[%s700 + $0x24] sm:$0xf]
      %v711 = vld [vmem:[%s700 + $0x28] sm:$0xf]
      %v712 = vld [vmem:[%s700 + $0x2c] sm:$0xf]
      %v713 = vld [vmem:[%s700 + $0x30] sm:$0xf]
      %v714 = vld [vmem:[%s700 + $0x34] sm:$0xf]
      %v715 = vld [vmem:[%s700 + $0x38] sm:$0xf]
      %v716 = vld [vmem:[%s700 + $0x3c] sm:$0xf]
      %v738 = vunpack.c.l.b16 %v658
      %v739 = vunpack.c.l.b16 %v659
      %v740 = vunpack.c.l.b16 %v660
      %v741 = vunpack.c.l.b16 %v661
      %v742 = vunpack.c.l.b16 %v662
      %v743 = vunpack.c.l.b16 %v663
      %v744 = vunpack.c.l.b16 %v664
      %v745 = vunpack.c.l.b16 %v665
      %v746 = vunpack.c.l.b16 %v666
      %v747 = vunpack.c.l.b16 %v667
      %v748 = vunpack.c.l.b16 %v668
      %v749 = vunpack.c.l.b16 %v669
      %v750 = vunpack.c.l.b16 %v670
      %v751 = vunpack.c.l.b16 %v671
      %v752 = vunpack.c.l.b16 %v672
      %v753 = vunpack.c.l.b16 %v673
      %v754 = vunpack.c.l.b16 %v674
      %v755 = vunpack.c.l.b16 %v675
      %v756 = vunpack.c.l.b16 %v676
      %v757 = vunpack.c.l.b16 %v677
      %v758 = vunpack.c.l.b16 %v678
      %v759 = vpack.c.b16 %v739, %v738
      %v760 = vpack.c.b16 %v741, %v740
      %v761 = vpack.c.b16 %v743, %v742
      %v762 = vpack.c.b16 %v745, %v744
      %v763 = vpack.c.b16 %v747, %v746
      %v764 = vpack.c.b16 %v749, %v748
      %v765 = vpack.c.b16 %v751, %v750
      %v766 = vpack.c.b16 %v753, %v752
      %v767 = vpack.c.b16 %v755, %v754
      %v768 = vpack.c.b16 %v757, %v756
      %v769 = vpack.c.b16 %v758, %v758
      %vm770 = vsmask.f32 7424
      %v772 = vshrl.u32 %v759, 16
      %v774 = vshll.u32 %v759, 16
      %v776 = vrot.slane %v774, 1
      %v777 = vor.u32 %v772, %v776
      %v779 = vshll.u32 %v760, 16
      %v781 = vrot.slane %v779, 1
      %v782 = vsel %vm770, %v777, %v781
      %v783 = vshrl.u32 %v760, 16
      %v785 = vor.u32 %v783, %v781
      %v787 = vshll.u32 %v761, 16
      %v789 = vrot.slane %v787, 1
      %v790 = vsel %vm770, %v785, %v789
      %v791 = vshrl.u32 %v761, 16
      %v793 = vor.u32 %v791, %v789
      %v795 = vshll.u32 %v762, 16
      %v797 = vrot.slane %v795, 1
      %v798 = vsel %vm770, %v793, %v797
      %v799 = vshrl.u32 %v762, 16
      %v801 = vor.u32 %v799, %v797
      %v803 = vshll.u32 %v763, 16
      %v805 = vrot.slane %v803, 1
      %v806 = vsel %vm770, %v801, %v805
      %v807 = vshrl.u32 %v763, 16
      %v809 = vor.u32 %v807, %v805
      %v811 = vshll.u32 %v764, 16
      %v813 = vrot.slane %v811, 1
      %v814 = vsel %vm770, %v809, %v813
      %v815 = vshrl.u32 %v764, 16
      %v817 = vor.u32 %v815, %v813
      %v819 = vshll.u32 %v765, 16
      %v821 = vrot.slane %v819, 1
      %v822 = vsel %vm770, %v817, %v821
      %v823 = vshrl.u32 %v765, 16
      %v825 = vor.u32 %v823, %v821
      %v827 = vshll.u32 %v766, 16
      %v829 = vrot.slane %v827, 1
      %v830 = vsel %vm770, %v825, %v829
      %v831 = vshrl.u32 %v766, 16
      %v833 = vor.u32 %v831, %v829
      %v835 = vshll.u32 %v767, 16
      %v837 = vrot.slane %v835, 1
      %v838 = vsel %vm770, %v833, %v837
      %v839 = vshrl.u32 %v767, 16
      %v841 = vor.u32 %v839, %v837
      %v843 = vshll.u32 %v768, 16
      %v845 = vrot.slane %v843, 1
      %v846 = vsel %vm770, %v841, %v845
      %v847 = vshrl.u32 %v768, 16
      %v849 = vor.u32 %v847, %v845
      %v851 = vshll.u32 %v769, 16
      %v853 = vrot.slane %v851, 1
      %v854 = vsel %vm770, %v849, %v853
      %v855 = vshrl.u32 %v769, 16
      %v857 = vor.u32 %v855, %v853
      %v885 = vunpack.c.l.b16 %v701
      %v886 = vunpack.c.l.b16 %v702
      %v887 = vunpack.c.l.b16 %v703
      %v888 = vunpack.c.l.b16 %v704
      %v889 = vunpack.c.l.b16 %v705
      %v890 = vunpack.c.l.b16 %v706
      %v891 = vunpack.c.l.b16 %v707
      %v892 = vunpack.c.l.b16 %v708
      %v893 = vunpack.c.l.b16 %v709
      %v894 = vunpack.c.l.b16 %v710
      %v895 = vunpack.c.l.b16 %v711
      %v896 = vunpack.c.l.b16 %v712
      %v897 = vunpack.c.l.b16 %v713
      %v898 = vunpack.c.l.b16 %v714
      %v899 = vunpack.c.l.b16 %v715
      %v900 = vunpack.c.l.b16 %v716
      %v901 = vpack.c.b16 %v886, %v885
      %v902 = vpack.c.b16 %v888, %v887
      %v903 = vpack.c.b16 %v890, %v889
      %v904 = vpack.c.b16 %v892, %v891
      %v905 = vpack.c.b16 %v894, %v893
      %v906 = vpack.c.b16 %v896, %v895
      %v907 = vpack.c.b16 %v898, %v897
      %v908 = vpack.c.b16 %v900, %v899
      %917 = vmatpush.bf16.msra.mxu0 %v908
      %918 = vmatpush.bf16.msra.mxu0 %v907
      %919 = vmatpush.bf16.msra.mxu0 %v906
      %920 = vmatpush.bf16.msra.mxu0 %v905
      %921 = vmatpush.bf16.msra.mxu0 %v904
      %922 = vmatpush.bf16.msra.mxu0 %v903
      %923 = vmatpush.bf16.msra.mxu0 %v902
      %924 = vmatpush.bf16.msra.mxu0 %v901
      %925 = vmatmul.bf16.gmra.mxu0 %v782
      %v926 = vpop.f32.mrf.mxu0
      %v927 = vadd.f32 0.0, %v926
      %v928 = vpop.f32.mrf.mxu0
      %v929 = vadd.f32 0.0, %v928
      %930 = vmatmul.bf16.gmra.mxu0 %v790
      %v931 = vpop.f32.mrf.mxu0
      %v932 = vadd.f32 0.0, %v931
      %v933 = vpop.f32.mrf.mxu0
      %v934 = vadd.f32 0.0, %v933
      %935 = vmatmul.bf16.gmra.mxu0 %v798
      %v936 = vpop.f32.mrf.mxu0
      %v937 = vadd.f32 0.0, %v936
      %v938 = vpop.f32.mrf.mxu0
      %v939 = vadd.f32 0.0, %v938
      %940 = vmatmul.bf16.gmra.mxu0 %v806
      %v941 = vpop.f32.mrf.mxu0
      %v942 = vadd.f32 0.0, %v941
      %v943 = vpop.f32.mrf.mxu0
      %v944 = vadd.f32 0.0, %v943
      %945 = vmatmul.bf16.gmra.mxu0 %v814
      %v946 = vpop.f32.mrf.mxu0
      %v947 = vadd.f32 0.0, %v946
      %v948 = vpop.f32.mrf.mxu0
      %v949 = vadd.f32 0.0, %v948
      %950 = vmatmul.bf16.gmra.mxu0 %v822
      %v951 = vpop.f32.mrf.mxu0
      %v952 = vadd.f32 0.0, %v951
      %v953 = vpop.f32.mrf.mxu0
      %v954 = vadd.f32 0.0, %v953
      %955 = vmatmul.bf16.gmra.mxu0 %v830
      %v956 = vpop.f32.mrf.mxu0
      %v957 = vadd.f32 0.0, %v956
      %v958 = vpop.f32.mrf.mxu0
      %v959 = vadd.f32 0.0, %v958
      %960 = vmatmul.bf16.gmra.mxu0 %v838
      %v961 = vpop.f32.mrf.mxu0
      %v962 = vadd.f32 0.0, %v961
      %v963 = vpop.f32.mrf.mxu0
      %v964 = vadd.f32 0.0, %v963
      %965 = vmatmul.bf16.gmra.mxu0 %v846
      %v966 = vpop.f32.mrf.mxu0
      %v967 = vadd.f32 0.0, %v966
      %v968 = vpop.f32.mrf.mxu0
      %v969 = vadd.f32 0.0, %v968
      %970 = vmatmul.bf16.gmra.mxu0 %v854
      %v971 = vpop.f32.mrf.mxu0
      %v972 = vadd.f32 0.0, %v971
      %v973 = vpop.f32.mrf.mxu0
      %v974 = vadd.f32 0.0, %v973
      %975 = vmatmul.bf16.gmra.mxu0 %v857
      %v976 = vpop.f32.mrf.mxu0
      %v977 = vadd.f32 0.0, %v976
      %v978 = vpop.f32.mrf.mxu0
      %979 = vdwg.mxu0
      %v980 = vadd.f32 %v679, %v927
      %v981 = vadd.f32 %v680, %v929
      %v982 = vadd.f32 %v681, %v932
      %v983 = vadd.f32 %v682, %v934
      %v984 = vadd.f32 %v683, %v937
      %v985 = vadd.f32 %v684, %v939
      %v986 = vadd.f32 %v685, %v942
      %v987 = vadd.f32 %v686, %v944
      %v988 = vadd.f32 %v687, %v947
      %v989 = vadd.f32 %v688, %v949
      %v990 = vadd.f32 %v689, %v952
      %v991 = vadd.f32 %v690, %v954
      %v992 = vadd.f32 %v691, %v957
      %v993 = vadd.f32 %v692, %v959
      %v994 = vadd.f32 %v693, %v962
      %v995 = vadd.f32 %v694, %v964
      %v996 = vadd.f32 %v695, %v967
      %v997 = vadd.f32 %v696, %v969
      %v998 = vadd.f32 %v697, %v972
      %v999 = vadd.f32 %v698, %v974
      %v1000 = vadd.f32 %v699, %v977
      %1001 = vst [vmem:[#allocation4] sm:$0xff] %v980
      %1002 = vst [vmem:[#allocation4 + $0x8] sm:$0xff] %v981
      %1003 = vst [vmem:[#allocation4 + $0x10] sm:$0xff] %v982
      %1004 = vst [vmem:[#allocation4 + $0x18] sm:$0xff] %v983
      %1005 = vst [vmem:[#allocation4 + $0x20] sm:$0xff] %v984
      %1006 = vst [vmem:[#allocation4 + $0x28] sm:$0xff] %v985
      %1007 = vst [vmem:[#allocation4 + $0x30] sm:$0xff] %v986
      %1008 = vst [vmem:[#allocation4 + $0x38] sm:$0xff] %v987
      %1009 = vst [vmem:[#allocation4 + $0x40] sm:$0xff] %v988
      %1010 = vst [vmem:[#allocation4 + $0x48] sm:$0xff] %v989
      %1011 = vst [vmem:[#allocation4 + $0x50] sm:$0xff] %v990
      %1012 = vst [vmem:[#allocation4 + $0x58] sm:$0xff] %v991
      %1013 = vst [vmem:[#allocation4 + $0x60] sm:$0xff] %v992
      %1014 = vst [vmem:[#allocation4 + $0x68] sm:$0xff] %v993
      %1015 = vst [vmem:[#allocation4 + $0x70] sm:$0xff] %v994
      %1016 = vst [vmem:[#allocation4 + $0x78] sm:$0xff] %v995
      %1017 = vst [vmem:[#allocation4 + $0x80] sm:$0xff] %v996
      %1018 = vst [vmem:[#allocation4 + $0x88] sm:$0xff] %v997
      %1019 = vst [vmem:[#allocation4 + $0x90] sm:$0xff] %v998
      %1020 = vst [vmem:[#allocation4 + $0x98] sm:$0xff] %v999
      %1021 = vst [vmem:[#allocation4 + $0xa0] sm:$0x3] %v1000
      %v1022 = vld [vmem:[#allocation2] sm:$0xe]
      %v1023 = vld [vmem:[#allocation2 + $0x4] sm:$0xf]
      %v1024 = vld [vmem:[#allocation2 + $0x8] sm:$0xf]
      %v1025 = vld [vmem:[#allocation2 + $0xc] sm:$0xf]
      %v1026 = vld [vmem:[#allocation2 + $0x10] sm:$0xf]
      %v1027 = vld [vmem:[#allocation2 + $0x14] sm:$0xf]
      %v1028 = vld [vmem:[#allocation2 + $0x18] sm:$0xf]
      %v1029 = vld [vmem:[#allocation2 + $0x1c] sm:$0xf]
      %v1030 = vld [vmem:[#allocation2 + $0x20] sm:$0xf]
      %v1031 = vld [vmem:[#allocation2 + $0x24] sm:$0xf]
      %v1032 = vld [vmem:[#allocation2 + $0x28] sm:$0xf]
      %v1033 = vld [vmem:[#allocation2 + $0x2c] sm:$0xf]
      %v1034 = vld [vmem:[#allocation2 + $0x30] sm:$0xf]
      %v1035 = vld [vmem:[#allocation2 + $0x34] sm:$0xf]
      %v1036 = vld [vmem:[#allocation2 + $0x38] sm:$0xf]
      %v1037 = vld [vmem:[#allocation2 + $0x3c] sm:$0xf]
      %v1038 = vld [vmem:[#allocation2 + $0x40] sm:$0xf]
      %v1039 = vld [vmem:[#allocation2 + $0x44] sm:$0xf]
      %v1040 = vld [vmem:[#allocation2 + $0x48] sm:$0xf]
      %v1041 = vld [vmem:[#allocation2 + $0x4c] sm:$0xf]
      %v1042 = vld [vmem:[#allocation2 + $0x50] sm:$0x3]
      %v1043 = vld [vmem:[#allocation4] sm:$0xff]
      %v1044 = vld [vmem:[#allocation4 + $0x8] sm:$0xff]
      %v1045 = vld [vmem:[#allocation4 + $0x10] sm:$0xff]
      %v1046 = vld [vmem:[#allocation4 + $0x18] sm:$0xff]
      %v1047 = vld [vmem:[#allocation4 + $0x20] sm:$0xff]
      %v1048 = vld [vmem:[#allocation4 + $0x28] sm:$0xff]
      %v1049 = vld [vmem:[#allocation4 + $0x30] sm:$0xff]
      %v1050 = vld [vmem:[#allocation4 + $0x38] sm:$0xff]
      %v1051 = vld [vmem:[#allocation4 + $0x40] sm:$0xff]
      %v1052 = vld [vmem:[#allocation4 + $0x48] sm:$0xff]
      %v1053 = vld [vmem:[#allocation4 + $0x50] sm:$0xff]
      %v1054 = vld [vmem:[#allocation4 + $0x58] sm:$0xff]
      %v1055 = vld [vmem:[#allocation4 + $0x60] sm:$0xff]
      %v1056 = vld [vmem:[#allocation4 + $0x68] sm:$0xff]
      %v1057 = vld [vmem:[#allocation4 + $0x70] sm:$0xff]
      %v1058 = vld [vmem:[#allocation4 + $0x78] sm:$0xff]
      %v1059 = vld [vmem:[#allocation4 + $0x80] sm:$0xff]
      %v1060 = vld [vmem:[#allocation4 + $0x88] sm:$0xff]
      %v1061 = vld [vmem:[#allocation4 + $0x90] sm:$0xff]
      %v1062 = vld [vmem:[#allocation4 + $0x98] sm:$0xff]
      %v1063 = vld [vmem:[#allocation4 + $0xa0] sm:$0x3]
      %s1064 = scalar_lea.vmem %s1, 128
      %v1065 = vld [vmem:[%s1064] sm:$0xf]
      %v1066 = vld [vmem:[%s1064 + $0x4] sm:$0xf]
      %v1067 = vld [vmem:[%s1064 + $0x8] sm:$0xf]
      %v1068 = vld [vmem:[%s1064 + $0xc] sm:$0xf]
      %v1069 = vld [vmem:[%s1064 + $0x10] sm:$0xf]
      %v1070 = vld [vmem:[%s1064 + $0x14] sm:$0xf]
      %v1071 = vld [vmem:[%s1064 + $0x18] sm:$0xf]
      %v1072 = vld [vmem:[%s1064 + $0x1c] sm:$0xf]
      %v1073 = vld [vmem:[%s1064 + $0x20] sm:$0xf]
      %v1074 = vld [vmem:[%s1064 + $0x24] sm:$0xf]
      %v1075 = vld [vmem:[%s1064 + $0x28] sm:$0xf]
      %v1076 = vld [vmem:[%s1064 + $0x2c] sm:$0xf]
      %v1077 = vld [vmem:[%s1064 + $0x30] sm:$0xf]
      %v1078 = vld [vmem:[%s1064 + $0x34] sm:$0xf]
      %v1079 = vld [vmem:[%s1064 + $0x38] sm:$0xf]
      %v1080 = vld [vmem:[%s1064 + $0x3c] sm:$0xf]
      %v1102 = vunpack.c.l.b16 %v1022
      %v1103 = vunpack.c.l.b16 %v1023
      %v1104 = vunpack.c.l.b16 %v1024
      %v1105 = vunpack.c.l.b16 %v1025
      %v1106 = vunpack.c.l.b16 %v1026
      %v1107 = vunpack.c.l.b16 %v1027
      %v1108 = vunpack.c.l.b16 %v1028
      %v1109 = vunpack.c.l.b16 %v1029
      %v1110 = vunpack.c.l.b16 %v1030
      %v1111 = vunpack.c.l.b16 %v1031
      %v1112 = vunpack.c.l.b16 %v1032
      %v1113 = vunpack.c.l.b16 %v1033
      %v1114 = vunpack.c.l.b16 %v1034
      %v1115 = vunpack.c.l.b16 %v1035
      %v1116 = vunpack.c.l.b16 %v1036
      %v1117 = vunpack.c.l.b16 %v1037
      %v1118 = vunpack.c.l.b16 %v1038
      %v1119 = vunpack.c.l.b16 %v1039
      %v1120 = vunpack.c.l.b16 %v1040
      %v1121 = vunpack.c.l.b16 %v1041
      %v1122 = vunpack.c.l.b16 %v1042
      %v1123 = vpack.c.b16 %v1103, %v1102
      %v1124 = vpack.c.b16 %v1105, %v1104
      %v1125 = vpack.c.b16 %v1107, %v1106
      %v1126 = vpack.c.b16 %v1109, %v1108
      %v1127 = vpack.c.b16 %v1111, %v1110
      %v1128 = vpack.c.b16 %v1113, %v1112
      %v1129 = vpack.c.b16 %v1115, %v1114
      %v1130 = vpack.c.b16 %v1117, %v1116
      %v1131 = vpack.c.b16 %v1119, %v1118
      %v1132 = vpack.c.b16 %v1121, %v1120
      %v1133 = vpack.c.b16 %v1122, %v1122
      %vm1134 = vcmask 1046528
      %v1135 = vrot.slane %v1123, 1
      %v1136 = vrot.slane %v1124, 1
      %v1137 = vsel %vm1134, %v1135, %v1136
      %v1138 = vrot.slane %v1125, 1
      %v1139 = vsel %vm1134, %v1136, %v1138
      %v1140 = vrot.slane %v1126, 1
      %v1141 = vsel %vm1134, %v1138, %v1140
      %v1142 = vrot.slane %v1127, 1
      %v1143 = vsel %vm1134, %v1140, %v1142
      %v1144 = vrot.slane %v1128, 1
      %v1145 = vsel %vm1134, %v1142, %v1144
      %v1146 = vrot.slane %v1129, 1
      %v1147 = vsel %vm1134, %v1144, %v1146
      %v1148 = vrot.slane %v1130, 1
      %v1149 = vsel %vm1134, %v1146, %v1148
      %v1150 = vrot.slane %v1131, 1
      %v1151 = vsel %vm1134, %v1148, %v1150
      %v1152 = vrot.slane %v1132, 1
      %v1153 = vsel %vm1134, %v1150, %v1152
      %v1154 = vrot.slane %v1133, 1
      %v1155 = vsel %vm1134, %v1152, %v1154
      %v1183 = vunpack.c.l.b16 %v1065
      %v1184 = vunpack.c.l.b16 %v1066
      %v1185 = vunpack.c.l.b16 %v1067
      %v1186 = vunpack.c.l.b16 %v1068
      %v1187 = vunpack.c.l.b16 %v1069
      %v1188 = vunpack.c.l.b16 %v1070
      %v1189 = vunpack.c.l.b16 %v1071
      %v1190 = vunpack.c.l.b16 %v1072
      %v1191 = vunpack.c.l.b16 %v1073
      %v1192 = vunpack.c.l.b16 %v1074
      %v1193 = vunpack.c.l.b16 %v1075
      %v1194 = vunpack.c.l.b16 %v1076
      %v1195 = vunpack.c.l.b16 %v1077
      %v1196 = vunpack.c.l.b16 %v1078
      %v1197 = vunpack.c.l.b16 %v1079
      %v1198 = vunpack.c.l.b16 %v1080
      %v1199 = vpack.c.b16 %v1184, %v1183
      %v1200 = vpack.c.b16 %v1186, %v1185
      %v1201 = vpack.c.b16 %v1188, %v1187
      %v1202 = vpack.c.b16 %v1190, %v1189
      %v1203 = vpack.c.b16 %v1192, %v1191
      %v1204 = vpack.c.b16 %v1194, %v1193
      %v1205 = vpack.c.b16 %v1196, %v1195
      %v1206 = vpack.c.b16 %v1198, %v1197
      %1215 = vmatpush.bf16.msra.mxu0 %v1206
      %1216 = vmatpush.bf16.msra.mxu0 %v1205
      %1217 = vmatpush.bf16.msra.mxu0 %v1204
      %1218 = vmatpush.bf16.msra.mxu0 %v1203
      %1219 = vmatpush.bf16.msra.mxu0 %v1202
      %1220 = vmatpush.bf16.msra.mxu0 %v1201
      %1221 = vmatpush.bf16.msra.mxu0 %v1200
      %1222 = vmatpush.bf16.msra.mxu0 %v1199
      %1223 = vmatmul.bf16.gmra.mxu0 %v1137
      %v1224 = vpop.f32.mrf.mxu0
      %v1225 = vadd.f32 0.0, %v1224
      %v1226 = vpop.f32.mrf.mxu0
      %v1227 = vadd.f32 0.0, %v1226
      %1228 = vmatmul.bf16.gmra.mxu0 %v1139
      %v1229 = vpop.f32.mrf.mxu0
      %v1230 = vadd.f32 0.0, %v1229
      %v1231 = vpop.f32.mrf.mxu0
      %v1232 = vadd.f32 0.0, %v1231
      %1233 = vmatmul.bf16.gmra.mxu0 %v1141
      %v1234 = vpop.f32.mrf.mxu0
      %v1235 = vadd.f32 0.0, %v1234
      %v1236 = vpop.f32.mrf.mxu0
      %v1237 = vadd.f32 0.0, %v1236
      %1238 = vmatmul.bf16.gmra.mxu0 %v1143
      %v1239 = vpop.f32.mrf.mxu0
      %v1240 = vadd.f32 0.0, %v1239
      %v1241 = vpop.f32.mrf.mxu0
      %v1242 = vadd.f32 0.0, %v1241
      %1243 = vmatmul.bf16.gmra.mxu0 %v1145
      %v1244 = vpop.f32.mrf.mxu0
      %v1245 = vadd.f32 0.0, %v1244
      %v1246 = vpop.f32.mrf.mxu0
      %v1247 = vadd.f32 0.0, %v1246
      %1248 = vmatmul.bf16.gmra.mxu0 %v1147
      %v1249 = vpop.f32.mrf.mxu0
      %v1250 = vadd.f32 0.0, %v1249
      %v1251 = vpop.f32.mrf.mxu0
      %v1252 = vadd.f32 0.0, %v1251
      %1253 = vmatmul.bf16.gmra.mxu0 %v1149
      %v1254 = vpop.f32.mrf.mxu0
      %v1255 = vadd.f32 0.0, %v1254
      %v1256 = vpop.f32.mrf.mxu0
      %v1257 = vadd.f32 0.0, %v1256
      %1258 = vmatmul.bf16.gmra.mxu0 %v1151
      %v1259 = vpop.f32.mrf.mxu0
      %v1260 = vadd.f32 0.0, %v1259
      %v1261 = vpop.f32.mrf.mxu0
      %v1262 = vadd.f32 0.0, %v1261
      %1263 = vmatmul.bf16.gmra.mxu0 %v1153
      %v1264 = vpop.f32.mrf.mxu0
      %v1265 = vadd.f32 0.0, %v1264
      %v1266 = vpop.f32.mrf.mxu0
      %v1267 = vadd.f32 0.0, %v1266
      %1268 = vmatmul.bf16.gmra.mxu0 %v1155
      %v1269 = vpop.f32.mrf.mxu0
      %v1270 = vadd.f32 0.0, %v1269
      %v1271 = vpop.f32.mrf.mxu0
      %v1272 = vadd.f32 0.0, %v1271
      %1273 = vmatmul.bf16.gmra.mxu0 %v1154
      %v1274 = vpop.f32.mrf.mxu0
      %v1275 = vadd.f32 0.0, %v1274
      %v1276 = vpop.f32.mrf.mxu0
      %1277 = vdwg.mxu0
      %v1278 = vadd.f32 %v1043, %v1225
      %v1279 = vadd.f32 %v1044, %v1227
      %v1280 = vadd.f32 %v1045, %v1230
      %v1281 = vadd.f32 %v1046, %v1232
      %v1282 = vadd.f32 %v1047, %v1235
      %v1283 = vadd.f32 %v1048, %v1237
      %v1284 = vadd.f32 %v1049, %v1240
      %v1285 = vadd.f32 %v1050, %v1242
      %v1286 = vadd.f32 %v1051, %v1245
      %v1287 = vadd.f32 %v1052, %v1247
      %v1288 = vadd.f32 %v1053, %v1250
      %v1289 = vadd.f32 %v1054, %v1252
      %v1290 = vadd.f32 %v1055, %v1255
      %v1291 = vadd.f32 %v1056, %v1257
      %v1292 = vadd.f32 %v1057, %v1260
      %v1293 = vadd.f32 %v1058, %v1262
      %v1294 = vadd.f32 %v1059, %v1265
      %v1295 = vadd.f32 %v1060, %v1267
      %v1296 = vadd.f32 %v1061, %v1270
      %v1297 = vadd.f32 %v1062, %v1272
      %v1298 = vadd.f32 %v1063, %v1275
      %1299 = vst [vmem:[#allocation4] sm:$0xff] %v1278
      %1300 = vst [vmem:[#allocation4 + $0x8] sm:$0xff] %v1279
      %1301 = vst [vmem:[#allocation4 + $0x10] sm:$0xff] %v1280
      %1302 = vst [vmem:[#allocation4 + $0x18] sm:$0xff] %v1281
      %1303 = vst [vmem:[#allocation4 + $0x20] sm:$0xff] %v1282
      %1304 = vst [vmem:[#allocation4 + $0x28] sm:$0xff] %v1283
      %1305 = vst [vmem:[#allocation4 + $0x30] sm:$0xff] %v1284
      %1306 = vst [vmem:[#allocation4 + $0x38] sm:$0xff] %v1285
      %1307 = vst [vmem:[#allocation4 + $0x40] sm:$0xff] %v1286
      %1308 = vst [vmem:[#allocation4 + $0x48] sm:$0xff] %v1287
      %1309 = vst [vmem:[#allocation4 + $0x50] sm:$0xff] %v1288
      %1310 = vst [vmem:[#allocation4 + $0x58] sm:$0xff] %v1289
      %1311 = vst [vmem:[#allocation4 + $0x60] sm:$0xff] %v1290
      %1312 = vst [vmem:[#allocation4 + $0x68] sm:$0xff] %v1291
      %1313 = vst [vmem:[#allocation4 + $0x70] sm:$0xff] %v1292
      %1314 = vst [vmem:[#allocation4 + $0x78] sm:$0xff] %v1293
      %1315 = vst [vmem:[#allocation4 + $0x80] sm:$0xff] %v1294
      %1316 = vst [vmem:[#allocation4 + $0x88] sm:$0xff] %v1295
      %1317 = vst [vmem:[#allocation4 + $0x90] sm:$0xff] %v1296
      %1318 = vst [vmem:[#allocation4 + $0x98] sm:$0xff] %v1297
      %1319 = vst [vmem:[#allocation4 + $0xa0] sm:$0x3] %v1298
      %v1320 = vld [vmem:[#allocation2 + $0x8] sm:$0xf]
      %v1321 = vld [vmem:[#allocation2 + $0xc] sm:$0xf]
      %v1322 = vld [vmem:[#allocation2 + $0x10] sm:$0xf]
      %v1323 = vld [vmem:[#allocation2 + $0x14] sm:$0xf]
      %v1324 = vld [vmem:[#allocation2 + $0x18] sm:$0xf]
      %v1325 = vld [vmem:[#allocation2 + $0x1c] sm:$0xf]
      %v1326 = vld [vmem:[#allocation2 + $0x20] sm:$0xf]
      %v1327 = vld [vmem:[#allocation2 + $0x24] sm:$0xf]
      %v1328 = vld [vmem:[#allocation2 + $0x28] sm:$0xf]
      %v1329 = vld [vmem:[#allocation2 + $0x2c] sm:$0xf]
      %v1330 = vld [vmem:[#allocation2 + $0x30] sm:$0xf]
      %v1331 = vld [vmem:[#allocation2 + $0x34] sm:$0xf]
      %v1332 = vld [vmem:[#allocation2 + $0x38] sm:$0xf]
      %v1333 = vld [vmem:[#allocation2 + $0x3c] sm:$0xf]
      %v1334 = vld [vmem:[#allocation2 + $0x40] sm:$0xf]
      %v1335 = vld [vmem:[#allocation2 + $0x44] sm:$0xf]
      %v1336 = vld [vmem:[#allocation2 + $0x48] sm:$0xf]
      %v1337 = vld [vmem:[#allocation2 + $0x4c] sm:$0xf]
      %v1338 = vld [vmem:[#allocation2 + $0x50] sm:$0xf]
      %v1339 = vld [vmem:[#allocation2 + $0x54] sm:$0xf]
      %v1340 = vld [vmem:[#allocation2 + $0x58] sm:$0x1]
      %v1341 = vld [vmem:[#allocation4] sm:$0xff]
      %v1342 = vld [vmem:[#allocation4 + $0x8] sm:$0xff]
      %v1343 = vld [vmem:[#allocation4 + $0x10] sm:$0xff]
      %v1344 = vld [vmem:[#allocation4 + $0x18] sm:$0xff]
      %v1345 = vld [vmem:[#allocation4 + $0x20] sm:$0xff]
      %v1346 = vld [vmem:[#allocation4 + $0x28] sm:$0xff]
      %v1347 = vld [vmem:[#allocation4 + $0x30] sm:$0xff]
      %v1348 = vld [vmem:[#allocation4 + $0x38] sm:$0xff]
      %v1349 = vld [vmem:[#allocation4 + $0x40] sm:$0xff]
      %v1350 = vld [vmem:[#allocation4 + $0x48] sm:$0xff]
      %v1351 = vld [vmem:[#allocation4 + $0x50] sm:$0xff]
      %v1352 = vld [vmem:[#allocation4 + $0x58] sm:$0xff]
      %v1353 = vld [vmem:[#allocation4 + $0x60] sm:$0xff]
      %v1354 = vld [vmem:[#allocation4 + $0x68] sm:$0xff]
      %v1355 = vld [vmem:[#allocation4 + $0x70] sm:$0xff]
      %v1356 = vld [vmem:[#allocation4 + $0x78] sm:$0xff]
      %v1357 = vld [vmem:[#allocation4 + $0x80] sm:$0xff]
      %v1358 = vld [vmem:[#allocation4 + $0x88] sm:$0xff]
      %v1359 = vld [vmem:[#allocation4 + $0x90] sm:$0xff]
      %v1360 = vld [vmem:[#allocation4 + $0x98] sm:$0xff]
      %v1361 = vld [vmem:[#allocation4 + $0xa0] sm:$0x3]
      %s1362 = scalar_lea.vmem %s1, 192
      %v1363 = vld [vmem:[%s1362] sm:$0xf]
      %v1364 = vld [vmem:[%s1362 + $0x4] sm:$0xf]
      %v1365 = vld [vmem:[%s1362 + $0x8] sm:$0xf]
      %v1366 = vld [vmem:[%s1362 + $0xc] sm:$0xf]
      %v1367 = vld [vmem:[%s1362 + $0x10] sm:$0xf]
      %v1368 = vld [vmem:[%s1362 + $0x14] sm:$0xf]
      %v1369 = vld [vmem:[%s1362 + $0x18] sm:$0xf]
      %v1370 = vld [vmem:[%s1362 + $0x1c] sm:$0xf]
      %v1371 = vld [vmem:[%s1362 + $0x20] sm:$0xf]
      %v1372 = vld [vmem:[%s1362 + $0x24] sm:$0xf]
      %v1373 = vld [vmem:[%s1362 + $0x28] sm:$0xf]
      %v1374 = vld [vmem:[%s1362 + $0x2c] sm:$0xf]
      %v1375 = vld [vmem:[%s1362 + $0x30] sm:$0xf]
      %v1376 = vld [vmem:[%s1362 + $0x34] sm:$0xf]
      %v1377 = vld [vmem:[%s1362 + $0x38] sm:$0xf]
      %v1378 = vld [vmem:[%s1362 + $0x3c] sm:$0xf]
      %v1400 = vunpack.c.l.b16 %v1320
      %v1401 = vunpack.c.l.b16 %v1321
      %v1402 = vunpack.c.l.b16 %v1322
      %v1403 = vunpack.c.l.b16 %v1323
      %v1404 = vunpack.c.l.b16 %v1324
      %v1405 = vunpack.c.l.b16 %v1325
      %v1406 = vunpack.c.l.b16 %v1326
      %v1407 = vunpack.c.l.b16 %v1327
      %v1408 = vunpack.c.l.b16 %v1328
      %v1409 = vunpack.c.l.b16 %v1329
      %v1410 = vunpack.c.l.b16 %v1330
      %v1411 = vunpack.c.l.b16 %v1331
      %v1412 = vunpack.c.l.b16 %v1332
      %v1413 = vunpack.c.l.b16 %v1333
      %v1414 = vunpack.c.l.b16 %v1334
      %v1415 = vunpack.c.l.b16 %v1335
      %v1416 = vunpack.c.l.b16 %v1336
      %v1417 = vunpack.c.l.b16 %v1337
      %v1418 = vunpack.c.l.b16 %v1338
      %v1419 = vunpack.c.l.b16 %v1339
      %v1420 = vunpack.c.l.b16 %v1340
      %v1421 = vpack.c.b16 %v1401, %v1400
      %v1422 = vpack.c.b16 %v1403, %v1402
      %v1423 = vpack.c.b16 %v1405, %v1404
      %v1424 = vpack.c.b16 %v1407, %v1406
      %v1425 = vpack.c.b16 %v1409, %v1408
      %v1426 = vpack.c.b16 %v1411, %v1410
      %v1427 = vpack.c.b16 %v1413, %v1412
      %v1428 = vpack.c.b16 %v1415, %v1414
      %v1429 = vpack.c.b16 %v1417, %v1416
      %v1430 = vpack.c.b16 %v1419, %v1418
      %v1431 = vpack.c.b16 %v1420, %v1420
      %v1459 = vunpack.c.l.b16 %v1363
      %v1460 = vunpack.c.l.b16 %v1364
      %v1461 = vunpack.c.l.b16 %v1365
      %v1462 = vunpack.c.l.b16 %v1366
      %v1463 = vunpack.c.l.b16 %v1367
      %v1464 = vunpack.c.l.b16 %v1368
      %v1465 = vunpack.c.l.b16 %v1369
      %v1466 = vunpack.c.l.b16 %v1370
      %v1467 = vunpack.c.l.b16 %v1371
      %v1468 = vunpack.c.l.b16 %v1372
      %v1469 = vunpack.c.l.b16 %v1373
      %v1470 = vunpack.c.l.b16 %v1374
      %v1471 = vunpack.c.l.b16 %v1375
      %v1472 = vunpack.c.l.b16 %v1376
      %v1473 = vunpack.c.l.b16 %v1377
      %v1474 = vunpack.c.l.b16 %v1378
      %v1475 = vpack.c.b16 %v1460, %v1459
      %v1476 = vpack.c.b16 %v1462, %v1461
      %v1477 = vpack.c.b16 %v1464, %v1463
      %v1478 = vpack.c.b16 %v1466, %v1465
      %v1479 = vpack.c.b16 %v1468, %v1467
      %v1480 = vpack.c.b16 %v1470, %v1469
      %v1481 = vpack.c.b16 %v1472, %v1471
      %v1482 = vpack.c.b16 %v1474, %v1473
      %1491 = vmatpush.bf16.msra.mxu0 %v1482
      %1492 = vmatpush.bf16.msra.mxu0 %v1481
      %1493 = vmatpush.bf16.msra.mxu0 %v1480
      %1494 = vmatpush.bf16.msra.mxu0 %v1479
      %1495 = vmatpush.bf16.msra.mxu0 %v1478
      %1496 = vmatpush.bf16.msra.mxu0 %v1477
      %1497 = vmatpush.bf16.msra.mxu0 %v1476
      %1498 = vmatpush.bf16.msra.mxu0 %v1475
      %1499 = vmatmul.bf16.gmra.mxu0 %v1421
      %v1500 = vpop.f32.mrf.mxu0
      %v1501 = vadd.f32 0.0, %v1500
      %v1502 = vpop.f32.mrf.mxu0
      %v1503 = vadd.f32 0.0, %v1502
      %1504 = vmatmul.bf16.gmra.mxu0 %v1422
      %v1505 = vpop.f32.mrf.mxu0
      %v1506 = vadd.f32 0.0, %v1505
      %v1507 = vpop.f32.mrf.mxu0
      %v1508 = vadd.f32 0.0, %v1507
      %1509 = vmatmul.bf16.gmra.mxu0 %v1423
      %v1510 = vpop.f32.mrf.mxu0
      %v1511 = vadd.f32 0.0, %v1510
      %v1512 = vpop.f32.mrf.mxu0
      %v1513 = vadd.f32 0.0, %v1512
      %1514 = vmatmul.bf16.gmra.mxu0 %v1424
      %v1515 = vpop.f32.mrf.mxu0
      %v1516 = vadd.f32 0.0, %v1515
      %v1517 = vpop.f32.mrf.mxu0
      %v1518 = vadd.f32 0.0, %v1517
      %1519 = vmatmul.bf16.gmra.mxu0 %v1425
      %v1520 = vpop.f32.mrf.mxu0
      %v1521 = vadd.f32 0.0, %v1520
      %v1522 = vpop.f32.mrf.mxu0
      %v1523 = vadd.f32 0.0, %v1522
      %1524 = vmatmul.bf16.gmra.mxu0 %v1426
      %v1525 = vpop.f32.mrf.mxu0
      %v1526 = vadd.f32 0.0, %v1525
      %v1527 = vpop.f32.mrf.mxu0
      %v1528 = vadd.f32 0.0, %v1527
      %1529 = vmatmul.bf16.gmra.mxu0 %v1427
      %v1530 = vpop.f32.mrf.mxu0
      %v1531 = vadd.f32 0.0, %v1530
      %v1532 = vpop.f32.mrf.mxu0
      %v1533 = vadd.f32 0.0, %v1532
      %1534 = vmatmul.bf16.gmra.mxu0 %v1428
      %v1535 = vpop.f32.mrf.mxu0
      %v1536 = vadd.f32 0.0, %v1535
      %v1537 = vpop.f32.mrf.mxu0
      %v1538 = vadd.f32 0.0, %v1537
      %1539 = vmatmul.bf16.gmra.mxu0 %v1429
      %v1540 = vpop.f32.mrf.mxu0
      %v1541 = vadd.f32 0.0, %v1540
      %v1542 = vpop.f32.mrf.mxu0
      %v1543 = vadd.f32 0.0, %v1542
      %1544 = vmatmul.bf16.gmra.mxu0 %v1430
      %v1545 = vpop.f32.mrf.mxu0
      %v1546 = vadd.f32 0.0, %v1545
      %v1547 = vpop.f32.mrf.mxu0
      %v1548 = vadd.f32 0.0, %v1547
      %1549 = vmatmul.bf16.gmra.mxu0 %v1431
      %v1550 = vpop.f32.mrf.mxu0
      %v1551 = vadd.f32 0.0, %v1550
      %v1552 = vpop.f32.mrf.mxu0
      %1553 = vdwg.mxu0
      %v1554 = vadd.f32 %v1341, %v1501
      %v1555 = vadd.f32 %v1342, %v1503
      %v1556 = vadd.f32 %v1343, %v1506
      %v1557 = vadd.f32 %v1344, %v1508
      %v1558 = vadd.f32 %v1345, %v1511
      %v1559 = vadd.f32 %v1346, %v1513
      %v1560 = vadd.f32 %v1347, %v1516
      %v1561 = vadd.f32 %v1348, %v1518
      %v1562 = vadd.f32 %v1349, %v1521
      %v1563 = vadd.f32 %v1350, %v1523
      %v1564 = vadd.f32 %v1351, %v1526
      %v1565 = vadd.f32 %v1352, %v1528
      %v1566 = vadd.f32 %v1353, %v1531
      %v1567 = vadd.f32 %v1354, %v1533
      %v1568 = vadd.f32 %v1355, %v1536
      %v1569 = vadd.f32 %v1356, %v1538
      %v1570 = vadd.f32 %v1357, %v1541
      %v1571 = vadd.f32 %v1358, %v1543
      %v1572 = vadd.f32 %v1359, %v1546
      %v1573 = vadd.f32 %v1360, %v1548
      %v1574 = vadd.f32 %v1361, %v1551
      %1575 = vst [vmem:[#allocation4] sm:$0xff] %v1554
      %1576 = vst [vmem:[#allocation4 + $0x8] sm:$0xff] %v1555
      %1577 = vst [vmem:[#allocation4 + $0x10] sm:$0xff] %v1556
      %1578 = vst [vmem:[#allocation4 + $0x18] sm:$0xff] %v1557
      %1579 = vst [vmem:[#allocation4 + $0x20] sm:$0xff] %v1558
      %1580 = vst [vmem:[#allocation4 + $0x28] sm:$0xff] %v1559
      %1581 = vst [vmem:[#allocation4 + $0x30] sm:$0xff] %v1560
      %1582 = vst [vmem:[#allocation4 + $0x38] sm:$0xff] %v1561
      %1583 = vst [vmem:[#allocation4 + $0x40] sm:$0xff] %v1562
      %1584 = vst [vmem:[#allocation4 + $0x48] sm:$0xff] %v1563
      %1585 = vst [vmem:[#allocation4 + $0x50] sm:$0xff] %v1564
      %1586 = vst [vmem:[#allocation4 + $0x58] sm:$0xff] %v1565
      %1587 = vst [vmem:[#allocation4 + $0x60] sm:$0xff] %v1566
      %1588 = vst [vmem:[#allocation4 + $0x68] sm:$0xff] %v1567
      %1589 = vst [vmem:[#allocation4 + $0x70] sm:$0xff] %v1568
      %1590 = vst [vmem:[#allocation4 + $0x78] sm:$0xff] %v1569
      %1591 = vst [vmem:[#allocation4 + $0x80] sm:$0xff] %v1570
      %1592 = vst [vmem:[#allocation4 + $0x88] sm:$0xff] %v1571
      %1593 = vst [vmem:[#allocation4 + $0x90] sm:$0xff] %v1572
      %1594 = vst [vmem:[#allocation4 + $0x98] sm:$0xff] %v1573
      %1595 = vst [vmem:[#allocation4 + $0xa0] sm:$0x3] %v1574
      %v1596 = vld [vmem:[#allocation2 + $0x8] sm:$0xf]
      %v1597 = vld [vmem:[#allocation2 + $0xc] sm:$0xf]
      %v1598 = vld [vmem:[#allocation2 + $0x10] sm:$0xf]
      %v1599 = vld [vmem:[#allocation2 + $0x14] sm:$0xf]
      %v1600 = vld [vmem:[#allocation2 + $0x18] sm:$0xf]
      %v1601 = vld [vmem:[#allocation2 + $0x1c] sm:$0xf]
      %v1602 = vld [vmem:[#allocation2 + $0x20] sm:$0xf]
      %v1603 = vld [vmem:[#allocation2 + $0x24] sm:$0xf]
      %v1604 = vld [vmem:[#allocation2 + $0x28] sm:$0xf]
      %v1605 = vld [vmem:[#allocation2 + $0x2c] sm:$0xf]
      %v1606 = vld [vmem:[#allocation2 + $0x30] sm:$0xf]
      %v1607 = vld [vmem:[#allocation2 + $0x34] sm:$0xf]
      %v1608 = vld [vmem:[#allocation2 + $0x38] sm:$0xf]
      %v1609 = vld [vmem:[#allocation2 + $0x3c] sm:$0xf]
      %v1610 = vld [vmem:[#allocation2 + $0x40] sm:$0xf]
      %v1611 = vld [vmem:[#allocation2 + $0x44] sm:$0xf]
      %v1612 = vld [vmem:[#allocation2 + $0x48] sm:$0xf]
      %v1613 = vld [vmem:[#allocation2 + $0x4c] sm:$0xf]
      %v1614 = vld [vmem:[#allocation2 + $0x50] sm:$0xf]
      %v1615 = vld [vmem:[#allocation2 + $0x54] sm:$0xf]
      %v1616 = vld [vmem:[#allocation2 + $0x58] sm:$0x3]
      %v1617 = vld [vmem:[#allocation4] sm:$0xff]
      %v1618 = vld [vmem:[#allocation4 + $0x8] sm:$0xff]
      %v1619 = vld [vmem:[#allocation4 + $0x10] sm:$0xff]
      %v1620 = vld [vmem:[#allocation4 + $0x18] sm:$0xff]
      %v1621 = vld [vmem:[#allocation4 + $0x20] sm:$0xff]
      %v1622 = vld [vmem:[#allocation4 + $0x28] sm:$0xff]
      %v1623 = vld [vmem:[#allocation4 + $0x30] sm:$0xff]
      %v1624 = vld [vmem:[#allocation4 + $0x38] sm:$0xff]
      %v1625 = vld [vmem:[#allocation4 + $0x40] sm:$0xff]
      %v1626 = vld [vmem:[#allocation4 + $0x48] sm:$0xff]
      %v1627 = vld [vmem:[#allocation4 + $0x50] sm:$0xff]
      %v1628 = vld [vmem:[#allocation4 + $0x58] sm:$0xff]
      %v1629 = vld [vmem:[#allocation4 + $0x60] sm:$0xff]
      %v1630 = vld [vmem:[#allocation4 + $0x68] sm:$0xff]
      %v1631 = vld [vmem:[#allocation4 + $0x70] sm:$0xff]
      %v1632 = vld [vmem:[#allocation4 + $0x78] sm:$0xff]
      %v1633 = vld [vmem:[#allocation4 + $0x80] sm:$0xff]
      %v1634 = vld [vmem:[#allocation4 + $0x88] sm:$0xff]
      %v1635 = vld [vmem:[#allocation4 + $0x90] sm:$0xff]
      %v1636 = vld [vmem:[#allocation4 + $0x98] sm:$0xff]
      %v1637 = vld [vmem:[#allocation4 + $0xa0] sm:$0x3]
      %s1638 = scalar_lea.vmem %s1, 256
      %v1639 = vld [vmem:[%s1638] sm:$0xf]
      %v1640 = vld [vmem:[%s1638 + $0x4] sm:$0xf]
      %v1641 = vld [vmem:[%s1638 + $0x8] sm:$0xf]
      %v1642 = vld [vmem:[%s1638 + $0xc] sm:$0xf]
      %v1643 = vld [vmem:[%s1638 + $0x10] sm:$0xf]
      %v1644 = vld [vmem:[%s1638 + $0x14] sm:$0xf]
      %v1645 = vld [vmem:[%s1638 + $0x18] sm:$0xf]
      %v1646 = vld [vmem:[%s1638 + $0x1c] sm:$0xf]
      %v1647 = vld [vmem:[%s1638 + $0x20] sm:$0xf]
      %v1648 = vld [vmem:[%s1638 + $0x24] sm:$0xf]
      %v1649 = vld [vmem:[%s1638 + $0x28] sm:$0xf]
      %v1650 = vld [vmem:[%s1638 + $0x2c] sm:$0xf]
      %v1651 = vld [vmem:[%s1638 + $0x30] sm:$0xf]
      %v1652 = vld [vmem:[%s1638 + $0x34] sm:$0xf]
      %v1653 = vld [vmem:[%s1638 + $0x38] sm:$0xf]
      %v1654 = vld [vmem:[%s1638 + $0x3c] sm:$0xf]
      %v1676 = vunpack.c.l.b16 %v1596
      %v1677 = vunpack.c.l.b16 %v1597
      %v1678 = vunpack.c.l.b16 %v1598
      %v1679 = vunpack.c.l.b16 %v1599
      %v1680 = vunpack.c.l.b16 %v1600
      %v1681 = vunpack.c.l.b16 %v1601
      %v1682 = vunpack.c.l.b16 %v1602
      %v1683 = vunpack.c.l.b16 %v1603
      %v1684 = vunpack.c.l.b16 %v1604
      %v1685 = vunpack.c.l.b16 %v1605
      %v1686 = vunpack.c.l.b16 %v1606
      %v1687 = vunpack.c.l.b16 %v1607
      %v1688 = vunpack.c.l.b16 %v1608
      %v1689 = vunpack.c.l.b16 %v1609
      %v1690 = vunpack.c.l.b16 %v1610
      %v1691 = vunpack.c.l.b16 %v1611
      %v1692 = vunpack.c.l.b16 %v1612
      %v1693 = vunpack.c.l.b16 %v1613
      %v1694 = vunpack.c.l.b16 %v1614
      %v1695 = vunpack.c.l.b16 %v1615
      %v1696 = vunpack.c.l.b16 %v1616
      %v1697 = vpack.c.b16 %v1677, %v1676
      %v1698 = vpack.c.b16 %v1679, %v1678
      %v1699 = vpack.c.b16 %v1681, %v1680
      %v1700 = vpack.c.b16 %v1683, %v1682
      %v1701 = vpack.c.b16 %v1685, %v1684
      %v1702 = vpack.c.b16 %v1687, %v1686
      %v1703 = vpack.c.b16 %v1689, %v1688
      %v1704 = vpack.c.b16 %v1691, %v1690
      %v1705 = vpack.c.b16 %v1693, %v1692
      %v1706 = vpack.c.b16 %v1695, %v1694
      %v1707 = vpack.c.b16 %v1696, %v1696
      %v1709 = vshrl.u32 %v1697, 16
      %v1711 = vshll.u32 %v1697, 16
      %v1713 = vrot.slane %v1711, 1
      %v1714 = vor.u32 %v1709, %v1713
      %v1716 = vshll.u32 %v1698, 16
      %v1718 = vrot.slane %v1716, 1
      %v1719 = vsel %vm770, %v1714, %v1718
      %v1720 = vshrl.u32 %v1698, 16
      %v1722 = vor.u32 %v1720, %v1718
      %v1724 = vshll.u32 %v1699, 16
      %v1726 = vrot.slane %v1724, 1
      %v1727 = vsel %vm770, %v1722, %v1726
      %v1728 = vshrl.u32 %v1699, 16
      %v1730 = vor.u32 %v1728, %v1726
      %v1732 = vshll.u32 %v1700, 16
      %v1734 = vrot.slane %v1732, 1
      %v1735 = vsel %vm770, %v1730, %v1734
      %v1736 = vshrl.u32 %v1700, 16
      %v1738 = vor.u32 %v1736, %v1734
      %v1740 = vshll.u32 %v1701, 16
      %v1742 = vrot.slane %v1740, 1
      %v1743 = vsel %vm770, %v1738, %v1742
      %v1744 = vshrl.u32 %v1701, 16
      %v1746 = vor.u32 %v1744, %v1742
      %v1748 = vshll.u32 %v1702, 16
      %v1750 = vrot.slane %v1748, 1
      %v1751 = vsel %vm770, %v1746, %v1750
      %v1752 = vshrl.u32 %v1702, 16
      %v1754 = vor.u32 %v1752, %v1750
      %v1756 = vshll.u32 %v1703, 16
      %v1758 = vrot.slane %v1756, 1
      %v1759 = vsel %vm770, %v1754, %v1758
      %v1760 = vshrl.u32 %v1703, 16
      %v1762 = vor.u32 %v1760, %v1758
      %v1764 = vshll.u32 %v1704, 16
      %v1766 = vrot.slane %v1764, 1
      %v1767 = vsel %vm770, %v1762, %v1766
      %v1768 = vshrl.u32 %v1704, 16
      %v1770 = vor.u32 %v1768, %v1766
      %v1772 = vshll.u32 %v1705, 16
      %v1774 = vrot.slane %v1772, 1
      %v1775 = vsel %vm770, %v1770, %v1774
      %v1776 = vshrl.u32 %v1705, 16
      %v1778 = vor.u32 %v1776, %v1774
      %v1780 = vshll.u32 %v1706, 16
      %v1782 = vrot.slane %v1780, 1
      %v1783 = vsel %vm770, %v1778, %v1782
      %v1784 = vshrl.u32 %v1706, 16
      %v1786 = vor.u32 %v1784, %v1782
      %v1788 = vshll.u32 %v1707, 16
      %v1790 = vrot.slane %v1788, 1
      %v1791 = vsel %vm770, %v1786, %v1790
      %v1792 = vshrl.u32 %v1707, 16
      %v1794 = vor.u32 %v1792, %v1790
      %v1822 = vunpack.c.l.b16 %v1639
      %v1823 = vunpack.c.l.b16 %v1640
      %v1824 = vunpack.c.l.b16 %v1641
      %v1825 = vunpack.c.l.b16 %v1642
      %v1826 = vunpack.c.l.b16 %v1643
      %v1827 = vunpack.c.l.b16 %v1644
      %v1828 = vunpack.c.l.b16 %v1645
      %v1829 = vunpack.c.l.b16 %v1646
      %v1830 = vunpack.c.l.b16 %v1647
      %v1831 = vunpack.c.l.b16 %v1648
      %v1832 = vunpack.c.l.b16 %v1649
      %v1833 = vunpack.c.l.b16 %v1650
      %v1834 = vunpack.c.l.b16 %v1651
      %v1835 = vunpack.c.l.b16 %v1652
      %v1836 = vunpack.c.l.b16 %v1653
      %v1837 = vunpack.c.l.b16 %v1654
      %v1838 = vpack.c.b16 %v1823, %v1822
      %v1839 = vpack.c.b16 %v1825, %v1824
      %v1840 = vpack.c.b16 %v1827, %v1826
      %v1841 = vpack.c.b16 %v1829, %v1828
      %v1842 = vpack.c.b16 %v1831, %v1830
      %v1843 = vpack.c.b16 %v1833, %v1832
      %v1844 = vpack.c.b16 %v1835, %v1834
      %v1845 = vpack.c.b16 %v1837, %v1836
      %1854 = vmatpush.bf16.msra.mxu0 %v1845
      %1855 = vmatpush.bf16.msra.mxu0 %v1844
      %1856 = vmatpush.bf16.msra.mxu0 %v1843
      %1857 = vmatpush.bf16.msra.mxu0 %v1842
      %1858 = vmatpush.bf16.msra.mxu0 %v1841
      %1859 = vmatpush.bf16.msra.mxu0 %v1840
      %1860 = vmatpush.bf16.msra.mxu0 %v1839
      %1861 = vmatpush.bf16.msra.mxu0 %v1838
      %1862 = vmatmul.bf16.gmra.mxu0 %v1719
      %v1863 = vpop.f32.mrf.mxu0
      %v1864 = vadd.f32 0.0, %v1863
      %v1865 = vpop.f32.mrf.mxu0
      %v1866 = vadd.f32 0.0, %v1865
      %1867 = vmatmul.bf16.gmra.mxu0 %v1727
      %v1868 = vpop.f32.mrf.mxu0
      %v1869 = vadd.f32 0.0, %v1868
      %v1870 = vpop.f32.mrf.mxu0
      %v1871 = vadd.f32 0.0, %v1870
      %1872 = vmatmul.bf16.gmra.mxu0 %v1735
      %v1873 = vpop.f32.mrf.mxu0
      %v1874 = vadd.f32 0.0, %v1873
      %v1875 = vpop.f32.mrf.mxu0
      %v1876 = vadd.f32 0.0, %v1875
      %1877 = vmatmul.bf16.gmra.mxu0 %v1743
      %v1878 = vpop.f32.mrf.mxu0
      %v1879 = vadd.f32 0.0, %v1878
      %v1880 = vpop.f32.mrf.mxu0
      %v1881 = vadd.f32 0.0, %v1880
      %1882 = vmatmul.bf16.gmra.mxu0 %v1751
      %v1883 = vpop.f32.mrf.mxu0
      %v1884 = vadd.f32 0.0, %v1883
      %v1885 = vpop.f32.mrf.mxu0
      %v1886 = vadd.f32 0.0, %v1885
      %1887 = vmatmul.bf16.gmra.mxu0 %v1759
      %v1888 = vpop.f32.mrf.mxu0
      %v1889 = vadd.f32 0.0, %v1888
      %v1890 = vpop.f32.mrf.mxu0
      %v1891 = vadd.f32 0.0, %v1890
      %1892 = vmatmul.bf16.gmra.mxu0 %v1767
      %v1893 = vpop.f32.mrf.mxu0
      %v1894 = vadd.f32 0.0, %v1893
      %v1895 = vpop.f32.mrf.mxu0
      %v1896 = vadd.f32 0.0, %v1895
      %1897 = vmatmul.bf16.gmra.mxu0 %v1775
      %v1898 = vpop.f32.mrf.mxu0
      %v1899 = vadd.f32 0.0, %v1898
      %v1900 = vpop.f32.mrf.mxu0
      %v1901 = vadd.f32 0.0, %v1900
      %1902 = vmatmul.bf16.gmra.mxu0 %v1783
      %v1903 = vpop.f32.mrf.mxu0
      %v1904 = vadd.f32 0.0, %v1903
      %v1905 = vpop.f32.mrf.mxu0
      %v1906 = vadd.f32 0.0, %v1905
      %1907 = vmatmul.bf16.gmra.mxu0 %v1791
      %v1908 = vpop.f32.mrf.mxu0
      %v1909 = vadd.f32 0.0, %v1908
      %v1910 = vpop.f32.mrf.mxu0
      %v1911 = vadd.f32 0.0, %v1910
      %1912 = vmatmul.bf16.gmra.mxu0 %v1794
      %v1913 = vpop.f32.mrf.mxu0
      %v1914 = vadd.f32 0.0, %v1913
      %v1915 = vpop.f32.mrf.mxu0
      %1916 = vdwg.mxu0
      %v1917 = vadd.f32 %v1617, %v1864
      %v1918 = vadd.f32 %v1618, %v1866
      %v1919 = vadd.f32 %v1619, %v1869
      %v1920 = vadd.f32 %v1620, %v1871
      %v1921 = vadd.f32 %v1621, %v1874
      %v1922 = vadd.f32 %v1622, %v1876
      %v1923 = vadd.f32 %v1623, %v1879
      %v1924 = vadd.f32 %v1624, %v1881
      %v1925 = vadd.f32 %v1625, %v1884
      %v1926 = vadd.f32 %v1626, %v1886
      %v1927 = vadd.f32 %v1627, %v1889
      %v1928 = vadd.f32 %v1628, %v1891
      %v1929 = vadd.f32 %v1629, %v1894
      %v1930 = vadd.f32 %v1630, %v1896
      %v1931 = vadd.f32 %v1631, %v1899
      %v1932 = vadd.f32 %v1632, %v1901
      %v1933 = vadd.f32 %v1633, %v1904
      %v1934 = vadd.f32 %v1634, %v1906
      %v1935 = vadd.f32 %v1635, %v1909
      %v1936 = vadd.f32 %v1636, %v1911
      %v1937 = vadd.f32 %v1637, %v1914
      %1938 = vst [vmem:[#allocation4] sm:$0xff] %v1917
      %1939 = vst [vmem:[#allocation4 + $0x8] sm:$0xff] %v1918
      %1940 = vst [vmem:[#allocation4 + $0x10] sm:$0xff] %v1919
      %1941 = vst [vmem:[#allocation4 + $0x18] sm:$0xff] %v1920
      %1942 = vst [vmem:[#allocation4 + $0x20] sm:$0xff] %v1921
      %1943 = vst [vmem:[#allocation4 + $0x28] sm:$0xff] %v1922
      %1944 = vst [vmem:[#allocation4 + $0x30] sm:$0xff] %v1923
      %1945 = vst [vmem:[#allocation4 + $0x38] sm:$0xff] %v1924
      %1946 = vst [vmem:[#allocation4 + $0x40] sm:$0xff] %v1925
      %1947 = vst [vmem:[#allocation4 + $0x48] sm:$0xff] %v1926
      %1948 = vst [vmem:[#allocation4 + $0x50] sm:$0xff] %v1927
      %1949 = vst [vmem:[#allocation4 + $0x58] sm:$0xff] %v1928
      %1950 = vst [vmem:[#allocation4 + $0x60] sm:$0xff] %v1929
      %1951 = vst [vmem:[#allocation4 + $0x68] sm:$0xff] %v1930
      %1952 = vst [vmem:[#allocation4 + $0x70] sm:$0xff] %v1931
      %1953 = vst [vmem:[#allocation4 + $0x78] sm:$0xff] %v1932
      %1954 = vst [vmem:[#allocation4 + $0x80] sm:$0xff] %v1933
      %1955 = vst [vmem:[#allocation4 + $0x88] sm:$0xff] %v1934
      %1956 = vst [vmem:[#allocation4 + $0x90] sm:$0xff] %v1935
      %1957 = vst [vmem:[#allocation4 + $0x98] sm:$0xff] %v1936
      %1958 = vst [vmem:[#allocation4 + $0xa0] sm:$0x3] %v1937
      %v1959 = vld [vmem:[#allocation2 + $0x8] sm:$0xe]
      %v1960 = vld [vmem:[#allocation2 + $0xc] sm:$0xf]
      %v1961 = vld [vmem:[#allocation2 + $0x10] sm:$0xf]
      %v1962 = vld [vmem:[#allocation2 + $0x14] sm:$0xf]
      %v1963 = vld [vmem:[#allocation2 + $0x18] sm:$0xf]
      %v1964 = vld [vmem:[#allocation2 + $0x1c] sm:$0xf]
      %v1965 = vld [vmem:[#allocation2 + $0x20] sm:$0xf]
      %v1966 = vld [vmem:[#allocation2 + $0x24] sm:$0xf]
      %v1967 = vld [vmem:[#allocation2 + $0x28] sm:$0xf]
      %v1968 = vld [vmem:[#allocation2 + $0x2c] sm:$0xf]
      %v1969 = vld [vmem:[#allocation2 + $0x30] sm:$0xf]
      %v1970 = vld [vmem:[#allocation2 + $0x34] sm:$0xf]
      %v1971 = vld [vmem:[#allocation2 + $0x38] sm:$0xf]
      %v1972 = vld [vmem:[#allocation2 + $0x3c] sm:$0xf]
      %v1973 = vld [vmem:[#allocation2 + $0x40] sm:$0xf]
      %v1974 = vld [vmem:[#allocation2 + $0x44] sm:$0xf]
      %v1975 = vld [vmem:[#allocation2 + $0x48] sm:$0xf]
      %v1976 = vld [vmem:[#allocation2 + $0x4c] sm:$0xf]
      %v1977 = vld [vmem:[#allocation2 + $0x50] sm:$0xf]
      %v1978 = vld [vmem:[#allocation2 + $0x54] sm:$0xf]
      %v1979 = vld [vmem:[#allocation2 + $0x58] sm:$0x3]
      %v1980 = vld [vmem:[#allocation4] sm:$0xff]
      %v1981 = vld [vmem:[#allocation4 + $0x8] sm:$0xff]
      %v1982 = vld [vmem:[#allocation4 + $0x10] sm:$0xff]
      %v1983 = vld [vmem:[#allocation4 + $0x18] sm:$0xff]
      %v1984 = vld [vmem:[#allocation4 + $0x20] sm:$0xff]
      %v1985 = vld [vmem:[#allocation4 + $0x28] sm:$0xff]
      %v1986 = vld [vmem:[#allocation4 + $0x30] sm:$0xff]
      %v1987 = vld [vmem:[#allocation4 + $0x38] sm:$0xff]
      %v1988 = vld [vmem:[#allocation4 + $0x40] sm:$0xff]
      %v1989 = vld [vmem:[#allocation4 + $0x48] sm:$0xff]
      %v1990 = vld [vmem:[#allocation4 + $0x50] sm:$0xff]
      %v1991 = vld [vmem:[#allocation4 + $0x58] sm:$0xff]
      %v1992 = vld [vmem:[#allocation4 + $0x60] sm:$0xff]
      %v1993 = vld [vmem:[#allocation4 + $0x68] sm:$0xff]
      %v1994 = vld [vmem:[#allocation4 + $0x70] sm:$0xff]
      %v1995 = vld [vmem:[#allocation4 + $0x78] sm:$0xff]
      %v1996 = vld [vmem:[#allocation4 + $0x80] sm:$0xff]
      %v1997 = vld [vmem:[#allocation4 + $0x88] sm:$0xff]
      %v1998 = vld [vmem:[#allocation4 + $0x90] sm:$0xff]
      %v1999 = vld [vmem:[#allocation4 + $0x98] sm:$0xff]
      %v2000 = vld [vmem:[#allocation4 + $0xa0] sm:$0x3]
      %s2001 = scalar_lea.vmem %s1, 320
      %v2002 = vld [vmem:[%s2001] sm:$0xf]
      %v2003 = vld [vmem:[%s2001 + $0x4] sm:$0xf]
      %v2004 = vld [vmem:[%s2001 + $0x8] sm:$0xf]
      %v2005 = vld [vmem:[%s2001 + $0xc] sm:$0xf]
      %v2006 = vld [vmem:[%s2001 + $0x10] sm:$0xf]
      %v2007 = vld [vmem:[%s2001 + $0x14] sm:$0xf]
      %v2008 = vld [vmem:[%s2001 + $0x18] sm:$0xf]
      %v2009 = vld [vmem:[%s2001 + $0x1c] sm:$0xf]
      %v2010 = vld [vmem:[%s2001 + $0x20] sm:$0xf]
      %v2011 = vld [vmem:[%s2001 + $0x24] sm:$0xf]
      %v2012 = vld [vmem:[%s2001 + $0x28] sm:$0xf]
      %v2013 = vld [vmem:[%s2001 + $0x2c] sm:$0xf]
      %v2014 = vld [vmem:[%s2001 + $0x30] sm:$0xf]
      %v2015 = vld [vmem:[%s2001 + $0x34] sm:$0xf]
      %v2016 = vld [vmem:[%s2001 + $0x38] sm:$0xf]
      %v2017 = vld [vmem:[%s2001 + $0x3c] sm:$0xf]
      %v2039 = vunpack.c.l.b16 %v1959
      %v2040 = vunpack.c.l.b16 %v1960
      %v2041 = vunpack.c.l.b16 %v1961
      %v2042 = vunpack.c.l.b16 %v1962
      %v2043 = vunpack.c.l.b16 %v1963
      %v2044 = vunpack.c.l.b16 %v1964
      %v2045 = vunpack.c.l.b16 %v1965
      %v2046 = vunpack.c.l.b16 %v1966
      %v2047 = vunpack.c.l.b16 %v1967
      %v2048 = vunpack.c.l.b16 %v1968
      %v2049 = vunpack.c.l.b16 %v1969
      %v2050 = vunpack.c.l.b16 %v1970
      %v2051 = vunpack.c.l.b16 %v1971
      %v2052 = vunpack.c.l.b16 %v1972
      %v2053 = vunpack.c.l.b16 %v1973
      %v2054 = vunpack.c.l.b16 %v1974
      %v2055 = vunpack.c.l.b16 %v1975
      %v2056 = vunpack.c.l.b16 %v1976
      %v2057 = vunpack.c.l.b16 %v1977
      %v2058 = vunpack.c.l.b16 %v1978
      %v2059 = vunpack.c.l.b16 %v1979
      %v2060 = vpack.c.b16 %v2040, %v2039
      %v2061 = vpack.c.b16 %v2042, %v2041
      %v2062 = vpack.c.b16 %v2044, %v2043
      %v2063 = vpack.c.b16 %v2046, %v2045
      %v2064 = vpack.c.b16 %v2048, %v2047
      %v2065 = vpack.c.b16 %v2050, %v2049
      %v2066 = vpack.c.b16 %v2052, %v2051
      %v2067 = vpack.c.b16 %v2054, %v2053
      %v2068 = vpack.c.b16 %v2056, %v2055
      %v2069 = vpack.c.b16 %v2058, %v2057
      %v2070 = vpack.c.b16 %v2059, %v2059
      %v2071 = vrot.slane %v2060, 1
      %v2072 = vrot.slane %v2061, 1
      %v2073 = vsel %vm1134, %v2071, %v2072
      %v2074 = vrot.slane %v2062, 1
      %v2075 = vsel %vm1134, %v2072, %v2074
      %v2076 = vrot.slane %v2063, 1
      %v2077 = vsel %vm1134, %v2074, %v2076
      %v2078 = vrot.slane %v2064, 1
      %v2079 = vsel %vm1134, %v2076, %v2078
      %v2080 = vrot.slane %v2065, 1
      %v2081 = vsel %vm1134, %v2078, %v2080
      %v2082 = vrot.slane %v2066, 1
      %v2083 = vsel %vm1134, %v2080, %v2082
      %v2084 = vrot.slane %v2067, 1
      %v2085 = vsel %vm1134, %v2082, %v2084
      %v2086 = vrot.slane %v2068, 1
      %v2087 = vsel %vm1134, %v2084, %v2086
      %v2088 = vrot.slane %v2069, 1
      %v2089 = vsel %vm1134, %v2086, %v2088
      %v2090 = vrot.slane %v2070, 1
      %v2091 = vsel %vm1134, %v2088, %v2090
      %v2119 = vunpack.c.l.b16 %v2002
      %v2120 = vunpack.c.l.b16 %v2003
      %v2121 = vunpack.c.l.b16 %v2004
      %v2122 = vunpack.c.l.b16 %v2005
      %v2123 = vunpack.c.l.b16 %v2006
      %v2124 = vunpack.c.l.b16 %v2007
      %v2125 = vunpack.c.l.b16 %v2008
      %v2126 = vunpack.c.l.b16 %v2009
      %v2127 = vunpack.c.l.b16 %v2010
      %v2128 = vunpack.c.l.b16 %v2011
      %v2129 = vunpack.c.l.b16 %v2012
      %v2130 = vunpack.c.l.b16 %v2013
      %v2131 = vunpack.c.l.b16 %v2014
      %v2132 = vunpack.c.l.b16 %v2015
      %v2133 = vunpack.c.l.b16 %v2016
      %v2134 = vunpack.c.l.b16 %v2017
      %v2135 = vpack.c.b16 %v2120, %v2119
      %v2136 = vpack.c.b16 %v2122, %v2121
      %v2137 = vpack.c.b16 %v2124, %v2123
      %v2138 = vpack.c.b16 %v2126, %v2125
      %v2139 = vpack.c.b16 %v2128, %v2127
      %v2140 = vpack.c.b16 %v2130, %v2129
      %v2141 = vpack.c.b16 %v2132, %v2131
      %v2142 = vpack.c.b16 %v2134, %v2133
      %2151 = vmatpush.bf16.msra.mxu0 %v2142
      %2152 = vmatpush.bf16.msra.mxu0 %v2141
      %2153 = vmatpush.bf16.msra.mxu0 %v2140
      %2154 = vmatpush.bf16.msra.mxu0 %v2139
      %2155 = vmatpush.bf16.msra.mxu0 %v2138
      %2156 = vmatpush.bf16.msra.mxu0 %v2137
      %2157 = vmatpush.bf16.msra.mxu0 %v2136
      %2158 = vmatpush.bf16.msra.mxu0 %v2135
      %2159 = vmatmul.bf16.gmra.mxu0 %v2073
      %v2160 = vpop.f32.mrf.mxu0
      %v2161 = vadd.f32 0.0, %v2160
      %v2162 = vpop.f32.mrf.mxu0
      %v2163 = vadd.f32 0.0, %v2162
      %2164 = vmatmul.bf16.gmra.mxu0 %v2075
      %v2165 = vpop.f32.mrf.mxu0
      %v2166 = vadd.f32 0.0, %v2165
      %v2167 = vpop.f32.mrf.mxu0
      %v2168 = vadd.f32 0.0, %v2167
      %2169 = vmatmul.bf16.gmra.mxu0 %v2077
      %v2170 = vpop.f32.mrf.mxu0
      %v2171 = vadd.f32 0.0, %v2170
      %v2172 = vpop.f32.mrf.mxu0
      %v2173 = vadd.f32 0.0, %v2172
      %2174 = vmatmul.bf16.gmra.mxu0 %v2079
      %v2175 = vpop.f32.mrf.mxu0
      %v2176 = vadd.f32 0.0, %v2175
      %v2177 = vpop.f32.mrf.mxu0
      %v2178 = vadd.f32 0.0, %v2177
      %2179 = vmatmul.bf16.gmra.mxu0 %v2081
      %v2180 = vpop.f32.mrf.mxu0
      %v2181 = vadd.f32 0.0, %v2180
      %v2182 = vpop.f32.mrf.mxu0
      %v2183 = vadd.f32 0.0, %v2182
      %2184 = vmatmul.bf16.gmra.mxu0 %v2083
      %v2185 = vpop.f32.mrf.mxu0
      %v2186 = vadd.f32 0.0, %v2185
      %v2187 = vpop.f32.mrf.mxu0
      %v2188 = vadd.f32 0.0, %v2187
      %2189 = vmatmul.bf16.gmra.mxu0 %v2085
      %v2190 = vpop.f32.mrf.mxu0
      %v2191 = vadd.f32 0.0, %v2190
      %v2192 = vpop.f32.mrf.mxu0
      %v2193 = vadd.f32 0.0, %v2192
      %2194 = vmatmul.bf16.gmra.mxu0 %v2087
      %v2195 = vpop.f32.mrf.mxu0
      %v2196 = vadd.f32 0.0, %v2195
      %v2197 = vpop.f32.mrf.mxu0
      %v2198 = vadd.f32 0.0, %v2197
      %2199 = vmatmul.bf16.gmra.mxu0 %v2089
      %v2200 = vpop.f32.mrf.mxu0
      %v2201 = vadd.f32 0.0, %v2200
      %v2202 = vpop.f32.mrf.mxu0
      %v2203 = vadd.f32 0.0, %v2202
      %2204 = vmatmul.bf16.gmra.mxu0 %v2091
      %v2205 = vpop.f32.mrf.mxu0
      %v2206 = vadd.f32 0.0, %v2205
      %v2207 = vpop.f32.mrf.mxu0
      %v2208 = vadd.f32 0.0, %v2207
      %2209 = vmatmul.bf16.gmra.mxu0 %v2090
      %v2210 = vpop.f32.mrf.mxu0
      %v2211 = vadd.f32 0.0, %v2210
      %v2212 = vpop.f32.mrf.mxu0
      %2213 = vdwg.mxu0
      %v2214 = vadd.f32 %v1980, %v2161
      %v2215 = vadd.f32 %v1981, %v2163
      %v2216 = vadd.f32 %v1982, %v2166
      %v2217 = vadd.f32 %v1983, %v2168
      %v2218 = vadd.f32 %v1984, %v2171
      %v2219 = vadd.f32 %v1985, %v2173
      %v2220 = vadd.f32 %v1986, %v2176
      %v2221 = vadd.f32 %v1987, %v2178
      %v2222 = vadd.f32 %v1988, %v2181
      %v2223 = vadd.f32 %v1989, %v2183
      %v2224 = vadd.f32 %v1990, %v2186
      %v2225 = vadd.f32 %v1991, %v2188
      %v2226 = vadd.f32 %v1992, %v2191
      %v2227 = vadd.f32 %v1993, %v2193
      %v2228 = vadd.f32 %v1994, %v2196
      %v2229 = vadd.f32 %v1995, %v2198
      %v2230 = vadd.f32 %v1996, %v2201
      %v2231 = vadd.f32 %v1997, %v2203
      %v2232 = vadd.f32 %v1998, %v2206
      %v2233 = vadd.f32 %v1999, %v2208
      %v2234 = vadd.f32 %v2000, %v2211
      %2235 = vst [vmem:[#allocation4] sm:$0xff] %v2214
      %2236 = vst [vmem:[#allocation4 + $0x8] sm:$0xff] %v2215
      %2237 = vst [vmem:[#allocation4 + $0x10] sm:$0xff] %v2216
      %2238 = vst [vmem:[#allocation4 + $0x18] sm:$0xff] %v2217
      %2239 = vst [vmem:[#allocation4 + $0x20] sm:$0xff] %v2218
      %2240 = vst [vmem:[#allocation4 + $0x28] sm:$0xff] %v2219
      %2241 = vst [vmem:[#allocation4 + $0x30] sm:$0xff] %v2220
      %2242 = vst [vmem:[#allocation4 + $0x38] sm:$0xff] %v2221
      %2243 = vst [vmem:[#allocation4 + $0x40] sm:$0xff] %v2222
      %2244 = vst [vmem:[#allocation4 + $0x48] sm:$0xff] %v2223
      %2245 = vst [vmem:[#allocation4 + $0x50] sm:$0xff] %v2224
      %2246 = vst [vmem:[#allocation4 + $0x58] sm:$0xff] %v2225
      %2247 = vst [vmem:[#allocation4 + $0x60] sm:$0xff] %v2226
      %2248 = vst [vmem:[#allocation4 + $0x68] sm:$0xff] %v2227
      %2249 = vst [vmem:[#allocation4 + $0x70] sm:$0xff] %v2228
      %2250 = vst [vmem:[#allocation4 + $0x78] sm:$0xff] %v2229
      %2251 = vst [vmem:[#allocation4 + $0x80] sm:$0xff] %v2230
      %2252 = vst [vmem:[#allocation4 + $0x88] sm:$0xff] %v2231
      %2253 = vst [vmem:[#allocation4 + $0x90] sm:$0xff] %v2232
      %2254 = vst [vmem:[#allocation4 + $0x98] sm:$0xff] %v2233
      %2255 = vst [vmem:[#allocation4 + $0xa0] sm:$0x3] %v2234
      %v2256 = vld [vmem:[#allocation2 + $0x10] sm:$0xf]
      %v2257 = vld [vmem:[#allocation2 + $0x14] sm:$0xf]
      %v2258 = vld [vmem:[#allocation2 + $0x18] sm:$0xf]
      %v2259 = vld [vmem:[#allocation2 + $0x1c] sm:$0xf]
      %v2260 = vld [vmem:[#allocation2 + $0x20] sm:$0xf]
      %v2261 = vld [vmem:[#allocation2 + $0x24] sm:$0xf]
      %v2262 = vld [vmem:[#allocation2 + $0x28] sm:$0xf]
      %v2263 = vld [vmem:[#allocation2 + $0x2c] sm:$0xf]
      %v2264 = vld [vmem:[#allocation2 + $0x30] sm:$0xf]
      %v2265 = vld [vmem:[#allocation2 + $0x34] sm:$0xf]
      %v2266 = vld [vmem:[#allocation2 + $0x38] sm:$0xf]
      %v2267 = vld [vmem:[#allocation2 + $0x3c] sm:$0xf]
      %v2268 = vld [vmem:[#allocation2 + $0x40] sm:$0xf]
      %v2269 = vld [vmem:[#allocation2 + $0x44] sm:$0xf]
      %v2270 = vld [vmem:[#allocation2 + $0x48] sm:$0xf]
      %v2271 = vld [vmem:[#allocation2 + $0x4c] sm:$0xf]
      %v2272 = vld [vmem:[#allocation2 + $0x50] sm:$0xf]
      %v2273 = vld [vmem:[#allocation2 + $0x54] sm:$0xf]
      %v2274 = vld [vmem:[#allocation2 + $0x58] sm:$0xf]
      %v2275 = vld [vmem:[#allocation2 + $0x5c] sm:$0xf]
      %v2276 = vld [vmem:[#allocation2 + $0x60] sm:$0x1]
      %v2277 = vld [vmem:[#allocation4] sm:$0xff]
      %v2278 = vld [vmem:[#allocation4 + $0x8] sm:$0xff]
      %v2279 = vld [vmem:[#allocation4 + $0x10] sm:$0xff]
      %v2280 = vld [vmem:[#allocation4 + $0x18] sm:$0xff]
      %v2281 = vld [vmem:[#allocation4 + $0x20] sm:$0xff]
      %v2282 = vld [vmem:[#allocation4 + $0x28] sm:$0xff]
      %v2283 = vld [vmem:[#allocation4 + $0x30] sm:$0xff]
      %v2284 = vld [vmem:[#allocation4 + $0x38] sm:$0xff]
      %v2285 = vld [vmem:[#allocation4 + $0x40] sm:$0xff]
      %v2286 = vld [vmem:[#allocation4 + $0x48] sm:$0xff]
      %v2287 = vld [vmem:[#allocation4 + $0x50] sm:$0xff]
      %v2288 = vld [vmem:[#allocation4 + $0x58] sm:$0xff]
      %v2289 = vld [vmem:[#allocation4 + $0x60] sm:$0xff]
      %v2290 = vld [vmem:[#allocation4 + $0x68] sm:$0xff]
      %v2291 = vld [vmem:[#allocation4 + $0x70] sm:$0xff]
      %v2292 = vld [vmem:[#allocation4 + $0x78] sm:$0xff]
      %v2293 = vld [vmem:[#allocation4 + $0x80] sm:$0xff]
      %v2294 = vld [vmem:[#allocation4 + $0x88] sm:$0xff]
      %v2295 = vld [vmem:[#allocation4 + $0x90] sm:$0xff]
      %v2296 = vld [vmem:[#allocation4 + $0x98] sm:$0xff]
      %v2297 = vld [vmem:[#allocation4 + $0xa0] sm:$0x3]
      %s2298 = scalar_lea.vmem %s1, 384
      %v2299 = vld [vmem:[%s2298] sm:$0xf]
      %v2300 = vld [vmem:[%s2298 + $0x4] sm:$0xf]
      %v2301 = vld [vmem:[%s2298 + $0x8] sm:$0xf]
      %v2302 = vld [vmem:[%s2298 + $0xc] sm:$0xf]
      %v2303 = vld [vmem:[%s2298 + $0x10] sm:$0xf]
      %v2304 = vld [vmem:[%s2298 + $0x14] sm:$0xf]
      %v2305 = vld [vmem:[%s2298 + $0x18] sm:$0xf]
      %v2306 = vld [vmem:[%s2298 + $0x1c] sm:$0xf]
      %v2307 = vld [vmem:[%s2298 + $0x20] sm:$0xf]
      %v2308 = vld [vmem:[%s2298 + $0x24] sm:$0xf]
      %v2309 = vld [vmem:[%s2298 + $0x28] sm:$0xf]
      %v2310 = vld [vmem:[%s2298 + $0x2c] sm:$0xf]
      %v2311 = vld [vmem:[%s2298 + $0x30] sm:$0xf]
      %v2312 = vld [vmem:[%s2298 + $0x34] sm:$0xf]
      %v2313 = vld [vmem:[%s2298 + $0x38] sm:$0xf]
      %v2314 = vld [vmem:[%s2298 + $0x3c] sm:$0xf]
      %v2336 = vunpack.c.l.b16 %v2256
      %v2337 = vunpack.c.l.b16 %v2257
      %v2338 = vunpack.c.l.b16 %v2258
      %v2339 = vunpack.c.l.b16 %v2259
      %v2340 = vunpack.c.l.b16 %v2260
      %v2341 = vunpack.c.l.b16 %v2261
      %v2342 = vunpack.c.l.b16 %v2262
      %v2343 = vunpack.c.l.b16 %v2263
      %v2344 = vunpack.c.l.b16 %v2264
      %v2345 = vunpack.c.l.b16 %v2265
      %v2346 = vunpack.c.l.b16 %v2266
      %v2347 = vunpack.c.l.b16 %v2267
      %v2348 = vunpack.c.l.b16 %v2268
      %v2349 = vunpack.c.l.b16 %v2269
      %v2350 = vunpack.c.l.b16 %v2270
      %v2351 = vunpack.c.l.b16 %v2271
      %v2352 = vunpack.c.l.b16 %v2272
      %v2353 = vunpack.c.l.b16 %v2273
      %v2354 = vunpack.c.l.b16 %v2274
      %v2355 = vunpack.c.l.b16 %v2275
      %v2356 = vunpack.c.l.b16 %v2276
      %v2357 = vpack.c.b16 %v2337, %v2336
      %v2358 = vpack.c.b16 %v2339, %v2338
      %v2359 = vpack.c.b16 %v2341, %v2340
      %v2360 = vpack.c.b16 %v2343, %v2342
      %v2361 = vpack.c.b16 %v2345, %v2344
      %v2362 = vpack.c.b16 %v2347, %v2346
      %v2363 = vpack.c.b16 %v2349, %v2348
      %v2364 = vpack.c.b16 %v2351, %v2350
      %v2365 = vpack.c.b16 %v2353, %v2352
      %v2366 = vpack.c.b16 %v2355, %v2354
      %v2367 = vpack.c.b16 %v2356, %v2356
      %v2395 = vunpack.c.l.b16 %v2299
      %v2396 = vunpack.c.l.b16 %v2300
      %v2397 = vunpack.c.l.b16 %v2301
      %v2398 = vunpack.c.l.b16 %v2302
      %v2399 = vunpack.c.l.b16 %v2303
      %v2400 = vunpack.c.l.b16 %v2304
      %v2401 = vunpack.c.l.b16 %v2305
      %v2402 = vunpack.c.l.b16 %v2306
      %v2403 = vunpack.c.l.b16 %v2307
      %v2404 = vunpack.c.l.b16 %v2308
      %v2405 = vunpack.c.l.b16 %v2309
      %v2406 = vunpack.c.l.b16 %v2310
      %v2407 = vunpack.c.l.b16 %v2311
      %v2408 = vunpack.c.l.b16 %v2312
      %v2409 = vunpack.c.l.b16 %v2313
      %v2410 = vunpack.c.l.b16 %v2314
      %v2411 = vpack.c.b16 %v2396, %v2395
      %v2412 = vpack.c.b16 %v2398, %v2397
      %v2413 = vpack.c.b16 %v2400, %v2399
      %v2414 = vpack.c.b16 %v2402, %v2401
      %v2415 = vpack.c.b16 %v2404, %v2403
      %v2416 = vpack.c.b16 %v2406, %v2405
      %v2417 = vpack.c.b16 %v2408, %v2407
      %v2418 = vpack.c.b16 %v2410, %v2409
      %2427 = vmatpush.bf16.msra.mxu0 %v2418
      %2428 = vmatpush.bf16.msra.mxu0 %v2417
      %2429 = vmatpush.bf16.msra.mxu0 %v2416
      %2430 = vmatpush.bf16.msra.mxu0 %v2415
      %2431 = vmatpush.bf16.msra.mxu0 %v2414
      %2432 = vmatpush.bf16.msra.mxu0 %v2413
      %2433 = vmatpush.bf16.msra.mxu0 %v2412
      %2434 = vmatpush.bf16.msra.mxu0 %v2411
      %2435 = vmatmul.bf16.gmra.mxu0 %v2357
      %v2436 = vpop.f32.mrf.mxu0
      %v2437 = vadd.f32 0.0, %v2436
      %v2438 = vpop.f32.mrf.mxu0
      %v2439 = vadd.f32 0.0, %v2438
      %2440 = vmatmul.bf16.gmra.mxu0 %v2358
      %v2441 = vpop.f32.mrf.mxu0
      %v2442 = vadd.f32 0.0, %v2441
      %v2443 = vpop.f32.mrf.mxu0
      %v2444 = vadd.f32 0.0, %v2443
      %2445 = vmatmul.bf16.gmra.mxu0 %v2359
      %v2446 = vpop.f32.mrf.mxu0
      %v2447 = vadd.f32 0.0, %v2446
      %v2448 = vpop.f32.mrf.mxu0
      %v2449 = vadd.f32 0.0, %v2448
      %2450 = vmatmul.bf16.gmra.mxu0 %v2360
      %v2451 = vpop.f32.mrf.mxu0
      %v2452 = vadd.f32 0.0, %v2451
      %v2453 = vpop.f32.mrf.mxu0
      %v2454 = vadd.f32 0.0, %v2453
      %2455 = vmatmul.bf16.gmra.mxu0 %v2361
      %v2456 = vpop.f32.mrf.mxu0
      %v2457 = vadd.f32 0.0, %v2456
      %v2458 = vpop.f32.mrf.mxu0
      %v2459 = vadd.f32 0.0, %v2458
      %2460 = vmatmul.bf16.gmra.mxu0 %v2362
      %v2461 = vpop.f32.mrf.mxu0
      %v2462 = vadd.f32 0.0, %v2461
      %v2463 = vpop.f32.mrf.mxu0
      %v2464 = vadd.f32 0.0, %v2463
      %2465 = vmatmul.bf16.gmra.mxu0 %v2363
      %v2466 = vpop.f32.mrf.mxu0
      %v2467 = vadd.f32 0.0, %v2466
      %v2468 = vpop.f32.mrf.mxu0
      %v2469 = vadd.f32 0.0, %v2468
      %2470 = vmatmul.bf16.gmra.mxu0 %v2364
      %v2471 = vpop.f32.mrf.mxu0
      %v2472 = vadd.f32 0.0, %v2471
      %v2473 = vpop.f32.mrf.mxu0
      %v2474 = vadd.f32 0.0, %v2473
      %2475 = vmatmul.bf16.gmra.mxu0 %v2365
      %v2476 = vpop.f32.mrf.mxu0
      %v2477 = vadd.f32 0.0, %v2476
      %v2478 = vpop.f32.mrf.mxu0
      %v2479 = vadd.f32 0.0, %v2478
      %2480 = vmatmul.bf16.gmra.mxu0 %v2366
      %v2481 = vpop.f32.mrf.mxu0
      %v2482 = vadd.f32 0.0, %v2481
      %v2483 = vpop.f32.mrf.mxu0
      %v2484 = vadd.f32 0.0, %v2483
      %2485 = vmatmul.bf16.gmra.mxu0 %v2367
      %v2486 = vpop.f32.mrf.mxu0
      %v2487 = vadd.f32 0.0, %v2486
      %v2488 = vpop.f32.mrf.mxu0
      %2489 = vdwg.mxu0
      %v2490 = vadd.f32 %v2277, %v2437
      %v2491 = vadd.f32 %v2278, %v2439
      %v2492 = vadd.f32 %v2279, %v2442
      %v2493 = vadd.f32 %v2280, %v2444
      %v2494 = vadd.f32 %v2281, %v2447
      %v2495 = vadd.f32 %v2282, %v2449
      %v2496 = vadd.f32 %v2283, %v2452
      %v2497 = vadd.f32 %v2284, %v2454
      %v2498 = vadd.f32 %v2285, %v2457
      %v2499 = vadd.f32 %v2286, %v2459
      %v2500 = vadd.f32 %v2287, %v2462
      %v2501 = vadd.f32 %v2288, %v2464
      %v2502 = vadd.f32 %v2289, %v2467
      %v2503 = vadd.f32 %v2290, %v2469
      %v2504 = vadd.f32 %v2291, %v2472
      %v2505 = vadd.f32 %v2292, %v2474
      %v2506 = vadd.f32 %v2293, %v2477
      %v2507 = vadd.f32 %v2294, %v2479
      %v2508 = vadd.f32 %v2295, %v2482
      %v2509 = vadd.f32 %v2296, %v2484
      %v2510 = vadd.f32 %v2297, %v2487
      %2511 = vst [vmem:[#allocation4] sm:$0xff] %v2490
      %2512 = vst [vmem:[#allocation4 + $0x8] sm:$0xff] %v2491
      %2513 = vst [vmem:[#allocation4 + $0x10] sm:$0xff] %v2492
      %2514 = vst [vmem:[#allocation4 + $0x18] sm:$0xff] %v2493
      %2515 = vst [vmem:[#allocation4 + $0x20] sm:$0xff] %v2494
      %2516 = vst [vmem:[#allocation4 + $0x28] sm:$0xff] %v2495
      %2517 = vst [vmem:[#allocation4 + $0x30] sm:$0xff] %v2496
      %2518 = vst [vmem:[#allocation4 + $0x38] sm:$0xff] %v2497
      %2519 = vst [vmem:[#allocation4 + $0x40] sm:$0xff] %v2498
      %2520 = vst [vmem:[#allocation4 + $0x48] sm:$0xff] %v2499
      %2521 = vst [vmem:[#allocation4 + $0x50] sm:$0xff] %v2500
      %2522 = vst [vmem:[#allocation4 + $0x58] sm:$0xff] %v2501
      %2523 = vst [vmem:[#allocation4 + $0x60] sm:$0xff] %v2502
      %2524 = vst [vmem:[#allocation4 + $0x68] sm:$0xff] %v2503
      %2525 = vst [vmem:[#allocation4 + $0x70] sm:$0xff] %v2504
      %2526 = vst [vmem:[#allocation4 + $0x78] sm:$0xff] %v2505
      %2527 = vst [vmem:[#allocation4 + $0x80] sm:$0xff] %v2506
      %2528 = vst [vmem:[#allocation4 + $0x88] sm:$0xff] %v2507
      %2529 = vst [vmem:[#allocation4 + $0x90] sm:$0xff] %v2508
      %2530 = vst [vmem:[#allocation4 + $0x98] sm:$0xff] %v2509
      %2531 = vst [vmem:[#allocation4 + $0xa0] sm:$0x3] %v2510
      %v2532 = vld [vmem:[#allocation2 + $0x10] sm:$0xf]
      %v2533 = vld [vmem:[#allocation2 + $0x14] sm:$0xf]
      %v2534 = vld [vmem:[#allocation2 + $0x18] sm:$0xf]
      %v2535 = vld [vmem:[#allocation2 + $0x1c] sm:$0xf]
      %v2536 = vld [vmem:[#allocation2 + $0x20] sm:$0xf]
      %v2537 = vld [vmem:[#allocation2 + $0x24] sm:$0xf]
      %v2538 = vld [vmem:[#allocation2 + $0x28] sm:$0xf]
      %v2539 = vld [vmem:[#allocation2 + $0x2c] sm:$0xf]
      %v2540 = vld [vmem:[#allocation2 + $0x30] sm:$0xf]
      %v2541 = vld [vmem:[#allocation2 + $0x34] sm:$0xf]
      %v2542 = vld [vmem:[#allocation2 + $0x38] sm:$0xf]
      %v2543 = vld [vmem:[#allocation2 + $0x3c] sm:$0xf]
      %v2544 = vld [vmem:[#allocation2 + $0x40] sm:$0xf]
      %v2545 = vld [vmem:[#allocation2 + $0x44] sm:$0xf]
      %v2546 = vld [vmem:[#allocation2 + $0x48] sm:$0xf]
      %v2547 = vld [vmem:[#allocation2 + $0x4c] sm:$0xf]
      %v2548 = vld [vmem:[#allocation2 + $0x50] sm:$0xf]
      %v2549 = vld [vmem:[#allocation2 + $0x54] sm:$0xf]
      %v2550 = vld [vmem:[#allocation2 + $0x58] sm:$0xf]
      %v2551 = vld [vmem:[#allocation2 + $0x5c] sm:$0xf]
      %v2552 = vld [vmem:[#allocation2 + $0x60] sm:$0x3]
      %v2553 = vld [vmem:[#allocation4] sm:$0xff]
      %v2554 = vld [vmem:[#allocation4 + $0x8] sm:$0xff]
      %v2555 = vld [vmem:[#allocation4 + $0x10] sm:$0xff]
      %v2556 = vld [vmem:[#allocation4 + $0x18] sm:$0xff]
      %v2557 = vld [vmem:[#allocation4 + $0x20] sm:$0xff]
      %v2558 = vld [vmem:[#allocation4 + $0x28] sm:$0xff]
      %v2559 = vld [vmem:[#allocation4 + $0x30] sm:$0xff]
      %v2560 = vld [vmem:[#allocation4 + $0x38] sm:$0xff]
      %v2561 = vld [vmem:[#allocation4 + $0x40] sm:$0xff]
      %v2562 = vld [vmem:[#allocation4 + $0x48] sm:$0xff]
      %v2563 = vld [vmem:[#allocation4 + $0x50] sm:$0xff]
      %v2564 = vld [vmem:[#allocation4 + $0x58] sm:$0xff]
      %v2565 = vld [vmem:[#allocation4 + $0x60] sm:$0xff]
      %v2566 = vld [vmem:[#allocation4 + $0x68] sm:$0xff]
      %v2567 = vld [vmem:[#allocation4 + $0x70] sm:$0xff]
      %v2568 = vld [vmem:[#allocation4 + $0x78] sm:$0xff]
      %v2569 = vld [vmem:[#allocation4 + $0x80] sm:$0xff]
      %v2570 = vld [vmem:[#allocation4 + $0x88] sm:$0xff]
      %v2571 = vld [vmem:[#allocation4 + $0x90] sm:$0xff]
      %v2572 = vld [vmem:[#allocation4 + $0x98] sm:$0xff]
      %v2573 = vld [vmem:[#allocation4 + $0xa0] sm:$0x3]
      %s2574 = scalar_lea.vmem %s1, 448
      %v2575 = vld [vmem:[%s2574] sm:$0xf]
      %v2576 = vld [vmem:[%s2574 + $0x4] sm:$0xf]
      %v2577 = vld [vmem:[%s2574 + $0x8] sm:$0xf]
      %v2578 = vld [vmem:[%s2574 + $0xc] sm:$0xf]
      %v2579 = vld [vmem:[%s2574 + $0x10] sm:$0xf]
      %v2580 = vld [vmem:[%s2574 + $0x14] sm:$0xf]
      %v2581 = vld [vmem:[%s2574 + $0x18] sm:$0xf]
      %v2582 = vld [vmem:[%s2574 + $0x1c] sm:$0xf]
      %v2583 = vld [vmem:[%s2574 + $0x20] sm:$0xf]
      %v2584 = vld [vmem:[%s2574 + $0x24] sm:$0xf]
      %v2585 = vld [vmem:[%s2574 + $0x28] sm:$0xf]
      %v2586 = vld [vmem:[%s2574 + $0x2c] sm:$0xf]
      %v2587 = vld [vmem:[%s2574 + $0x30] sm:$0xf]
      %v2588 = vld [vmem:[%s2574 + $0x34] sm:$0xf]
      %v2589 = vld [vmem:[%s2574 + $0x38] sm:$0xf]
      %v2590 = vld [vmem:[%s2574 + $0x3c] sm:$0xf]
      %v2612 = vunpack.c.l.b16 %v2532
      %v2613 = vunpack.c.l.b16 %v2533
      %v2614 = vunpack.c.l.b16 %v2534
      %v2615 = vunpack.c.l.b16 %v2535
      %v2616 = vunpack.c.l.b16 %v2536
      %v2617 = vunpack.c.l.b16 %v2537
      %v2618 = vunpack.c.l.b16 %v2538
      %v2619 = vunpack.c.l.b16 %v2539
      %v2620 = vunpack.c.l.b16 %v2540
      %v2621 = vunpack.c.l.b16 %v2541
      %v2622 = vunpack.c.l.b16 %v2542
      %v2623 = vunpack.c.l.b16 %v2543
      %v2624 = vunpack.c.l.b16 %v2544
      %v2625 = vunpack.c.l.b16 %v2545
      %v2626 = vunpack.c.l.b16 %v2546
      %v2627 = vunpack.c.l.b16 %v2547
      %v2628 = vunpack.c.l.b16 %v2548
      %v2629 = vunpack.c.l.b16 %v2549
      %v2630 = vunpack.c.l.b16 %v2550
      %v2631 = vunpack.c.l.b16 %v2551
      %v2632 = vunpack.c.l.b16 %v2552
      %v2633 = vpack.c.b16 %v2613, %v2612
      %v2634 = vpack.c.b16 %v2615, %v2614
      %v2635 = vpack.c.b16 %v2617, %v2616
      %v2636 = vpack.c.b16 %v2619, %v2618
      %v2637 = vpack.c.b16 %v2621, %v2620
      %v2638 = vpack.c.b16 %v2623, %v2622
      %v2639 = vpack.c.b16 %v2625, %v2624
      %v2640 = vpack.c.b16 %v2627, %v2626
      %v2641 = vpack.c.b16 %v2629, %v2628
      %v2642 = vpack.c.b16 %v2631, %v2630
      %v2643 = vpack.c.b16 %v2632, %v2632
      %v2645 = vshrl.u32 %v2633, 16
      %v2647 = vshll.u32 %v2633, 16
      %v2649 = vrot.slane %v2647, 1
      %v2650 = vor.u32 %v2645, %v2649
      %v2652 = vshll.u32 %v2634, 16
      %v2654 = vrot.slane %v2652, 1
      %v2655 = vsel %vm770, %v2650, %v2654
      %v2656 = vshrl.u32 %v2634, 16
      %v2658 = vor.u32 %v2656, %v2654
      %v2660 = vshll.u32 %v2635, 16
      %v2662 = vrot.slane %v2660, 1
      %v2663 = vsel %vm770, %v2658, %v2662
      %v2664 = vshrl.u32 %v2635, 16
      %v2666 = vor.u32 %v2664, %v2662
      %v2668 = vshll.u32 %v2636, 16
      %v2670 = vrot.slane %v2668, 1
      %v2671 = vsel %vm770, %v2666, %v2670
      %v2672 = vshrl.u32 %v2636, 16
      %v2674 = vor.u32 %v2672, %v2670
      %v2676 = vshll.u32 %v2637, 16
      %v2678 = vrot.slane %v2676, 1
      %v2679 = vsel %vm770, %v2674, %v2678
      %v2680 = vshrl.u32 %v2637, 16
      %v2682 = vor.u32 %v2680, %v2678
      %v2684 = vshll.u32 %v2638, 16
      %v2686 = vrot.slane %v2684, 1
      %v2687 = vsel %vm770, %v2682, %v2686
      %v2688 = vshrl.u32 %v2638, 16
      %v2690 = vor.u32 %v2688, %v2686
      %v2692 = vshll.u32 %v2639, 16
      %v2694 = vrot.slane %v2692, 1
      %v2695 = vsel %vm770, %v2690, %v2694
      %v2696 = vshrl.u32 %v2639, 16
      %v2698 = vor.u32 %v2696, %v2694
      %v2700 = vshll.u32 %v2640, 16
      %v2702 = vrot.slane %v2700, 1
      %v2703 = vsel %vm770, %v2698, %v2702
      %v2704 = vshrl.u32 %v2640, 16
      %v2706 = vor.u32 %v2704, %v2702
      %v2708 = vshll.u32 %v2641, 16
      %v2710 = vrot.slane %v2708, 1
      %v2711 = vsel %vm770, %v2706, %v2710
      %v2712 = vshrl.u32 %v2641, 16
      %v2714 = vor.u32 %v2712, %v2710
      %v2716 = vshll.u32 %v2642, 16
      %v2718 = vrot.slane %v2716, 1
      %v2719 = vsel %vm770, %v2714, %v2718
      %v2720 = vshrl.u32 %v2642, 16
      %v2722 = vor.u32 %v2720, %v2718
      %v2724 = vshll.u32 %v2643, 16
      %v2726 = vrot.slane %v2724, 1
      %v2727 = vsel %vm770, %v2722, %v2726
      %v2728 = vshrl.u32 %v2643, 16
      %v2730 = vor.u32 %v2728, %v2726
      %v2758 = vunpack.c.l.b16 %v2575
      %v2759 = vunpack.c.l.b16 %v2576
      %v2760 = vunpack.c.l.b16 %v2577
      %v2761 = vunpack.c.l.b16 %v2578
      %v2762 = vunpack.c.l.b16 %v2579
      %v2763 = vunpack.c.l.b16 %v2580
      %v2764 = vunpack.c.l.b16 %v2581
      %v2765 = vunpack.c.l.b16 %v2582
      %v2766 = vunpack.c.l.b16 %v2583
      %v2767 = vunpack.c.l.b16 %v2584
      %v2768 = vunpack.c.l.b16 %v2585
      %v2769 = vunpack.c.l.b16 %v2586
      %v2770 = vunpack.c.l.b16 %v2587
      %v2771 = vunpack.c.l.b16 %v2588
      %v2772 = vunpack.c.l.b16 %v2589
      %v2773 = vunpack.c.l.b16 %v2590
      %v2774 = vpack.c.b16 %v2759, %v2758
      %v2775 = vpack.c.b16 %v2761, %v2760
      %v2776 = vpack.c.b16 %v2763, %v2762
      %v2777 = vpack.c.b16 %v2765, %v2764
      %v2778 = vpack.c.b16 %v2767, %v2766
      %v2779 = vpack.c.b16 %v2769, %v2768
      %v2780 = vpack.c.b16 %v2771, %v2770
      %v2781 = vpack.c.b16 %v2773, %v2772
      %2790 = vmatpush.bf16.msra.mxu0 %v2781
      %2791 = vmatpush.bf16.msra.mxu0 %v2780
      %2792 = vmatpush.bf16.msra.mxu0 %v2779
      %2793 = vmatpush.bf16.msra.mxu0 %v2778
      %2794 = vmatpush.bf16.msra.mxu0 %v2777
      %2795 = vmatpush.bf16.msra.mxu0 %v2776
      %2796 = vmatpush.bf16.msra.mxu0 %v2775
      %2797 = vmatpush.bf16.msra.mxu0 %v2774
      %2798 = vmatmul.bf16.gmra.mxu0 %v2655
      %v2799 = vpop.f32.mrf.mxu0
      %v2800 = vadd.f32 0.0, %v2799
      %v2801 = vpop.f32.mrf.mxu0
      %v2802 = vadd.f32 0.0, %v2801
      %2803 = vmatmul.bf16.gmra.mxu0 %v2663
      %v2804 = vpop.f32.mrf.mxu0
      %v2805 = vadd.f32 0.0, %v2804
      %v2806 = vpop.f32.mrf.mxu0
      %v2807 = vadd.f32 0.0, %v2806
      %2808 = vmatmul.bf16.gmra.mxu0 %v2671
      %v2809 = vpop.f32.mrf.mxu0
      %v2810 = vadd.f32 0.0, %v2809
      %v2811 = vpop.f32.mrf.mxu0
      %v2812 = vadd.f32 0.0, %v2811
      %2813 = vmatmul.bf16.gmra.mxu0 %v2679
      %v2814 = vpop.f32.mrf.mxu0
      %v2815 = vadd.f32 0.0, %v2814
      %v2816 = vpop.f32.mrf.mxu0
      %v2817 = vadd.f32 0.0, %v2816
      %2818 = vmatmul.bf16.gmra.mxu0 %v2687
      %v2819 = vpop.f32.mrf.mxu0
      %v2820 = vadd.f32 0.0, %v2819
      %v2821 = vpop.f32.mrf.mxu0
      %v2822 = vadd.f32 0.0, %v2821
      %2823 = vmatmul.bf16.gmra.mxu0 %v2695
      %v2824 = vpop.f32.mrf.mxu0
      %v2825 = vadd.f32 0.0, %v2824
      %v2826 = vpop.f32.mrf.mxu0
      %v2827 = vadd.f32 0.0, %v2826
      %2828 = vmatmul.bf16.gmra.mxu0 %v2703
      %v2829 = vpop.f32.mrf.mxu0
      %v2830 = vadd.f32 0.0, %v2829
      %v2831 = vpop.f32.mrf.mxu0
      %v2832 = vadd.f32 0.0, %v2831
      %2833 = vmatmul.bf16.gmra.mxu0 %v2711
      %v2834 = vpop.f32.mrf.mxu0
      %v2835 = vadd.f32 0.0, %v2834
      %v2836 = vpop.f32.mrf.mxu0
      %v2837 = vadd.f32 0.0, %v2836
      %2838 = vmatmul.bf16.gmra.mxu0 %v2719
      %v2839 = vpop.f32.mrf.mxu0
      %v2840 = vadd.f32 0.0, %v2839
      %v2841 = vpop.f32.mrf.mxu0
      %v2842 = vadd.f32 0.0, %v2841
      %2843 = vmatmul.bf16.gmra.mxu0 %v2727
      %v2844 = vpop.f32.mrf.mxu0
      %v2845 = vadd.f32 0.0, %v2844
      %v2846 = vpop.f32.mrf.mxu0
      %v2847 = vadd.f32 0.0, %v2846
      %2848 = vmatmul.bf16.gmra.mxu0 %v2730
      %v2849 = vpop.f32.mrf.mxu0
      %v2850 = vadd.f32 0.0, %v2849
      %v2851 = vpop.f32.mrf.mxu0
      %2852 = vdwg.mxu0
      %v2853 = vadd.f32 %v2553, %v2800
      %v2854 = vadd.f32 %v2554, %v2802
      %v2855 = vadd.f32 %v2555, %v2805
      %v2856 = vadd.f32 %v2556, %v2807
      %v2857 = vadd.f32 %v2557, %v2810
      %v2858 = vadd.f32 %v2558, %v2812
      %v2859 = vadd.f32 %v2559, %v2815
      %v2860 = vadd.f32 %v2560, %v2817
      %v2861 = vadd.f32 %v2561, %v2820
      %v2862 = vadd.f32 %v2562, %v2822
      %v2863 = vadd.f32 %v2563, %v2825
      %v2864 = vadd.f32 %v2564, %v2827
      %v2865 = vadd.f32 %v2565, %v2830
      %v2866 = vadd.f32 %v2566, %v2832
      %v2867 = vadd.f32 %v2567, %v2835
      %v2868 = vadd.f32 %v2568, %v2837
      %v2869 = vadd.f32 %v2569, %v2840
      %v2870 = vadd.f32 %v2570, %v2842
      %v2871 = vadd.f32 %v2571, %v2845
      %v2872 = vadd.f32 %v2572, %v2847
      %v2873 = vadd.f32 %v2573, %v2850
      %2874 = vst [vmem:[#allocation4] sm:$0xff] %v2853
      %2875 = vst [vmem:[#allocation4 + $0x8] sm:$0xff] %v2854
      %2876 = vst [vmem:[#allocation4 + $0x10] sm:$0xff] %v2855
      %2877 = vst [vmem:[#allocation4 + $0x18] sm:$0xff] %v2856
      %2878 = vst [vmem:[#allocation4 + $0x20] sm:$0xff] %v2857
      %2879 = vst [vmem:[#allocation4 + $0x28] sm:$0xff] %v2858
      %2880 = vst [vmem:[#allocation4 + $0x30] sm:$0xff] %v2859
      %2881 = vst [vmem:[#allocation4 + $0x38] sm:$0xff] %v2860
      %2882 = vst [vmem:[#allocation4 + $0x40] sm:$0xff] %v2861
      %2883 = vst [vmem:[#allocation4 + $0x48] sm:$0xff] %v2862
      %2884 = vst [vmem:[#allocation4 + $0x50] sm:$0xff] %v2863
      %2885 = vst [vmem:[#allocation4 + $0x58] sm:$0xff] %v2864
      %2886 = vst [vmem:[#allocation4 + $0x60] sm:$0xff] %v2865
      %2887 = vst [vmem:[#allocation4 + $0x68] sm:$0xff] %v2866
      %2888 = vst [vmem:[#allocation4 + $0x70] sm:$0xff] %v2867
      %2889 = vst [vmem:[#allocation4 + $0x78] sm:$0xff] %v2868
      %2890 = vst [vmem:[#allocation4 + $0x80] sm:$0xff] %v2869
      %2891 = vst [vmem:[#allocation4 + $0x88] sm:$0xff] %v2870
      %2892 = vst [vmem:[#allocation4 + $0x90] sm:$0xff] %v2871
      %2893 = vst [vmem:[#allocation4 + $0x98] sm:$0xff] %v2872
      %2894 = vst [vmem:[#allocation4 + $0xa0] sm:$0x3] %v2873
      %v2895 = vld [vmem:[#allocation2 + $0x10] sm:$0xe]
      %v2896 = vld [vmem:[#allocation2 + $0x14] sm:$0xf]
      %v2897 = vld [vmem:[#allocation2 + $0x18] sm:$0xf]
      %v2898 = vld [vmem:[#allocation2 + $0x1c] sm:$0xf]
      %v2899 = vld [vmem:[#allocation2 + $0x20] sm:$0xf]
      %v2900 = vld [vmem:[#allocation2 + $0x24] sm:$0xf]
      %v2901 = vld [vmem:[#allocation2 + $0x28] sm:$0xf]
      %v2902 = vld [vmem:[#allocation2 + $0x2c] sm:$0xf]
      %v2903 = vld [vmem:[#allocation2 + $0x30] sm:$0xf]
      %v2904 = vld [vmem:[#allocation2 + $0x34] sm:$0xf]
      %v2905 = vld [vmem:[#allocation2 + $0x38] sm:$0xf]
      %v2906 = vld [vmem:[#allocation2 + $0x3c] sm:$0xf]
      %v2907 = vld [vmem:[#allocation2 + $0x40] sm:$0xf]
      %v2908 = vld [vmem:[#allocation2 + $0x44] sm:$0xf]
      %v2909 = vld [vmem:[#allocation2 + $0x48] sm:$0xf]
      %v2910 = vld [vmem:[#allocation2 + $0x4c] sm:$0xf]
      %v2911 = vld [vmem:[#allocation2 + $0x50] sm:$0xf]
      %v2912 = vld [vmem:[#allocation2 + $0x54] sm:$0xf]
      %v2913 = vld [vmem:[#allocation2 + $0x58] sm:$0xf]
      %v2914 = vld [vmem:[#allocation2 + $0x5c] sm:$0xf]
      %v2915 = vld [vmem:[#allocation2 + $0x60] sm:$0x3]
      %v2916 = vld [vmem:[#allocation4] sm:$0xff]
      %v2917 = vld [vmem:[#allocation4 + $0x8] sm:$0xff]
      %v2918 = vld [vmem:[#allocation4 + $0x10] sm:$0xff]
      %v2919 = vld [vmem:[#allocation4 + $0x18] sm:$0xff]
      %v2920 = vld [vmem:[#allocation4 + $0x20] sm:$0xff]
      %v2921 = vld [vmem:[#allocation4 + $0x28] sm:$0xff]
      %v2922 = vld [vmem:[#allocation4 + $0x30] sm:$0xff]
      %v2923 = vld [vmem:[#allocation4 + $0x38] sm:$0xff]
      %v2924 = vld [vmem:[#allocation4 + $0x40] sm:$0xff]
      %v2925 = vld [vmem:[#allocation4 + $0x48] sm:$0xff]
      %v2926 = vld [vmem:[#allocation4 + $0x50] sm:$0xff]
      %v2927 = vld [vmem:[#allocation4 + $0x58] sm:$0xff]
      %v2928 = vld [vmem:[#allocation4 + $0x60] sm:$0xff]
      %v2929 = vld [vmem:[#allocation4 + $0x68] sm:$0xff]
      %v2930 = vld [vmem:[#allocation4 + $0x70] sm:$0xff]
      %v2931 = vld [vmem:[#allocation4 + $0x78] sm:$0xff]
      %v2932 = vld [vmem:[#allocation4 + $0x80] sm:$0xff]
      %v2933 = vld [vmem:[#allocation4 + $0x88] sm:$0xff]
      %v2934 = vld [vmem:[#allocation4 + $0x90] sm:$0xff]
      %v2935 = vld [vmem:[#allocation4 + $0x98] sm:$0xff]
      %v2936 = vld [vmem:[#allocation4 + $0xa0] sm:$0x3]
      %s2937 = scalar_lea.vmem %s1, 512
      %v2938 = vld [vmem:[%s2937] sm:$0xf]
      %v2939 = vld [vmem:[%s2937 + $0x4] sm:$0xf]
      %v2940 = vld [vmem:[%s2937 + $0x8] sm:$0xf]
      %v2941 = vld [vmem:[%s2937 + $0xc] sm:$0xf]
      %v2942 = vld [vmem:[%s2937 + $0x10] sm:$0xf]
      %v2943 = vld [vmem:[%s2937 + $0x14] sm:$0xf]
      %v2944 = vld [vmem:[%s2937 + $0x18] sm:$0xf]
      %v2945 = vld [vmem:[%s2937 + $0x1c] sm:$0xf]
      %v2946 = vld [vmem:[%s2937 + $0x20] sm:$0xf]
      %v2947 = vld [vmem:[%s2937 + $0x24] sm:$0xf]
      %v2948 = vld [vmem:[%s2937 + $0x28] sm:$0xf]
      %v2949 = vld [vmem:[%s2937 + $0x2c] sm:$0xf]
      %v2950 = vld [vmem:[%s2937 + $0x30] sm:$0xf]
      %v2951 = vld [vmem:[%s2937 + $0x34] sm:$0xf]
      %v2952 = vld [vmem:[%s2937 + $0x38] sm:$0xf]
      %v2953 = vld [vmem:[%s2937 + $0x3c] sm:$0xf]
      %v2975 = vunpack.c.l.b16 %v2895
      %v2976 = vunpack.c.l.b16 %v2896
      %v2977 = vunpack.c.l.b16 %v2897
      %v2978 = vunpack.c.l.b16 %v2898
      %v2979 = vunpack.c.l.b16 %v2899
      %v2980 = vunpack.c.l.b16 %v2900
      %v2981 = vunpack.c.l.b16 %v2901
      %v2982 = vunpack.c.l.b16 %v2902
      %v2983 = vunpack.c.l.b16 %v2903
      %v2984 = vunpack.c.l.b16 %v2904
      %v2985 = vunpack.c.l.b16 %v2905
      %v2986 = vunpack.c.l.b16 %v2906
      %v2987 = vunpack.c.l.b16 %v2907
      %v2988 = vunpack.c.l.b16 %v2908
      %v2989 = vunpack.c.l.b16 %v2909
      %v2990 = vunpack.c.l.b16 %v2910
      %v2991 = vunpack.c.l.b16 %v2911
      %v2992 = vunpack.c.l.b16 %v2912
      %v2993 = vunpack.c.l.b16 %v2913
      %v2994 = vunpack.c.l.b16 %v2914
      %v2995 = vunpack.c.l.b16 %v2915
      %v2996 = vpack.c.b16 %v2976, %v2975
      %v2997 = vpack.c.b16 %v2978, %v2977
      %v2998 = vpack.c.b16 %v2980, %v2979
      %v2999 = vpack.c.b16 %v2982, %v2981
      %v3000 = vpack.c.b16 %v2984, %v2983
      %v3001 = vpack.c.b16 %v2986, %v2985
      %v3002 = vpack.c.b16 %v2988, %v2987
      %v3003 = vpack.c.b16 %v2990, %v2989
      %v3004 = vpack.c.b16 %v2992, %v2991
      %v3005 = vpack.c.b16 %v2994, %v2993
      %v3006 = vpack.c.b16 %v2995, %v2995
      %v3007 = vrot.slane %v2996, 1
      %v3008 = vrot.slane %v2997, 1
      %v3009 = vsel %vm1134, %v3007, %v3008
      %v3010 = vrot.slane %v2998, 1
      %v3011 = vsel %vm1134, %v3008, %v3010
      %v3012 = vrot.slane %v2999, 1
      %v3013 = vsel %vm1134, %v3010, %v3012
      %v3014 = vrot.slane %v3000, 1
      %v3015 = vsel %vm1134, %v3012, %v3014
      %v3016 = vrot.slane %v3001, 1
      %v3017 = vsel %vm1134, %v3014, %v3016
      %v3018 = vrot.slane %v3002, 1
      %v3019 = vsel %vm1134, %v3016, %v3018
      %v3020 = vrot.slane %v3003, 1
      %v3021 = vsel %vm1134, %v3018, %v3020
      %v3022 = vrot.slane %v3004, 1
      %v3023 = vsel %vm1134, %v3020, %v3022
      %v3024 = vrot.slane %v3005, 1
      %v3025 = vsel %vm1134, %v3022, %v3024
      %v3026 = vrot.slane %v3006, 1
      %v3027 = vsel %vm1134, %v3024, %v3026
      %v3055 = vunpack.c.l.b16 %v2938
      %v3056 = vunpack.c.l.b16 %v2939
      %v3057 = vunpack.c.l.b16 %v2940
      %v3058 = vunpack.c.l.b16 %v2941
      %v3059 = vunpack.c.l.b16 %v2942
      %v3060 = vunpack.c.l.b16 %v2943
      %v3061 = vunpack.c.l.b16 %v2944
      %v3062 = vunpack.c.l.b16 %v2945
      %v3063 = vunpack.c.l.b16 %v2946
      %v3064 = vunpack.c.l.b16 %v2947
      %v3065 = vunpack.c.l.b16 %v2948
      %v3066 = vunpack.c.l.b16 %v2949
      %v3067 = vunpack.c.l.b16 %v2950
      %v3068 = vunpack.c.l.b16 %v2951
      %v3069 = vunpack.c.l.b16 %v2952
      %v3070 = vunpack.c.l.b16 %v2953
      %v3071 = vpack.c.b16 %v3056, %v3055
      %v3072 = vpack.c.b16 %v3058, %v3057
      %v3073 = vpack.c.b16 %v3060, %v3059
      %v3074 = vpack.c.b16 %v3062, %v3061
      %v3075 = vpack.c.b16 %v3064, %v3063
      %v3076 = vpack.c.b16 %v3066, %v3065
      %v3077 = vpack.c.b16 %v3068, %v3067
      %v3078 = vpack.c.b16 %v3070, %v3069
      %3087 = vmatpush.bf16.msra.mxu0 %v3078
      %3088 = vmatpush.bf16.msra.mxu0 %v3077
      %3089 = vmatpush.bf16.msra.mxu0 %v3076
      %3090 = vmatpush.bf16.msra.mxu0 %v3075
      %3091 = vmatpush.bf16.msra.mxu0 %v3074
      %3092 = vmatpush.bf16.msra.mxu0 %v3073
      %3093 = vmatpush.bf16.msra.mxu0 %v3072
      %3094 = vmatpush.bf16.msra.mxu0 %v3071
      %3095 = vmatmul.bf16.gmra.mxu0 %v3009
      %v3096 = vpop.f32.mrf.mxu0
      %v3097 = vadd.f32 0.0, %v3096
      %v3098 = vpop.f32.mrf.mxu0
      %v3099 = vadd.f32 0.0, %v3098
      %3100 = vmatmul.bf16.gmra.mxu0 %v3011
      %v3101 = vpop.f32.mrf.mxu0
      %v3102 = vadd.f32 0.0, %v3101
      %v3103 = vpop.f32.mrf.mxu0
      %v3104 = vadd.f32 0.0, %v3103
      %3105 = vmatmul.bf16.gmra.mxu0 %v3013
      %v3106 = vpop.f32.mrf.mxu0
      %v3107 = vadd.f32 0.0, %v3106
      %v3108 = vpop.f32.mrf.mxu0
      %v3109 = vadd.f32 0.0, %v3108
      %3110 = vmatmul.bf16.gmra.mxu0 %v3015
      %v3111 = vpop.f32.mrf.mxu0
      %v3112 = vadd.f32 0.0, %v3111
      %v3113 = vpop.f32.mrf.mxu0
      %v3114 = vadd.f32 0.0, %v3113
      %3115 = vmatmul.bf16.gmra.mxu0 %v3017
      %v3116 = vpop.f32.mrf.mxu0
      %v3117 = vadd.f32 0.0, %v3116
      %v3118 = vpop.f32.mrf.mxu0
      %v3119 = vadd.f32 0.0, %v3118
      %3120 = vmatmul.bf16.gmra.mxu0 %v3019
      %v3121 = vpop.f32.mrf.mxu0
      %v3122 = vadd.f32 0.0, %v3121
      %v3123 = vpop.f32.mrf.mxu0
      %v3124 = vadd.f32 0.0, %v3123
      %3125 = vmatmul.bf16.gmra.mxu0 %v3021
      %v3126 = vpop.f32.mrf.mxu0
      %v3127 = vadd.f32 0.0, %v3126
      %v3128 = vpop.f32.mrf.mxu0
      %v3129 = vadd.f32 0.0, %v3128
      %3130 = vmatmul.bf16.gmra.mxu0 %v3023
      %v3131 = vpop.f32.mrf.mxu0
      %v3132 = vadd.f32 0.0, %v3131
      %v3133 = vpop.f32.mrf.mxu0
      %v3134 = vadd.f32 0.0, %v3133
      %3135 = vmatmul.bf16.gmra.mxu0 %v3025
      %v3136 = vpop.f32.mrf.mxu0
      %v3137 = vadd.f32 0.0, %v3136
      %v3138 = vpop.f32.mrf.mxu0
      %v3139 = vadd.f32 0.0, %v3138
      %3140 = vmatmul.bf16.gmra.mxu0 %v3027
      %v3141 = vpop.f32.mrf.mxu0
      %v3142 = vadd.f32 0.0, %v3141
      %v3143 = vpop.f32.mrf.mxu0
      %v3144 = vadd.f32 0.0, %v3143
      %3145 = vmatmul.bf16.gmra.mxu0 %v3026
      %v3146 = vpop.f32.mrf.mxu0
      %v3147 = vadd.f32 0.0, %v3146
      %v3148 = vpop.f32.mrf.mxu0
      %3149 = vdwg.mxu0
      %v3150 = vadd.f32 %v2916, %v3097
      %v3151 = vadd.f32 %v2917, %v3099
      %v3152 = vadd.f32 %v2918, %v3102
      %v3153 = vadd.f32 %v2919, %v3104
      %v3154 = vadd.f32 %v2920, %v3107
      %v3155 = vadd.f32 %v2921, %v3109
      %v3156 = vadd.f32 %v2922, %v3112
      %v3157 = vadd.f32 %v2923, %v3114
      %v3158 = vadd.f32 %v2924, %v3117
      %v3159 = vadd.f32 %v2925, %v3119
      %v3160 = vadd.f32 %v2926, %v3122
      %v3161 = vadd.f32 %v2927, %v3124
      %v3162 = vadd.f32 %v2928, %v3127
      %v3163 = vadd.f32 %v2929, %v3129
      %v3164 = vadd.f32 %v2930, %v3132
      %v3165 = vadd.f32 %v2931, %v3134
      %v3166 = vadd.f32 %v2932, %v3137
      %v3167 = vadd.f32 %v2933, %v3139
      %v3168 = vadd.f32 %v2934, %v3142
      %v3169 = vadd.f32 %v2935, %v3144
      %v3170 = vadd.f32 %v2936, %v3147
      %3171 = vst [vmem:[#allocation4] sm:$0xff] %v3150
      %3172 = vst [vmem:[#allocation4 + $0x8] sm:$0xff] %v3151
      %3173 = vst [vmem:[#allocation4 + $0x10] sm:$0xff] %v3152
      %3174 = vst [vmem:[#allocation4 + $0x18] sm:$0xff] %v3153
      %3175 = vst [vmem:[#allocation4 + $0x20] sm:$0xff] %v3154
      %3176 = vst [vmem:[#allocation4 + $0x28] sm:$0xff] %v3155
      %3177 = vst [vmem:[#allocation4 + $0x30] sm:$0xff] %v3156
      %3178 = vst [vmem:[#allocation4 + $0x38] sm:$0xff] %v3157
      %3179 = vst [vmem:[#allocation4 + $0x40] sm:$0xff] %v3158
      %3180 = vst [vmem:[#allocation4 + $0x48] sm:$0xff] %v3159
      %3181 = vst [vmem:[#allocation4 + $0x50] sm:$0xff] %v3160
      %3182 = vst [vmem:[#allocation4 + $0x58] sm:$0xff] %v3161
      %3183 = vst [vmem:[#allocation4 + $0x60] sm:$0xff] %v3162
      %3184 = vst [vmem:[#allocation4 + $0x68] sm:$0xff] %v3163
      %3185 = vst [vmem:[#allocation4 + $0x70] sm:$0xff] %v3164
      %3186 = vst [vmem:[#allocation4 + $0x78] sm:$0xff] %v3165
      %3187 = vst [vmem:[#allocation4 + $0x80] sm:$0xff] %v3166
      %3188 = vst [vmem:[#allocation4 + $0x88] sm:$0xff] %v3167
      %3189 = vst [vmem:[#allocation4 + $0x90] sm:$0xff] %v3168
      %3190 = vst [vmem:[#allocation4 + $0x98] sm:$0xff] %v3169
      %3191 = vst [vmem:[#allocation4 + $0xa0] sm:$0x3] %v3170
      %v3192 = vld [vmem:[#allocation4] sm:$0xff]
      %v3193 = vld [vmem:[#allocation4 + $0x8] sm:$0xff]
      %v3194 = vld [vmem:[#allocation4 + $0x10] sm:$0xff]
      %v3195 = vld [vmem:[#allocation4 + $0x18] sm:$0xff]
      %v3196 = vld [vmem:[#allocation4 + $0x20] sm:$0xff]
      %v3197 = vld [vmem:[#allocation4 + $0x28] sm:$0xff]
      %v3198 = vld [vmem:[#allocation4 + $0x30] sm:$0xff]
      %v3199 = vld [vmem:[#allocation4 + $0x38] sm:$0xff]
      %v3200 = vld [vmem:[#allocation4 + $0x40] sm:$0xff]
      %v3201 = vld [vmem:[#allocation4 + $0x48] sm:$0xff]
      %v3202 = vld [vmem:[#allocation4 + $0x50] sm:$0xff]
      %v3203 = vld [vmem:[#allocation4 + $0x58] sm:$0xff]
      %v3204 = vld [vmem:[#allocation4 + $0x60] sm:$0xff]
      %v3205 = vld [vmem:[#allocation4 + $0x68] sm:$0xff]
      %v3206 = vld [vmem:[#allocation4 + $0x70] sm:$0xff]
      %v3207 = vld [vmem:[#allocation4 + $0x78] sm:$0xff]
      %v3208 = vld [vmem:[#allocation4 + $0x80] sm:$0xff]
      %v3209 = vld [vmem:[#allocation4 + $0x88] sm:$0xff]
      %v3210 = vld [vmem:[#allocation4 + $0x90] sm:$0xff]
      %v3211 = vld [vmem:[#allocation4 + $0x98] sm:$0xff]
      %v3212 = vld [vmem:[#allocation4 + $0xa0] sm:$0x3]
      %v3213 = vld [vmem:[%s2] sm:$0x1]
      %v3215 = vperm.slane %v3213, 0
      %v3217 = vmul.f32 %v3192, %v3215
      %v3218 = vmul.f32 %v3193, %v3215
      %v3219 = vmul.f32 %v3194, %v3215
      %v3220 = vmul.f32 %v3195, %v3215
      %v3221 = vmul.f32 %v3196, %v3215
      %v3222 = vmul.f32 %v3197, %v3215
      %v3223 = vmul.f32 %v3198, %v3215
      %v3224 = vmul.f32 %v3199, %v3215
      %v3225 = vmul.f32 %v3200, %v3215
      %v3226 = vmul.f32 %v3201, %v3215
      %v3227 = vmul.f32 %v3202, %v3215
      %v3228 = vmul.f32 %v3203, %v3215
      %v3229 = vmul.f32 %v3204, %v3215
      %v3230 = vmul.f32 %v3205, %v3215
      %v3231 = vmul.f32 %v3206, %v3215
      %v3232 = vmul.f32 %v3207, %v3215
      %v3233 = vmul.f32 %v3208, %v3215
      %v3234 = vmul.f32 %v3209, %v3215
      %v3235 = vmul.f32 %v3210, %v3215
      %v3236 = vmul.f32 %v3211, %v3215
      %v3237 = vmul.f32 %v3212, %v3215
      %v3238 = vld [vmem:[%s3] sm:$0x1]
      %v3240 = vperm.slane %v3238, 0
      %v3242 = vadd.f32 %v3217, %v3240
      %v3243 = vadd.f32 %v3218, %v3240
      %v3244 = vadd.f32 %v3219, %v3240
      %v3245 = vadd.f32 %v3220, %v3240
      %v3246 = vadd.f32 %v3221, %v3240
      %v3247 = vadd.f32 %v3222, %v3240
      %v3248 = vadd.f32 %v3223, %v3240
      %v3249 = vadd.f32 %v3224, %v3240
      %v3250 = vadd.f32 %v3225, %v3240
      %v3251 = vadd.f32 %v3226, %v3240
      %v3252 = vadd.f32 %v3227, %v3240
      %v3253 = vadd.f32 %v3228, %v3240
      %v3254 = vadd.f32 %v3229, %v3240
      %v3255 = vadd.f32 %v3230, %v3240
      %v3256 = vadd.f32 %v3231, %v3240
      %v3257 = vadd.f32 %v3232, %v3240
      %v3258 = vadd.f32 %v3233, %v3240
      %v3259 = vadd.f32 %v3234, %v3240
      %v3260 = vadd.f32 %v3235, %v3240
      %v3261 = vadd.f32 %v3236, %v3240
      %v3262 = vadd.f32 %v3237, %v3240
      %v3263 = vmax.f32 %v3242, 0.0
      %v3264 = vmax.f32 %v3243, 0.0
      %v3265 = vmax.f32 %v3244, 0.0
      %v3266 = vmax.f32 %v3245, 0.0
      %v3267 = vmax.f32 %v3246, 0.0
      %v3268 = vmax.f32 %v3247, 0.0
      %v3269 = vmax.f32 %v3248, 0.0
      %v3270 = vmax.f32 %v3249, 0.0
      %v3271 = vmax.f32 %v3250, 0.0
      %v3272 = vmax.f32 %v3251, 0.0
      %v3273 = vmax.f32 %v3252, 0.0
      %v3274 = vmax.f32 %v3253, 0.0
      %v3275 = vmax.f32 %v3254, 0.0
      %v3276 = vmax.f32 %v3255, 0.0
      %v3277 = vmax.f32 %v3256, 0.0
      %v3278 = vmax.f32 %v3257, 0.0
      %v3279 = vmax.f32 %v3258, 0.0
      %v3280 = vmax.f32 %v3259, 0.0
      %v3281 = vmax.f32 %v3260, 0.0
      %v3282 = vmax.f32 %v3261, 0.0
      %v3283 = vmax.f32 %v3262, 0.0
      %v3284 = vpack.c.bf16 %v3263, %v3263
      %v3285 = vpack.c.bf16 %v3264, %v3264
      %v3286 = vpack.c.bf16 %v3265, %v3265
      %v3287 = vpack.c.bf16 %v3266, %v3266
      %v3288 = vpack.c.bf16 %v3267, %v3267
      %v3289 = vpack.c.bf16 %v3268, %v3268
      %v3290 = vpack.c.bf16 %v3269, %v3269
      %v3291 = vpack.c.bf16 %v3270, %v3270
      %v3292 = vpack.c.bf16 %v3271, %v3271
      %v3293 = vpack.c.bf16 %v3272, %v3272
      %v3294 = vpack.c.bf16 %v3273, %v3273
      %v3295 = vpack.c.bf16 %v3274, %v3274
      %v3296 = vpack.c.bf16 %v3275, %v3275
      %v3297 = vpack.c.bf16 %v3276, %v3276
      %v3298 = vpack.c.bf16 %v3277, %v3277
      %v3299 = vpack.c.bf16 %v3278, %v3278
      %v3300 = vpack.c.bf16 %v3279, %v3279
      %v3301 = vpack.c.bf16 %v3280, %v3280
      %v3302 = vpack.c.bf16 %v3281, %v3281
      %v3303 = vpack.c.bf16 %v3282, %v3282
      %v3304 = vpack.c.bf16 %v3283, %v3283
      %3305 = vst [vmem:[#allocation3] sm:$0xf] %v3284
      %3306 = vst [vmem:[#allocation3 + $0x4] sm:$0xf] %v3285
      %3307 = vst [vmem:[#allocation3 + $0x8] sm:$0xf] %v3286
      %3308 = vst [vmem:[#allocation3 + $0xc] sm:$0xf] %v3287
      %3309 = vst [vmem:[#allocation3 + $0x10] sm:$0xf] %v3288
      %3310 = vst [vmem:[#allocation3 + $0x14] sm:$0xf] %v3289
      %3311 = vst [vmem:[#allocation3 + $0x18] sm:$0xf] %v3290
      %3312 = vst [vmem:[#allocation3 + $0x1c] sm:$0xf] %v3291
      %3313 = vst [vmem:[#allocation3 + $0x20] sm:$0xf] %v3292
      %3314 = vst [vmem:[#allocation3 + $0x24] sm:$0xf] %v3293
      %3315 = vst [vmem:[#allocation3 + $0x28] sm:$0xf] %v3294
      %3316 = vst [vmem:[#allocation3 + $0x2c] sm:$0xf] %v3295
      %3317 = vst [vmem:[#allocation3 + $0x30] sm:$0xf] %v3296
      %3318 = vst [vmem:[#allocation3 + $0x34] sm:$0xf] %v3297
      %3319 = vst [vmem:[#allocation3 + $0x38] sm:$0xf] %v3298
      %3320 = vst [vmem:[#allocation3 + $0x3c] sm:$0xf] %v3299
      %3321 = vst [vmem:[#allocation3 + $0x40] sm:$0xf] %v3300
      %3322 = vst [vmem:[#allocation3 + $0x44] sm:$0xf] %v3301
      %3323 = vst [vmem:[#allocation3 + $0x48] sm:$0xf] %v3302
      %3324 = vst [vmem:[#allocation3 + $0x4c] sm:$0xf] %v3303
      %3325 = vst [vmem:[#allocation3 + $0x50] sm:$0x1] %v3304
      %3326 = vst [vmem:[#allocation4] sm:$0xff] 0.0
      %3327 = vst [vmem:[#allocation4 + $0x8] sm:$0xff] 0.0
      %3328 = vst [vmem:[#allocation4 + $0x10] sm:$0xff] 0.0
      %3329 = vst [vmem:[#allocation4 + $0x18] sm:$0xff] 0.0
      %3330 = vst [vmem:[#allocation4 + $0x20] sm:$0xff] 0.0
      %3331 = vst [vmem:[#allocation4 + $0x28] sm:$0xff] 0.0
      %3332 = vst [vmem:[#allocation4 + $0x30] sm:$0xff] 0.0
      %3333 = vst [vmem:[#allocation4 + $0x38] sm:$0xff] 0.0
      %3334 = vst [vmem:[#allocation4 + $0x40] sm:$0xff] 0.0
      %3335 = vst [vmem:[#allocation4 + $0x48] sm:$0xff] 0.0
      %3336 = vst [vmem:[#allocation4 + $0x50] sm:$0xff] 0.0
      %3337 = vst [vmem:[#allocation4 + $0x58] sm:$0xff] 0.0
      %3338 = vst [vmem:[#allocation4 + $0x60] sm:$0xff] 0.0
      %3339 = vst [vmem:[#allocation4 + $0x68] sm:$0xff] 0.0
      %3340 = vst [vmem:[#allocation4 + $0x70] sm:$0xff] 0.0
      %3341 = vst [vmem:[#allocation4 + $0x78] sm:$0xff] 0.0
      %v3342 = vld [vmem:[#allocation3] sm:$0xf]
      %v3343 = vld [vmem:[#allocation3 + $0x4] sm:$0xf]
      %v3344 = vld [vmem:[#allocation3 + $0x8] sm:$0xf]
      %v3345 = vld [vmem:[#allocation3 + $0xc] sm:$0xf]
      %v3346 = vld [vmem:[#allocation3 + $0x10] sm:$0xf]
      %v3347 = vld [vmem:[#allocation3 + $0x14] sm:$0xf]
      %v3348 = vld [vmem:[#allocation3 + $0x18] sm:$0xf]
      %v3349 = vld [vmem:[#allocation3 + $0x1c] sm:$0xf]
      %v3350 = vld [vmem:[#allocation3 + $0x20] sm:$0xf]
      %v3351 = vld [vmem:[#allocation3 + $0x24] sm:$0xf]
      %v3352 = vld [vmem:[#allocation3 + $0x28] sm:$0xf]
      %v3353 = vld [vmem:[#allocation3 + $0x2c] sm:$0xf]
      %v3354 = vld [vmem:[#allocation3 + $0x30] sm:$0xf]
      %v3355 = vld [vmem:[#allocation3 + $0x34] sm:$0xf]
      %v3356 = vld [vmem:[#allocation3 + $0x38] sm:$0xf]
      %v3357 = vld [vmem:[#allocation3 + $0x3c] sm:$0xf]
      %v3358 = vld [vmem:[#allocation4] sm:$0xff]
      %v3359 = vld [vmem:[#allocation4 + $0x8] sm:$0xff]
      %v3360 = vld [vmem:[#allocation4 + $0x10] sm:$0xff]
      %v3361 = vld [vmem:[#allocation4 + $0x18] sm:$0xff]
      %v3362 = vld [vmem:[#allocation4 + $0x20] sm:$0xff]
      %v3363 = vld [vmem:[#allocation4 + $0x28] sm:$0xff]
      %v3364 = vld [vmem:[#allocation4 + $0x30] sm:$0xff]
      %v3365 = vld [vmem:[#allocation4 + $0x38] sm:$0xff]
      %v3366 = vld [vmem:[#allocation4 + $0x40] sm:$0xff]
      %v3367 = vld [vmem:[#allocation4 + $0x48] sm:$0xff]
      %v3368 = vld [vmem:[#allocation4 + $0x50] sm:$0xff]
      %v3369 = vld [vmem:[#allocation4 + $0x58] sm:$0xff]
      %v3370 = vld [vmem:[#allocation4 + $0x60] sm:$0xff]
      %v3371 = vld [vmem:[#allocation4 + $0x68] sm:$0xff]
      %v3372 = vld [vmem:[#allocation4 + $0x70] sm:$0xff]
      %v3373 = vld [vmem:[#allocation4 + $0x78] sm:$0xff]
      %v3374 = vld [vmem:[%s4] sm:$0xf]
      %v3375 = vld [vmem:[%s4 + $0x4] sm:$0xf]
      %v3376 = vld [vmem:[%s4 + $0x8] sm:$0xf]
      %v3377 = vld [vmem:[%s4 + $0xc] sm:$0xf]
      %v3378 = vld [vmem:[%s4 + $0x10] sm:$0xf]
      %v3379 = vld [vmem:[%s4 + $0x14] sm:$0xf]
      %v3380 = vld [vmem:[%s4 + $0x18] sm:$0xf]
      %v3381 = vld [vmem:[%s4 + $0x1c] sm:$0xf]
      %v3382 = vld [vmem:[%s4 + $0x20] sm:$0xf]
      %v3383 = vld [vmem:[%s4 + $0x24] sm:$0xf]
      %v3384 = vld [vmem:[%s4 + $0x28] sm:$0xf]
      %v3385 = vld [vmem:[%s4 + $0x2c] sm:$0xf]
      %v3386 = vld [vmem:[%s4 + $0x30] sm:$0xf]
      %v3387 = vld [vmem:[%s4 + $0x34] sm:$0xf]
      %v3388 = vld [vmem:[%s4 + $0x38] sm:$0xf]
      %v3389 = vld [vmem:[%s4 + $0x3c] sm:$0xf]
      %v3406 = vunpack.c.l.b16 %v3342
      %v3407 = vunpack.c.l.b16 %v3343
      %v3408 = vunpack.c.l.b16 %v3344
      %v3409 = vunpack.c.l.b16 %v3345
      %v3410 = vunpack.c.l.b16 %v3346
      %v3411 = vunpack.c.l.b16 %v3347
      %v3412 = vunpack.c.l.b16 %v3348
      %v3413 = vunpack.c.l.b16 %v3349
      %v3414 = vunpack.c.l.b16 %v3350
      %v3415 = vunpack.c.l.b16 %v3351
      %v3416 = vunpack.c.l.b16 %v3352
      %v3417 = vunpack.c.l.b16 %v3353
      %v3418 = vunpack.c.l.b16 %v3354
      %v3419 = vunpack.c.l.b16 %v3355
      %v3420 = vunpack.c.l.b16 %v3356
      %v3421 = vunpack.c.l.b16 %v3357
      %v3422 = vpack.c.b16 %v3407, %v3406
      %v3423 = vpack.c.b16 %v3409, %v3408
      %v3424 = vpack.c.b16 %v3411, %v3410
      %v3425 = vpack.c.b16 %v3413, %v3412
      %v3426 = vpack.c.b16 %v3415, %v3414
      %v3427 = vpack.c.b16 %v3417, %v3416
      %v3428 = vpack.c.b16 %v3419, %v3418
      %v3429 = vpack.c.b16 %v3421, %v3420
      %v3454 = vunpack.c.l.b16 %v3374
      %v3455 = vunpack.c.l.b16 %v3375
      %v3456 = vunpack.c.l.b16 %v3376
      %v3457 = vunpack.c.l.b16 %v3377
      %v3458 = vunpack.c.l.b16 %v3378
      %v3459 = vunpack.c.l.b16 %v3379
      %v3460 = vunpack.c.l.b16 %v3380
      %v3461 = vunpack.c.l.b16 %v3381
      %v3462 = vunpack.c.l.b16 %v3382
      %v3463 = vunpack.c.l.b16 %v3383
      %v3464 = vunpack.c.l.b16 %v3384
      %v3465 = vunpack.c.l.b16 %v3385
      %v3466 = vunpack.c.l.b16 %v3386
      %v3467 = vunpack.c.l.b16 %v3387
      %v3468 = vunpack.c.l.b16 %v3388
      %v3469 = vunpack.c.l.b16 %v3389
      %v3470 = vpack.c.b16 %v3455, %v3454
      %v3471 = vpack.c.b16 %v3457, %v3456
      %v3472 = vpack.c.b16 %v3459, %v3458
      %v3473 = vpack.c.b16 %v3461, %v3460
      %v3474 = vpack.c.b16 %v3463, %v3462
      %v3475 = vpack.c.b16 %v3465, %v3464
      %v3476 = vpack.c.b16 %v3467, %v3466
      %v3477 = vpack.c.b16 %v3469, %v3468
      %3486 = vmatpush.bf16.msra.mxu0 %v3477
      %3487 = vmatpush.bf16.msra.mxu0 %v3476
      %3488 = vmatpush.bf16.msra.mxu0 %v3475
      %3489 = vmatpush.bf16.msra.mxu0 %v3474
      %3490 = vmatpush.bf16.msra.mxu0 %v3473
      %3491 = vmatpush.bf16.msra.mxu0 %v3472
      %3492 = vmatpush.bf16.msra.mxu0 %v3471
      %3493 = vmatpush.bf16.msra.mxu0 %v3470
      %3494 = vmatmul.bf16.gmra.mxu0 %v3422
      %v3495 = vpop.f32.mrf.mxu0
      %v3496 = vadd.f32 0.0, %v3495
      %v3497 = vpop.f32.mrf.mxu0
      %v3498 = vadd.f32 0.0, %v3497
      %3499 = vmatmul.bf16.gmra.mxu0 %v3423
      %v3500 = vpop.f32.mrf.mxu0
      %v3501 = vadd.f32 0.0, %v3500
      %v3502 = vpop.f32.mrf.mxu0
      %v3503 = vadd.f32 0.0, %v3502
      %3504 = vmatmul.bf16.gmra.mxu0 %v3424
      %v3505 = vpop.f32.mrf.mxu0
      %v3506 = vadd.f32 0.0, %v3505
      %v3507 = vpop.f32.mrf.mxu0
      %v3508 = vadd.f32 0.0, %v3507
      %3509 = vmatmul.bf16.gmra.mxu0 %v3425
      %v3510 = vpop.f32.mrf.mxu0
      %v3511 = vadd.f32 0.0, %v3510
      %v3512 = vpop.f32.mrf.mxu0
      %v3513 = vadd.f32 0.0, %v3512
      %3514 = vmatmul.bf16.gmra.mxu0 %v3426
      %v3515 = vpop.f32.mrf.mxu0
      %v3516 = vadd.f32 0.0, %v3515
      %v3517 = vpop.f32.mrf.mxu0
      %v3518 = vadd.f32 0.0, %v3517
      %3519 = vmatmul.bf16.gmra.mxu0 %v3427
      %v3520 = vpop.f32.mrf.mxu0
      %v3521 = vadd.f32 0.0, %v3520
      %v3522 = vpop.f32.mrf.mxu0
      %v3523 = vadd.f32 0.0, %v3522
      %3524 = vmatmul.bf16.gmra.mxu0 %v3428
      %v3525 = vpop.f32.mrf.mxu0
      %v3526 = vadd.f32 0.0, %v3525
      %v3527 = vpop.f32.mrf.mxu0
      %v3528 = vadd.f32 0.0, %v3527
      %3529 = vmatmul.bf16.gmra.mxu0 %v3429
      %v3530 = vpop.f32.mrf.mxu0
      %v3531 = vadd.f32 0.0, %v3530
      %v3532 = vpop.f32.mrf.mxu0
      %v3533 = vadd.f32 0.0, %v3532
      %3534 = vdwg.mxu0
      %v3535 = vadd.f32 %v3358, %v3496
      %v3536 = vadd.f32 %v3359, %v3498
      %v3537 = vadd.f32 %v3360, %v3501
      %v3538 = vadd.f32 %v3361, %v3503
      %v3539 = vadd.f32 %v3362, %v3506
      %v3540 = vadd.f32 %v3363, %v3508
      %v3541 = vadd.f32 %v3364, %v3511
      %v3542 = vadd.f32 %v3365, %v3513
      %v3543 = vadd.f32 %v3366, %v3516
      %v3544 = vadd.f32 %v3367, %v3518
      %v3545 = vadd.f32 %v3368, %v3521
      %v3546 = vadd.f32 %v3369, %v3523
      %v3547 = vadd.f32 %v3370, %v3526
      %v3548 = vadd.f32 %v3371, %v3528
      %v3549 = vadd.f32 %v3372, %v3531
      %v3550 = vadd.f32 %v3373, %v3533
      %3551 = vst [vmem:[#allocation4] sm:$0xff] %v3535
      %3552 = vst [vmem:[#allocation4 + $0x8] sm:$0xff] %v3536
      %3553 = vst [vmem:[#allocation4 + $0x10] sm:$0xff] %v3537
      %3554 = vst [vmem:[#allocation4 + $0x18] sm:$0xff] %v3538
      %3555 = vst [vmem:[#allocation4 + $0x20] sm:$0xff] %v3539
      %3556 = vst [vmem:[#allocation4 + $0x28] sm:$0xff] %v3540
      %3557 = vst [vmem:[#allocation4 + $0x30] sm:$0xff] %v3541
      %3558 = vst [vmem:[#allocation4 + $0x38] sm:$0xff] %v3542
      %3559 = vst [vmem:[#allocation4 + $0x40] sm:$0xff] %v3543
      %3560 = vst [vmem:[#allocation4 + $0x48] sm:$0xff] %v3544
      %3561 = vst [vmem:[#allocation4 + $0x50] sm:$0xff] %v3545
      %3562 = vst [vmem:[#allocation4 + $0x58] sm:$0xff] %v3546
      %3563 = vst [vmem:[#allocation4 + $0x60] sm:$0xff] %v3547
      %3564 = vst [vmem:[#allocation4 + $0x68] sm:$0xff] %v3548
      %3565 = vst [vmem:[#allocation4 + $0x70] sm:$0xff] %v3549
      %3566 = vst [vmem:[#allocation4 + $0x78] sm:$0xff] %v3550
      %v3567 = vld [vmem:[#allocation3] sm:$0xf]
      %v3568 = vld [vmem:[#allocation3 + $0x4] sm:$0xf]
      %v3569 = vld [vmem:[#allocation3 + $0x8] sm:$0xf]
      %v3570 = vld [vmem:[#allocation3 + $0xc] sm:$0xf]
      %v3571 = vld [vmem:[#allocation3 + $0x10] sm:$0xf]
      %v3572 = vld [vmem:[#allocation3 + $0x14] sm:$0xf]
      %v3573 = vld [vmem:[#allocation3 + $0x18] sm:$0xf]
      %v3574 = vld [vmem:[#allocation3 + $0x1c] sm:$0xf]
      %v3575 = vld [vmem:[#allocation3 + $0x20] sm:$0xf]
      %v3576 = vld [vmem:[#allocation3 + $0x24] sm:$0xf]
      %v3577 = vld [vmem:[#allocation3 + $0x28] sm:$0xf]
      %v3578 = vld [vmem:[#allocation3 + $0x2c] sm:$0xf]
      %v3579 = vld [vmem:[#allocation3 + $0x30] sm:$0xf]
      %v3580 = vld [vmem:[#allocation3 + $0x34] sm:$0xf]
      %v3581 = vld [vmem:[#allocation3 + $0x38] sm:$0xf]
      %v3582 = vld [vmem:[#allocation3 + $0x3c] sm:$0xf]
      %v3583 = vld [vmem:[#allocation3 + $0x40] sm:$0x1]
      %v3584 = vld [vmem:[#allocation4] sm:$0xff]
      %v3585 = vld [vmem:[#allocation4 + $0x8] sm:$0xff]
      %v3586 = vld [vmem:[#allocation4 + $0x10] sm:$0xff]
      %v3587 = vld [vmem:[#allocation4 + $0x18] sm:$0xff]
      %v3588 = vld [vmem:[#allocation4 + $0x20] sm:$0xff]
      %v3589 = vld [vmem:[#allocation4 + $0x28] sm:$0xff]
      %v3590 = vld [vmem:[#allocation4 + $0x30] sm:$0xff]
      %v3591 = vld [vmem:[#allocation4 + $0x38] sm:$0xff]
      %v3592 = vld [vmem:[#allocation4 + $0x40] sm:$0xff]
      %v3593 = vld [vmem:[#allocation4 + $0x48] sm:$0xff]
      %v3594 = vld [vmem:[#allocation4 + $0x50] sm:$0xff]
      %v3595 = vld [vmem:[#allocation4 + $0x58] sm:$0xff]
      %v3596 = vld [vmem:[#allocation4 + $0x60] sm:$0xff]
      %v3597 = vld [vmem:[#allocation4 + $0x68] sm:$0xff]
      %v3598 = vld [vmem:[#allocation4 + $0x70] sm:$0xff]
      %v3599 = vld [vmem:[#allocation4 + $0x78] sm:$0xff]
      %s3600 = scalar_lea.vmem %s4, 64
      %v3601 = vld [vmem:[%s3600] sm:$0xf]
      %v3602 = vld [vmem:[%s3600 + $0x4] sm:$0xf]
      %v3603 = vld [vmem:[%s3600 + $0x8] sm:$0xf]
      %v3604 = vld [vmem:[%s3600 + $0xc] sm:$0xf]
      %v3605 = vld [vmem:[%s3600 + $0x10] sm:$0xf]
      %v3606 = vld [vmem:[%s3600 + $0x14] sm:$0xf]
      %v3607 = vld [vmem:[%s3600 + $0x18] sm:$0xf]
      %v3608 = vld [vmem:[%s3600 + $0x1c] sm:$0xf]
      %v3609 = vld [vmem:[%s3600 + $0x20] sm:$0xf]
      %v3610 = vld [vmem:[%s3600 + $0x24] sm:$0xf]
      %v3611 = vld [vmem:[%s3600 + $0x28] sm:$0xf]
      %v3612 = vld [vmem:[%s3600 + $0x2c] sm:$0xf]
      %v3613 = vld [vmem:[%s3600 + $0x30] sm:$0xf]
      %v3614 = vld [vmem:[%s3600 + $0x34] sm:$0xf]
      %v3615 = vld [vmem:[%s3600 + $0x38] sm:$0xf]
      %v3616 = vld [vmem:[%s3600 + $0x3c] sm:$0xf]
      %v3634 = vunpack.c.l.b16 %v3567
      %v3635 = vunpack.c.l.b16 %v3568
      %v3636 = vunpack.c.l.b16 %v3569
      %v3637 = vunpack.c.l.b16 %v3570
      %v3638 = vunpack.c.l.b16 %v3571
      %v3639 = vunpack.c.l.b16 %v3572
      %v3640 = vunpack.c.l.b16 %v3573
      %v3641 = vunpack.c.l.b16 %v3574
      %v3642 = vunpack.c.l.b16 %v3575
      %v3643 = vunpack.c.l.b16 %v3576
      %v3644 = vunpack.c.l.b16 %v3577
      %v3645 = vunpack.c.l.b16 %v3578
      %v3646 = vunpack.c.l.b16 %v3579
      %v3647 = vunpack.c.l.b16 %v3580
      %v3648 = vunpack.c.l.b16 %v3581
      %v3649 = vunpack.c.l.b16 %v3582
      %v3650 = vunpack.c.l.b16 %v3583
      %v3651 = vpack.c.b16 %v3635, %v3634
      %v3652 = vpack.c.b16 %v3637, %v3636
      %v3653 = vpack.c.b16 %v3639, %v3638
      %v3654 = vpack.c.b16 %v3641, %v3640
      %v3655 = vpack.c.b16 %v3643, %v3642
      %v3656 = vpack.c.b16 %v3645, %v3644
      %v3657 = vpack.c.b16 %v3647, %v3646
      %v3658 = vpack.c.b16 %v3649, %v3648
      %v3659 = vpack.c.b16 %v3650, %v3650
      %v3661 = vshrl.u32 %v3651, 16
      %v3663 = vshll.u32 %v3651, 16
      %v3665 = vrot.slane %v3663, 1
      %v3666 = vor.u32 %v3661, %v3665
      %v3668 = vshll.u32 %v3652, 16
      %v3670 = vrot.slane %v3668, 1
      %v3671 = vsel %vm770, %v3666, %v3670
      %v3672 = vshrl.u32 %v3652, 16
      %v3674 = vor.u32 %v3672, %v3670
      %v3676 = vshll.u32 %v3653, 16
      %v3678 = vrot.slane %v3676, 1
      %v3679 = vsel %vm770, %v3674, %v3678
      %v3680 = vshrl.u32 %v3653, 16
      %v3682 = vor.u32 %v3680, %v3678
      %v3684 = vshll.u32 %v3654, 16
      %v3686 = vrot.slane %v3684, 1
      %v3687 = vsel %vm770, %v3682, %v3686
      %v3688 = vshrl.u32 %v3654, 16
      %v3690 = vor.u32 %v3688, %v3686
      %v3692 = vshll.u32 %v3655, 16
      %v3694 = vrot.slane %v3692, 1
      %v3695 = vsel %vm770, %v3690, %v3694
      %v3696 = vshrl.u32 %v3655, 16
      %v3698 = vor.u32 %v3696, %v3694
      %v3700 = vshll.u32 %v3656, 16
      %v3702 = vrot.slane %v3700, 1
      %v3703 = vsel %vm770, %v3698, %v3702
      %v3704 = vshrl.u32 %v3656, 16
      %v3706 = vor.u32 %v3704, %v3702
      %v3708 = vshll.u32 %v3657, 16
      %v3710 = vrot.slane %v3708, 1
      %v3711 = vsel %vm770, %v3706, %v3710
      %v3712 = vshrl.u32 %v3657, 16
      %v3714 = vor.u32 %v3712, %v3710
      %v3716 = vshll.u32 %v3658, 16
      %v3718 = vrot.slane %v3716, 1
      %v3719 = vsel %vm770, %v3714, %v3718
      %v3720 = vshrl.u32 %v3658, 16
      %v3722 = vor.u32 %v3720, %v3718
      %v3724 = vshll.u32 %v3659, 16
      %v3726 = vrot.slane %v3724, 1
      %v3727 = vsel %vm770, %v3722, %v3726
      %v3752 = vunpack.c.l.b16 %v3601
      %v3753 = vunpack.c.l.b16 %v3602
      %v3754 = vunpack.c.l.b16 %v3603
      %v3755 = vunpack.c.l.b16 %v3604
      %v3756 = vunpack.c.l.b16 %v3605
      %v3757 = vunpack.c.l.b16 %v3606
      %v3758 = vunpack.c.l.b16 %v3607
      %v3759 = vunpack.c.l.b16 %v3608
      %v3760 = vunpack.c.l.b16 %v3609
      %v3761 = vunpack.c.l.b16 %v3610
      %v3762 = vunpack.c.l.b16 %v3611
      %v3763 = vunpack.c.l.b16 %v3612
      %v3764 = vunpack.c.l.b16 %v3613
      %v3765 = vunpack.c.l.b16 %v3614
      %v3766 = vunpack.c.l.b16 %v3615
      %v3767 = vunpack.c.l.b16 %v3616
      %v3768 = vpack.c.b16 %v3753, %v3752
      %v3769 = vpack.c.b16 %v3755, %v3754
      %v3770 = vpack.c.b16 %v3757, %v3756
      %v3771 = vpack.c.b16 %v3759, %v3758
      %v3772 = vpack.c.b16 %v3761, %v3760
      %v3773 = vpack.c.b16 %v3763, %v3762
      %v3774 = vpack.c.b16 %v3765, %v3764
      %v3775 = vpack.c.b16 %v3767, %v3766
      %3784 = vmatpush.bf16.msra.mxu0 %v3775
      %3785 = vmatpush.bf16.msra.mxu0 %v3774
      %3786 = vmatpush.bf16.msra.mxu0 %v3773
      %3787 = vmatpush.bf16.msra.mxu0 %v3772
      %3788 = vmatpush.bf16.msra.mxu0 %v3771
      %3789 = vmatpush.bf16.msra.mxu0 %v3770
      %3790 = vmatpush.bf16.msra.mxu0 %v3769
      %3791 = vmatpush.bf16.msra.mxu0 %v3768
      %3792 = vmatmul.bf16.gmra.mxu0 %v3671
      %v3793 = vpop.f32.mrf.mxu0
      %v3794 = vadd.f32 0.0, %v3793
      %v3795 = vpop.f32.mrf.mxu0
      %v3796 = vadd.f32 0.0, %v3795
      %3797 = vmatmul.bf16.gmra.mxu0 %v3679
      %v3798 = vpop.f32.mrf.mxu0
      %v3799 = vadd.f32 0.0, %v3798
      %v3800 = vpop.f32.mrf.mxu0
      %v3801 = vadd.f32 0.0, %v3800
      %3802 = vmatmul.bf16.gmra.mxu0 %v3687
      %v3803 = vpop.f32.mrf.mxu0
      %v3804 = vadd.f32 0.0, %v3803
      %v3805 = vpop.f32.mrf.mxu0
      %v3806 = vadd.f32 0.0, %v3805
      %3807 = vmatmul.bf16.gmra.mxu0 %v3695
      %v3808 = vpop.f32.mrf.mxu0
      %v3809 = vadd.f32 0.0, %v3808
      %v3810 = vpop.f32.mrf.mxu0
      %v3811 = vadd.f32 0.0, %v3810
      %3812 = vmatmul.bf16.gmra.mxu0 %v3703
      %v3813 = vpop.f32.mrf.mxu0
      %v3814 = vadd.f32 0.0, %v3813
      %v3815 = vpop.f32.mrf.mxu0
      %v3816 = vadd.f32 0.0, %v3815
      %3817 = vmatmul.bf16.gmra.mxu0 %v3711
      %v3818 = vpop.f32.mrf.mxu0
      %v3819 = vadd.f32 0.0, %v3818
      %v3820 = vpop.f32.mrf.mxu0
      %v3821 = vadd.f32 0.0, %v3820
      %3822 = vmatmul.bf16.gmra.mxu0 %v3719
      %v3823 = vpop.f32.mrf.mxu0
      %v3824 = vadd.f32 0.0, %v3823
      %v3825 = vpop.f32.mrf.mxu0
      %v3826 = vadd.f32 0.0, %v3825
      %3827 = vmatmul.bf16.gmra.mxu0 %v3727
      %v3828 = vpop.f32.mrf.mxu0
      %v3829 = vadd.f32 0.0, %v3828
      %v3830 = vpop.f32.mrf.mxu0
      %v3831 = vadd.f32 0.0, %v3830
      %3832 = vdwg.mxu0
      %v3833 = vadd.f32 %v3584, %v3794
      %v3834 = vadd.f32 %v3585, %v3796
      %v3835 = vadd.f32 %v3586, %v3799
      %v3836 = vadd.f32 %v3587, %v3801
      %v3837 = vadd.f32 %v3588, %v3804
      %v3838 = vadd.f32 %v3589, %v3806
      %v3839 = vadd.f32 %v3590, %v3809
      %v3840 = vadd.f32 %v3591, %v3811
      %v3841 = vadd.f32 %v3592, %v3814
      %v3842 = vadd.f32 %v3593, %v3816
      %v3843 = vadd.f32 %v3594, %v3819
      %v3844 = vadd.f32 %v3595, %v3821
      %v3845 = vadd.f32 %v3596, %v3824
      %v3846 = vadd.f32 %v3597, %v3826
      %v3847 = vadd.f32 %v3598, %v3829
      %v3848 = vadd.f32 %v3599, %v3831
      %3849 = vst [vmem:[#allocation4] sm:$0xff] %v3833
      %3850 = vst [vmem:[#allocation4 + $0x8] sm:$0xff] %v3834
      %3851 = vst [vmem:[#allocation4 + $0x10] sm:$0xff] %v3835
      %3852 = vst [vmem:[#allocation4 + $0x18] sm:$0xff] %v3836
      %3853 = vst [vmem:[#allocation4 + $0x20] sm:$0xff] %v3837
      %3854 = vst [vmem:[#allocation4 + $0x28] sm:$0xff] %v3838
      %3855 = vst [vmem:[#allocation4 + $0x30] sm:$0xff] %v3839
      %3856 = vst [vmem:[#allocation4 + $0x38] sm:$0xff] %v3840
      %3857 = vst [vmem:[#allocation4 + $0x40] sm:$0xff] %v3841
      %3858 = vst [vmem:[#allocation4 + $0x48] sm:$0xff] %v3842
      %3859 = vst [vmem:[#allocation4 + $0x50] sm:$0xff] %v3843
      %3860 = vst [vmem:[#allocation4 + $0x58] sm:$0xff] %v3844
      %3861 = vst [vmem:[#allocation4 + $0x60] sm:$0xff] %v3845
      %3862 = vst [vmem:[#allocation4 + $0x68] sm:$0xff] %v3846
      %3863 = vst [vmem:[#allocation4 + $0x70] sm:$0xff] %v3847
      %3864 = vst [vmem:[#allocation4 + $0x78] sm:$0xff] %v3848
      %v3865 = vld [vmem:[#allocation3] sm:$0xe]
      %v3866 = vld [vmem:[#allocation3 + $0x4] sm:$0xf]
      %v3867 = vld [vmem:[#allocation3 + $0x8] sm:$0xf]
      %v3868 = vld [vmem:[#allocation3 + $0xc] sm:$0xf]
      %v3869 = vld [vmem:[#allocation3 + $0x10] sm:$0xf]
      %v3870 = vld [vmem:[#allocation3 + $0x14] sm:$0xf]
      %v3871 = vld [vmem:[#allocation3 + $0x18] sm:$0xf]
      %v3872 = vld [vmem:[#allocation3 + $0x1c] sm:$0xf]
      %v3873 = vld [vmem:[#allocation3 + $0x20] sm:$0xf]
      %v3874 = vld [vmem:[#allocation3 + $0x24] sm:$0xf]
      %v3875 = vld [vmem:[#allocation3 + $0x28] sm:$0xf]
      %v3876 = vld [vmem:[#allocation3 + $0x2c] sm:$0xf]
      %v3877 = vld [vmem:[#allocation3 + $0x30] sm:$0xf]
      %v3878 = vld [vmem:[#allocation3 + $0x34] sm:$0xf]
      %v3879 = vld [vmem:[#allocation3 + $0x38] sm:$0xf]
      %v3880 = vld [vmem:[#allocation3 + $0x3c] sm:$0xf]
      %v3881 = vld [vmem:[#allocation3 + $0x40] sm:$0x1]
      %v3882 = vld [vmem:[#allocation4] sm:$0xff]
      %v3883 = vld [vmem:[#allocation4 + $0x8] sm:$0xff]
      %v3884 = vld [vmem:[#allocation4 + $0x10] sm:$0xff]
      %v3885 = vld [vmem:[#allocation4 + $0x18] sm:$0xff]
      %v3886 = vld [vmem:[#allocation4 + $0x20] sm:$0xff]
      %v3887 = vld [vmem:[#allocation4 + $0x28] sm:$0xff]
      %v3888 = vld [vmem:[#allocation4 + $0x30] sm:$0xff]
      %v3889 = vld [vmem:[#allocation4 + $0x38] sm:$0xff]
      %v3890 = vld [vmem:[#allocation4 + $0x40] sm:$0xff]
      %v3891 = vld [vmem:[#allocation4 + $0x48] sm:$0xff]
      %v3892 = vld [vmem:[#allocation4 + $0x50] sm:$0xff]
      %v3893 = vld [vmem:[#allocation4 + $0x58] sm:$0xff]
      %v3894 = vld [vmem:[#allocation4 + $0x60] sm:$0xff]
      %v3895 = vld [vmem:[#allocation4 + $0x68] sm:$0xff]
      %v3896 = vld [vmem:[#allocation4 + $0x70] sm:$0xff]
      %v3897 = vld [vmem:[#allocation4 + $0x78] sm:$0xff]
      %s3898 = scalar_lea.vmem %s4, 128
      %v3899 = vld [vmem:[%s3898] sm:$0xf]
      %v3900 = vld [vmem:[%s3898 + $0x4] sm:$0xf]
      %v3901 = vld [vmem:[%s3898 + $0x8] sm:$0xf]
      %v3902 = vld [vmem:[%s3898 + $0xc] sm:$0xf]
      %v3903 = vld [vmem:[%s3898 + $0x10] sm:$0xf]
      %v3904 = vld [vmem:[%s3898 + $0x14] sm:$0xf]
      %v3905 = vld [vmem:[%s3898 + $0x18] sm:$0xf]
      %v3906 = vld [vmem:[%s3898 + $0x1c] sm:$0xf]
      %v3907 = vld [vmem:[%s3898 + $0x20] sm:$0xf]
      %v3908 = vld [vmem:[%s3898 + $0x24] sm:$0xf]
      %v3909 = vld [vmem:[%s3898 + $0x28] sm:$0xf]
      %v3910 = vld [vmem:[%s3898 + $0x2c] sm:$0xf]
      %v3911 = vld [vmem:[%s3898 + $0x30] sm:$0xf]
      %v3912 = vld [vmem:[%s3898 + $0x34] sm:$0xf]
      %v3913 = vld [vmem:[%s3898 + $0x38] sm:$0xf]
      %v3914 = vld [vmem:[%s3898 + $0x3c] sm:$0xf]
      %v3932 = vunpack.c.l.b16 %v3865
      %v3933 = vunpack.c.l.b16 %v3866
      %v3934 = vunpack.c.l.b16 %v3867
      %v3935 = vunpack.c.l.b16 %v3868
      %v3936 = vunpack.c.l.b16 %v3869
      %v3937 = vunpack.c.l.b16 %v3870
      %v3938 = vunpack.c.l.b16 %v3871
      %v3939 = vunpack.c.l.b16 %v3872
      %v3940 = vunpack.c.l.b16 %v3873
      %v3941 = vunpack.c.l.b16 %v3874
      %v3942 = vunpack.c.l.b16 %v3875
      %v3943 = vunpack.c.l.b16 %v3876
      %v3944 = vunpack.c.l.b16 %v3877
      %v3945 = vunpack.c.l.b16 %v3878
      %v3946 = vunpack.c.l.b16 %v3879
      %v3947 = vunpack.c.l.b16 %v3880
      %v3948 = vunpack.c.l.b16 %v3881
      %v3949 = vpack.c.b16 %v3933, %v3932
      %v3950 = vpack.c.b16 %v3935, %v3934
      %v3951 = vpack.c.b16 %v3937, %v3936
      %v3952 = vpack.c.b16 %v3939, %v3938
      %v3953 = vpack.c.b16 %v3941, %v3940
      %v3954 = vpack.c.b16 %v3943, %v3942
      %v3955 = vpack.c.b16 %v3945, %v3944
      %v3956 = vpack.c.b16 %v3947, %v3946
      %v3957 = vpack.c.b16 %v3948, %v3948
      %v3958 = vrot.slane %v3949, 1
      %v3959 = vrot.slane %v3950, 1
      %v3960 = vsel %vm1134, %v3958, %v3959
      %v3961 = vrot.slane %v3951, 1
      %v3962 = vsel %vm1134, %v3959, %v3961
      %v3963 = vrot.slane %v3952, 1
      %v3964 = vsel %vm1134, %v3961, %v3963
      %v3965 = vrot.slane %v3953, 1
      %v3966 = vsel %vm1134, %v3963, %v3965
      %v3967 = vrot.slane %v3954, 1
      %v3968 = vsel %vm1134, %v3965, %v3967
      %v3969 = vrot.slane %v3955, 1
      %v3970 = vsel %vm1134, %v3967, %v3969
      %v3971 = vrot.slane %v3956, 1
      %v3972 = vsel %vm1134, %v3969, %v3971
      %v3973 = vrot.slane %v3957, 1
      %v3974 = vsel %vm1134, %v3971, %v3973
      %v3999 = vunpack.c.l.b16 %v3899
      %v4000 = vunpack.c.l.b16 %v3900
      %v4001 = vunpack.c.l.b16 %v3901
      %v4002 = vunpack.c.l.b16 %v3902
      %v4003 = vunpack.c.l.b16 %v3903
      %v4004 = vunpack.c.l.b16 %v3904
      %v4005 = vunpack.c.l.b16 %v3905
      %v4006 = vunpack.c.l.b16 %v3906
      %v4007 = vunpack.c.l.b16 %v3907
      %v4008 = vunpack.c.l.b16 %v3908
      %v4009 = vunpack.c.l.b16 %v3909
      %v4010 = vunpack.c.l.b16 %v3910
      %v4011 = vunpack.c.l.b16 %v3911
      %v4012 = vunpack.c.l.b16 %v3912
      %v4013 = vunpack.c.l.b16 %v3913
      %v4014 = vunpack.c.l.b16 %v3914
      %v4015 = vpack.c.b16 %v4000, %v3999
      %v4016 = vpack.c.b16 %v4002, %v4001
      %v4017 = vpack.c.b16 %v4004, %v4003
      %v4018 = vpack.c.b16 %v4006, %v4005
      %v4019 = vpack.c.b16 %v4008, %v4007
      %v4020 = vpack.c.b16 %v4010, %v4009
      %v4021 = vpack.c.b16 %v4012, %v4011
      %v4022 = vpack.c.b16 %v4014, %v4013
      %4031 = vmatpush.bf16.msra.mxu0 %v4022
      %4032 = vmatpush.bf16.msra.mxu0 %v4021
      %4033 = vmatpush.bf16.msra.mxu0 %v4020
      %4034 = vmatpush.bf16.msra.mxu0 %v4019
      %4035 = vmatpush.bf16.msra.mxu0 %v4018
      %4036 = vmatpush.bf16.msra.mxu0 %v4017
      %4037 = vmatpush.bf16.msra.mxu0 %v4016
      %4038 = vmatpush.bf16.msra.mxu0 %v4015
      %4039 = vmatmul.bf16.gmra.mxu0 %v3960
      %v4040 = vpop.f32.mrf.mxu0
      %v4041 = vadd.f32 0.0, %v4040
      %v4042 = vpop.f32.mrf.mxu0
      %v4043 = vadd.f32 0.0, %v4042
      %4044 = vmatmul.bf16.gmra.mxu0 %v3962
      %v4045 = vpop.f32.mrf.mxu0
      %v4046 = vadd.f32 0.0, %v4045
      %v4047 = vpop.f32.mrf.mxu0
      %v4048 = vadd.f32 0.0, %v4047
      %4049 = vmatmul.bf16.gmra.mxu0 %v3964
      %v4050 = vpop.f32.mrf.mxu0
      %v4051 = vadd.f32 0.0, %v4050
      %v4052 = vpop.f32.mrf.mxu0
      %v4053 = vadd.f32 0.0, %v4052
      %4054 = vmatmul.bf16.gmra.mxu0 %v3966
      %v4055 = vpop.f32.mrf.mxu0
      %v4056 = vadd.f32 0.0, %v4055
      %v4057 = vpop.f32.mrf.mxu0
      %v4058 = vadd.f32 0.0, %v4057
      %4059 = vmatmul.bf16.gmra.mxu0 %v3968
      %v4060 = vpop.f32.mrf.mxu0
      %v4061 = vadd.f32 0.0, %v4060
      %v4062 = vpop.f32.mrf.mxu0
      %v4063 = vadd.f32 0.0, %v4062
      %4064 = vmatmul.bf16.gmra.mxu0 %v3970
      %v4065 = vpop.f32.mrf.mxu0
      %v4066 = vadd.f32 0.0, %v4065
      %v4067 = vpop.f32.mrf.mxu0
      %v4068 = vadd.f32 0.0, %v4067
      %4069 = vmatmul.bf16.gmra.mxu0 %v3972
      %v4070 = vpop.f32.mrf.mxu0
      %v4071 = vadd.f32 0.0, %v4070
      %v4072 = vpop.f32.mrf.mxu0
      %v4073 = vadd.f32 0.0, %v4072
      %4074 = vmatmul.bf16.gmra.mxu0 %v3974
      %v4075 = vpop.f32.mrf.mxu0
      %v4076 = vadd.f32 0.0, %v4075
      %v4077 = vpop.f32.mrf.mxu0
      %v4078 = vadd.f32 0.0, %v4077
      %4079 = vdwg.mxu0
      %v4080 = vadd.f32 %v3882, %v4041
      %v4081 = vadd.f32 %v3883, %v4043
      %v4082 = vadd.f32 %v3884, %v4046
      %v4083 = vadd.f32 %v3885, %v4048
      %v4084 = vadd.f32 %v3886, %v4051
      %v4085 = vadd.f32 %v3887, %v4053
      %v4086 = vadd.f32 %v3888, %v4056
      %v4087 = vadd.f32 %v3889, %v4058
      %v4088 = vadd.f32 %v3890, %v4061
      %v4089 = vadd.f32 %v3891, %v4063
      %v4090 = vadd.f32 %v3892, %v4066
      %v4091 = vadd.f32 %v3893, %v4068
      %v4092 = vadd.f32 %v3894, %v4071
      %v4093 = vadd.f32 %v3895, %v4073
      %v4094 = vadd.f32 %v3896, %v4076
      %v4095 = vadd.f32 %v3897, %v4078
      %4096 = vst [vmem:[#allocation4] sm:$0xff] %v4080
      %4097 = vst [vmem:[#allocation4 + $0x8] sm:$0xff] %v4081
      %4098 = vst [vmem:[#allocation4 + $0x10] sm:$0xff] %v4082
      %4099 = vst [vmem:[#allocation4 + $0x18] sm:$0xff] %v4083
      %4100 = vst [vmem:[#allocation4 + $0x20] sm:$0xff] %v4084
      %4101 = vst [vmem:[#allocation4 + $0x28] sm:$0xff] %v4085
      %4102 = vst [vmem:[#allocation4 + $0x30] sm:$0xff] %v4086
      %4103 = vst [vmem:[#allocation4 + $0x38] sm:$0xff] %v4087
      %4104 = vst [vmem:[#allocation4 + $0x40] sm:$0xff] %v4088
      %4105 = vst [vmem:[#allocation4 + $0x48] sm:$0xff] %v4089
      %4106 = vst [vmem:[#allocation4 + $0x50] sm:$0xff] %v4090
      %4107 = vst [vmem:[#allocation4 + $0x58] sm:$0xff] %v4091
      %4108 = vst [vmem:[#allocation4 + $0x60] sm:$0xff] %v4092
      %4109 = vst [vmem:[#allocation4 + $0x68] sm:$0xff] %v4093
      %4110 = vst [vmem:[#allocation4 + $0x70] sm:$0xff] %v4094
      %4111 = vst [vmem:[#allocation4 + $0x78] sm:$0xff] %v4095
      %v4112 = vld [vmem:[#allocation3 + $0x8] sm:$0xf]
      %v4113 = vld [vmem:[#allocation3 + $0xc] sm:$0xf]
      %v4114 = vld [vmem:[#allocation3 + $0x10] sm:$0xf]
      %v4115 = vld [vmem:[#allocation3 + $0x14] sm:$0xf]
      %v4116 = vld [vmem:[#allocation3 + $0x18] sm:$0xf]
      %v4117 = vld [vmem:[#allocation3 + $0x1c] sm:$0xf]
      %v4118 = vld [vmem:[#allocation3 + $0x20] sm:$0xf]
      %v4119 = vld [vmem:[#allocation3 + $0x24] sm:$0xf]
      %v4120 = vld [vmem:[#allocation3 + $0x28] sm:$0xf]
      %v4121 = vld [vmem:[#allocation3 + $0x2c] sm:$0xf]
      %v4122 = vld [vmem:[#allocation3 + $0x30] sm:$0xf]
      %v4123 = vld [vmem:[#allocation3 + $0x34] sm:$0xf]
      %v4124 = vld [vmem:[#allocation3 + $0x38] sm:$0xf]
      %v4125 = vld [vmem:[#allocation3 + $0x3c] sm:$0xf]
      %v4126 = vld [vmem:[#allocation3 + $0x40] sm:$0xf]
      %v4127 = vld [vmem:[#allocation3 + $0x44] sm:$0xf]
      %v4128 = vld [vmem:[#allocation4] sm:$0xff]
      %v4129 = vld [vmem:[#allocation4 + $0x8] sm:$0xff]
      %v4130 = vld [vmem:[#allocation4 + $0x10] sm:$0xff]
      %v4131 = vld [vmem:[#allocation4 + $0x18] sm:$0xff]
      %v4132 = vld [vmem:[#allocation4 + $0x20] sm:$0xff]
      %v4133 = vld [vmem:[#allocation4 + $0x28] sm:$0xff]
      %v4134 = vld [vmem:[#allocation4 + $0x30] sm:$0xff]
      %v4135 = vld [vmem:[#allocation4 + $0x38] sm:$0xff]
      %v4136 = vld [vmem:[#allocation4 + $0x40] sm:$0xff]
      %v4137 = vld [vmem:[#allocation4 + $0x48] sm:$0xff]
      %v4138 = vld [vmem:[#allocation4 + $0x50] sm:$0xff]
      %v4139 = vld [vmem:[#allocation4 + $0x58] sm:$0xff]
      %v4140 = vld [vmem:[#allocation4 + $0x60] sm:$0xff]
      %v4141 = vld [vmem:[#allocation4 + $0x68] sm:$0xff]
      %v4142 = vld [vmem:[#allocation4 + $0x70] sm:$0xff]
      %v4143 = vld [vmem:[#allocation4 + $0x78] sm:$0xff]
      %s4144 = scalar_lea.vmem %s4, 192
      %v4145 = vld [vmem:[%s4144] sm:$0xf]
      %v4146 = vld [vmem:[%s4144 + $0x4] sm:$0xf]
      %v4147 = vld [vmem:[%s4144 + $0x8] sm:$0xf]
      %v4148 = vld [vmem:[%s4144 + $0xc] sm:$0xf]
      %v4149 = vld [vmem:[%s4144 + $0x10] sm:$0xf]
      %v4150 = vld [vmem:[%s4144 + $0x14] sm:$0xf]
      %v4151 = vld [vmem:[%s4144 + $0x18] sm:$0xf]
      %v4152 = vld [vmem:[%s4144 + $0x1c] sm:$0xf]
      %v4153 = vld [vmem:[%s4144 + $0x20] sm:$0xf]
      %v4154 = vld [vmem:[%s4144 + $0x24] sm:$0xf]
      %v4155 = vld [vmem:[%s4144 + $0x28] sm:$0xf]
      %v4156 = vld [vmem:[%s4144 + $0x2c] sm:$0xf]
      %v4157 = vld [vmem:[%s4144 + $0x30] sm:$0xf]
      %v4158 = vld [vmem:[%s4144 + $0x34] sm:$0xf]
      %v4159 = vld [vmem:[%s4144 + $0x38] sm:$0xf]
      %v4160 = vld [vmem:[%s4144 + $0x3c] sm:$0xf]
      %v4177 = vunpack.c.l.b16 %v4112
      %v4178 = vunpack.c.l.b16 %v4113
      %v4179 = vunpack.c.l.b16 %v4114
      %v4180 = vunpack.c.l.b16 %v4115
      %v4181 = vunpack.c.l.b16 %v4116
      %v4182 = vunpack.c.l.b16 %v4117
      %v4183 = vunpack.c.l.b16 %v4118
      %v4184 = vunpack.c.l.b16 %v4119
      %v4185 = vunpack.c.l.b16 %v4120
      %v4186 = vunpack.c.l.b16 %v4121
      %v4187 = vunpack.c.l.b16 %v4122
      %v4188 = vunpack.c.l.b16 %v4123
      %v4189 = vunpack.c.l.b16 %v4124
      %v4190 = vunpack.c.l.b16 %v4125
      %v4191 = vunpack.c.l.b16 %v4126
      %v4192 = vunpack.c.l.b16 %v4127
      %v4193 = vpack.c.b16 %v4178, %v4177
      %v4194 = vpack.c.b16 %v4180, %v4179
      %v4195 = vpack.c.b16 %v4182, %v4181
      %v4196 = vpack.c.b16 %v4184, %v4183
      %v4197 = vpack.c.b16 %v4186, %v4185
      %v4198 = vpack.c.b16 %v4188, %v4187
      %v4199 = vpack.c.b16 %v4190, %v4189
      %v4200 = vpack.c.b16 %v4192, %v4191
      %v4225 = vunpack.c.l.b16 %v4145
      %v4226 = vunpack.c.l.b16 %v4146
      %v4227 = vunpack.c.l.b16 %v4147
      %v4228 = vunpack.c.l.b16 %v4148
      %v4229 = vunpack.c.l.b16 %v4149
      %v4230 = vunpack.c.l.b16 %v4150
      %v4231 = vunpack.c.l.b16 %v4151
      %v4232 = vunpack.c.l.b16 %v4152
      %v4233 = vunpack.c.l.b16 %v4153
      %v4234 = vunpack.c.l.b16 %v4154
      %v4235 = vunpack.c.l.b16 %v4155
      %v4236 = vunpack.c.l.b16 %v4156
      %v4237 = vunpack.c.l.b16 %v4157
      %v4238 = vunpack.c.l.b16 %v4158
      %v4239 = vunpack.c.l.b16 %v4159
      %v4240 = vunpack.c.l.b16 %v4160
      %v4241 = vpack.c.b16 %v4226, %v4225
      %v4242 = vpack.c.b16 %v4228, %v4227
      %v4243 = vpack.c.b16 %v4230, %v4229
      %v4244 = vpack.c.b16 %v4232, %v4231
      %v4245 = vpack.c.b16 %v4234, %v4233
      %v4246 = vpack.c.b16 %v4236, %v4235
      %v4247 = vpack.c.b16 %v4238, %v4237
      %v4248 = vpack.c.b16 %v4240, %v4239
      %4257 = vmatpush.bf16.msra.mxu0 %v4248
      %4258 = vmatpush.bf16.msra.mxu0 %v4247
      %4259 = vmatpush.bf16.msra.mxu0 %v4246
      %4260 = vmatpush.bf16.msra.mxu0 %v4245
      %4261 = vmatpush.bf16.msra.mxu0 %v4244
      %4262 = vmatpush.bf16.msra.mxu0 %v4243
      %4263 = vmatpush.bf16.msra.mxu0 %v4242
      %4264 = vmatpush.bf16.msra.mxu0 %v4241
      %4265 = vmatmul.bf16.gmra.mxu0 %v4193
      %v4266 = vpop.f32.mrf.mxu0
      %v4267 = vadd.f32 0.0, %v4266
      %v4268 = vpop.f32.mrf.mxu0
      %v4269 = vadd.f32 0.0, %v4268
      %4270 = vmatmul.bf16.gmra.mxu0 %v4194
      %v4271 = vpop.f32.mrf.mxu0
      %v4272 = vadd.f32 0.0, %v4271
      %v4273 = vpop.f32.mrf.mxu0
      %v4274 = vadd.f32 0.0, %v4273
      %4275 = vmatmul.bf16.gmra.mxu0 %v4195
      %v4276 = vpop.f32.mrf.mxu0
      %v4277 = vadd.f32 0.0, %v4276
      %v4278 = vpop.f32.mrf.mxu0
      %v4279 = vadd.f32 0.0, %v4278
      %4280 = vmatmul.bf16.gmra.mxu0 %v4196
      %v4281 = vpop.f32.mrf.mxu0
      %v4282 = vadd.f32 0.0, %v4281
      %v4283 = vpop.f32.mrf.mxu0
      %v4284 = vadd.f32 0.0, %v4283
      %4285 = vmatmul.bf16.gmra.mxu0 %v4197
      %v4286 = vpop.f32.mrf.mxu0
      %v4287 = vadd.f32 0.0, %v4286
      %v4288 = vpop.f32.mrf.mxu0
      %v4289 = vadd.f32 0.0, %v4288
      %4290 = vmatmul.bf16.gmra.mxu0 %v4198
      %v4291 = vpop.f32.mrf.mxu0
      %v4292 = vadd.f32 0.0, %v4291
      %v4293 = vpop.f32.mrf.mxu0
      %v4294 = vadd.f32 0.0, %v4293
      %4295 = vmatmul.bf16.gmra.mxu0 %v4199
      %v4296 = vpop.f32.mrf.mxu0
      %v4297 = vadd.f32 0.0, %v4296
      %v4298 = vpop.f32.mrf.mxu0
      %v4299 = vadd.f32 0.0, %v4298
      %4300 = vmatmul.bf16.gmra.mxu0 %v4200
      %v4301 = vpop.f32.mrf.mxu0
      %v4302 = vadd.f32 0.0, %v4301
      %v4303 = vpop.f32.mrf.mxu0
      %v4304 = vadd.f32 0.0, %v4303
      %4305 = vdwg.mxu0
      %v4306 = vadd.f32 %v4128, %v4267
      %v4307 = vadd.f32 %v4129, %v4269
      %v4308 = vadd.f32 %v4130, %v4272
      %v4309 = vadd.f32 %v4131, %v4274
      %v4310 = vadd.f32 %v4132, %v4277
      %v4311 = vadd.f32 %v4133, %v4279
      %v4312 = vadd.f32 %v4134, %v4282
      %v4313 = vadd.f32 %v4135, %v4284
      %v4314 = vadd.f32 %v4136, %v4287
      %v4315 = vadd.f32 %v4137, %v4289
      %v4316 = vadd.f32 %v4138, %v4292
      %v4317 = vadd.f32 %v4139, %v4294
      %v4318 = vadd.f32 %v4140, %v4297
      %v4319 = vadd.f32 %v4141, %v4299
      %v4320 = vadd.f32 %v4142, %v4302
      %v4321 = vadd.f32 %v4143, %v4304
      %4322 = vst [vmem:[#allocation4] sm:$0xff] %v4306
      %4323 = vst [vmem:[#allocation4 + $0x8] sm:$0xff] %v4307
      %4324 = vst [vmem:[#allocation4 + $0x10] sm:$0xff] %v4308
      %4325 = vst [vmem:[#allocation4 + $0x18] sm:$0xff] %v4309
      %4326 = vst [vmem:[#allocation4 + $0x20] sm:$0xff] %v4310
      %4327 = vst [vmem:[#allocation4 + $0x28] sm:$0xff] %v4311
      %4328 = vst [vmem:[#allocation4 + $0x30] sm:$0xff] %v4312
      %4329 = vst [vmem:[#allocation4 + $0x38] sm:$0xff] %v4313
      %4330 = vst [vmem:[#allocation4 + $0x40] sm:$0xff] %v4314
      %4331 = vst [vmem:[#allocation4 + $0x48] sm:$0xff] %v4315
      %4332 = vst [vmem:[#allocation4 + $0x50] sm:$0xff] %v4316
      %4333 = vst [vmem:[#allocation4 + $0x58] sm:$0xff] %v4317
      %4334 = vst [vmem:[#allocation4 + $0x60] sm:$0xff] %v4318
      %4335 = vst [vmem:[#allocation4 + $0x68] sm:$0xff] %v4319
      %4336 = vst [vmem:[#allocation4 + $0x70] sm:$0xff] %v4320
      %4337 = vst [vmem:[#allocation4 + $0x78] sm:$0xff] %v4321
      %v4338 = vld [vmem:[#allocation3 + $0x8] sm:$0xf]
      %v4339 = vld [vmem:[#allocation3 + $0xc] sm:$0xf]
      %v4340 = vld [vmem:[#allocation3 + $0x10] sm:$0xf]
      %v4341 = vld [vmem:[#allocation3 + $0x14] sm:$0xf]
      %v4342 = vld [vmem:[#allocation3 + $0x18] sm:$0xf]
      %v4343 = vld [vmem:[#allocation3 + $0x1c] sm:$0xf]
      %v4344 = vld [vmem:[#allocation3 + $0x20] sm:$0xf]
      %v4345 = vld [vmem:[#allocation3 + $0x24] sm:$0xf]
      %v4346 = vld [vmem:[#allocation3 + $0x28] sm:$0xf]
      %v4347 = vld [vmem:[#allocation3 + $0x2c] sm:$0xf]
      %v4348 = vld [vmem:[#allocation3 + $0x30] sm:$0xf]
      %v4349 = vld [vmem:[#allocation3 + $0x34] sm:$0xf]
      %v4350 = vld [vmem:[#allocation3 + $0x38] sm:$0xf]
      %v4351 = vld [vmem:[#allocation3 + $0x3c] sm:$0xf]
      %v4352 = vld [vmem:[#allocation3 + $0x40] sm:$0xf]
      %v4353 = vld [vmem:[#allocation3 + $0x44] sm:$0xf]
      %v4354 = vld [vmem:[#allocation3 + $0x48] sm:$0x1]
      %v4355 = vld [vmem:[#allocation4] sm:$0xff]
      %v4356 = vld [vmem:[#allocation4 + $0x8] sm:$0xff]
      %v4357 = vld [vmem:[#allocation4 + $0x10] sm:$0xff]
      %v4358 = vld [vmem:[#allocation4 + $0x18] sm:$0xff]
      %v4359 = vld [vmem:[#allocation4 + $0x20] sm:$0xff]
      %v4360 = vld [vmem:[#allocation4 + $0x28] sm:$0xff]
      %v4361 = vld [vmem:[#allocation4 + $0x30] sm:$0xff]
      %v4362 = vld [vmem:[#allocation4 + $0x38] sm:$0xff]
      %v4363 = vld [vmem:[#allocation4 + $0x40] sm:$0xff]
      %v4364 = vld [vmem:[#allocation4 + $0x48] sm:$0xff]
      %v4365 = vld [vmem:[#allocation4 + $0x50] sm:$0xff]
      %v4366 = vld [vmem:[#allocation4 + $0x58] sm:$0xff]
      %v4367 = vld [vmem:[#allocation4 + $0x60] sm:$0xff]
      %v4368 = vld [vmem:[#allocation4 + $0x68] sm:$0xff]
      %v4369 = vld [vmem:[#allocation4 + $0x70] sm:$0xff]
      %v4370 = vld [vmem:[#allocation4 + $0x78] sm:$0xff]
      %s4371 = scalar_lea.vmem %s4, 256
      %v4372 = vld [vmem:[%s4371] sm:$0xf]
      %v4373 = vld [vmem:[%s4371 + $0x4] sm:$0xf]
      %v4374 = vld [vmem:[%s4371 + $0x8] sm:$0xf]
      %v4375 = vld [vmem:[%s4371 + $0xc] sm:$0xf]
      %v4376 = vld [vmem:[%s4371 + $0x10] sm:$0xf]
      %v4377 = vld [vmem:[%s4371 + $0x14] sm:$0xf]
      %v4378 = vld [vmem:[%s4371 + $0x18] sm:$0xf]
      %v4379 = vld [vmem:[%s4371 + $0x1c] sm:$0xf]
      %v4380 = vld [vmem:[%s4371 + $0x20] sm:$0xf]
      %v4381 = vld [vmem:[%s4371 + $0x24] sm:$0xf]
      %v4382 = vld [vmem:[%s4371 + $0x28] sm:$0xf]
      %v4383 = vld [vmem:[%s4371 + $0x2c] sm:$0xf]
      %v4384 = vld [vmem:[%s4371 + $0x30] sm:$0xf]
      %v4385 = vld [vmem:[%s4371 + $0x34] sm:$0xf]
      %v4386 = vld [vmem:[%s4371 + $0x38] sm:$0xf]
      %v4387 = vld [vmem:[%s4371 + $0x3c] sm:$0xf]
      %v4405 = vunpack.c.l.b16 %v4338
      %v4406 = vunpack.c.l.b16 %v4339
      %v4407 = vunpack.c.l.b16 %v4340
      %v4408 = vunpack.c.l.b16 %v4341
      %v4409 = vunpack.c.l.b16 %v4342
      %v4410 = vunpack.c.l.b16 %v4343
      %v4411 = vunpack.c.l.b16 %v4344
      %v4412 = vunpack.c.l.b16 %v4345
      %v4413 = vunpack.c.l.b16 %v4346
      %v4414 = vunpack.c.l.b16 %v4347
      %v4415 = vunpack.c.l.b16 %v4348
      %v4416 = vunpack.c.l.b16 %v4349
      %v4417 = vunpack.c.l.b16 %v4350
      %v4418 = vunpack.c.l.b16 %v4351
      %v4419 = vunpack.c.l.b16 %v4352
      %v4420 = vunpack.c.l.b16 %v4353
      %v4421 = vunpack.c.l.b16 %v4354
      %v4422 = vpack.c.b16 %v4406, %v4405
      %v4423 = vpack.c.b16 %v4408, %v4407
      %v4424 = vpack.c.b16 %v4410, %v4409
      %v4425 = vpack.c.b16 %v4412, %v4411
      %v4426 = vpack.c.b16 %v4414, %v4413
      %v4427 = vpack.c.b16 %v4416, %v4415
      %v4428 = vpack.c.b16 %v4418, %v4417
      %v4429 = vpack.c.b16 %v4420, %v4419
      %v4430 = vpack.c.b16 %v4421, %v4421
      %v4432 = vshrl.u32 %v4422, 16
      %v4434 = vshll.u32 %v4422, 16
      %v4436 = vrot.slane %v4434, 1
      %v4437 = vor.u32 %v4432, %v4436
      %v4439 = vshll.u32 %v4423, 16
      %v4441 = vrot.slane %v4439, 1
      %v4442 = vsel %vm770, %v4437, %v4441
      %v4443 = vshrl.u32 %v4423, 16
      %v4445 = vor.u32 %v4443, %v4441
      %v4447 = vshll.u32 %v4424, 16
      %v4449 = vrot.slane %v4447, 1
      %v4450 = vsel %vm770, %v4445, %v4449
      %v4451 = vshrl.u32 %v4424, 16
      %v4453 = vor.u32 %v4451, %v4449
      %v4455 = vshll.u32 %v4425, 16
      %v4457 = vrot.slane %v4455, 1
      %v4458 = vsel %vm770, %v4453, %v4457
      %v4459 = vshrl.u32 %v4425, 16
      %v4461 = vor.u32 %v4459, %v4457
      %v4463 = vshll.u32 %v4426, 16
      %v4465 = vrot.slane %v4463, 1
      %v4466 = vsel %vm770, %v4461, %v4465
      %v4467 = vshrl.u32 %v4426, 16
      %v4469 = vor.u32 %v4467, %v4465
      %v4471 = vshll.u32 %v4427, 16
      %v4473 = vrot.slane %v4471, 1
      %v4474 = vsel %vm770, %v4469, %v4473
      %v4475 = vshrl.u32 %v4427, 16
      %v4477 = vor.u32 %v4475, %v4473
      %v4479 = vshll.u32 %v4428, 16
      %v4481 = vrot.slane %v4479, 1
      %v4482 = vsel %vm770, %v4477, %v4481
      %v4483 = vshrl.u32 %v4428, 16
      %v4485 = vor.u32 %v4483, %v4481
      %v4487 = vshll.u32 %v4429, 16
      %v4489 = vrot.slane %v4487, 1
      %v4490 = vsel %vm770, %v4485, %v4489
      %v4491 = vshrl.u32 %v4429, 16
      %v4493 = vor.u32 %v4491, %v4489
      %v4495 = vshll.u32 %v4430, 16
      %v4497 = vrot.slane %v4495, 1
      %v4498 = vsel %vm770, %v4493, %v4497
      %v4523 = vunpack.c.l.b16 %v4372
      %v4524 = vunpack.c.l.b16 %v4373
      %v4525 = vunpack.c.l.b16 %v4374
      %v4526 = vunpack.c.l.b16 %v4375
      %v4527 = vunpack.c.l.b16 %v4376
      %v4528 = vunpack.c.l.b16 %v4377
      %v4529 = vunpack.c.l.b16 %v4378
      %v4530 = vunpack.c.l.b16 %v4379
      %v4531 = vunpack.c.l.b16 %v4380
      %v4532 = vunpack.c.l.b16 %v4381
      %v4533 = vunpack.c.l.b16 %v4382
      %v4534 = vunpack.c.l.b16 %v4383
      %v4535 = vunpack.c.l.b16 %v4384
      %v4536 = vunpack.c.l.b16 %v4385
      %v4537 = vunpack.c.l.b16 %v4386
      %v4538 = vunpack.c.l.b16 %v4387
      %v4539 = vpack.c.b16 %v4524, %v4523
      %v4540 = vpack.c.b16 %v4526, %v4525
      %v4541 = vpack.c.b16 %v4528, %v4527
      %v4542 = vpack.c.b16 %v4530, %v4529
      %v4543 = vpack.c.b16 %v4532, %v4531
      %v4544 = vpack.c.b16 %v4534, %v4533
      %v4545 = vpack.c.b16 %v4536, %v4535
      %v4546 = vpack.c.b16 %v4538, %v4537
      %4555 = vmatpush.bf16.msra.mxu0 %v4546
      %4556 = vmatpush.bf16.msra.mxu0 %v4545
      %4557 = vmatpush.bf16.msra.mxu0 %v4544
      %4558 = vmatpush.bf16.msra.mxu0 %v4543
      %4559 = vmatpush.bf16.msra.mxu0 %v4542
      %4560 = vmatpush.bf16.msra.mxu0 %v4541
      %4561 = vmatpush.bf16.msra.mxu0 %v4540
      %4562 = vmatpush.bf16.msra.mxu0 %v4539
      %4563 = vmatmul.bf16.gmra.mxu0 %v4442
      %v4564 = vpop.f32.mrf.mxu0
      %v4565 = vadd.f32 0.0, %v4564
      %v4566 = vpop.f32.mrf.mxu0
      %v4567 = vadd.f32 0.0, %v4566
      %4568 = vmatmul.bf16.gmra.mxu0 %v4450
      %v4569 = vpop.f32.mrf.mxu0
      %v4570 = vadd.f32 0.0, %v4569
      %v4571 = vpop.f32.mrf.mxu0
      %v4572 = vadd.f32 0.0, %v4571
      %4573 = vmatmul.bf16.gmra.mxu0 %v4458
      %v4574 = vpop.f32.mrf.mxu0
      %v4575 = vadd.f32 0.0, %v4574
      %v4576 = vpop.f32.mrf.mxu0
      %v4577 = vadd.f32 0.0, %v4576
      %4578 = vmatmul.bf16.gmra.mxu0 %v4466
      %v4579 = vpop.f32.mrf.mxu0
      %v4580 = vadd.f32 0.0, %v4579
      %v4581 = vpop.f32.mrf.mxu0
      %v4582 = vadd.f32 0.0, %v4581
      %4583 = vmatmul.bf16.gmra.mxu0 %v4474
      %v4584 = vpop.f32.mrf.mxu0
      %v4585 = vadd.f32 0.0, %v4584
      %v4586 = vpop.f32.mrf.mxu0
      %v4587 = vadd.f32 0.0, %v4586
      %4588 = vmatmul.bf16.gmra.mxu0 %v4482
      %v4589 = vpop.f32.mrf.mxu0
      %v4590 = vadd.f32 0.0, %v4589
      %v4591 = vpop.f32.mrf.mxu0
      %v4592 = vadd.f32 0.0, %v4591
      %4593 = vmatmul.bf16.gmra.mxu0 %v4490
      %v4594 = vpop.f32.mrf.mxu0
      %v4595 = vadd.f32 0.0, %v4594
      %v4596 = vpop.f32.mrf.mxu0
      %v4597 = vadd.f32 0.0, %v4596
      %4598 = vmatmul.bf16.gmra.mxu0 %v4498
      %v4599 = vpop.f32.mrf.mxu0
      %v4600 = vadd.f32 0.0, %v4599
      %v4601 = vpop.f32.mrf.mxu0
      %v4602 = vadd.f32 0.0, %v4601
      %4603 = vdwg.mxu0
      %v4604 = vadd.f32 %v4355, %v4565
      %v4605 = vadd.f32 %v4356, %v4567
      %v4606 = vadd.f32 %v4357, %v4570
      %v4607 = vadd.f32 %v4358, %v4572
      %v4608 = vadd.f32 %v4359, %v4575
      %v4609 = vadd.f32 %v4360, %v4577
      %v4610 = vadd.f32 %v4361, %v4580
      %v4611 = vadd.f32 %v4362, %v4582
      %v4612 = vadd.f32 %v4363, %v4585
      %v4613 = vadd.f32 %v4364, %v4587
      %v4614 = vadd.f32 %v4365, %v4590
      %v4615 = vadd.f32 %v4366, %v4592
      %v4616 = vadd.f32 %v4367, %v4595
      %v4617 = vadd.f32 %v4368, %v4597
      %v4618 = vadd.f32 %v4369, %v4600
      %v4619 = vadd.f32 %v4370, %v4602
      %4620 = vst [vmem:[#allocation4] sm:$0xff] %v4604
      %4621 = vst [vmem:[#allocation4 + $0x8] sm:$0xff] %v4605
      %4622 = vst [vmem:[#allocation4 + $0x10] sm:$0xff] %v4606
      %4623 = vst [vmem:[#allocation4 + $0x18] sm:$0xff] %v4607
      %4624 = vst [vmem:[#allocation4 + $0x20] sm:$0xff] %v4608
      %4625 = vst [vmem:[#allocation4 + $0x28] sm:$0xff] %v4609
      %4626 = vst [vmem:[#allocation4 + $0x30] sm:$0xff] %v4610
      %4627 = vst [vmem:[#allocation4 + $0x38] sm:$0xff] %v4611
      %4628 = vst [vmem:[#allocation4 + $0x40] sm:$0xff] %v4612
      %4629 = vst [vmem:[#allocation4 + $0x48] sm:$0xff] %v4613
      %4630 = vst [vmem:[#allocation4 + $0x50] sm:$0xff] %v4614
      %4631 = vst [vmem:[#allocation4 + $0x58] sm:$0xff] %v4615
      %4632 = vst [vmem:[#allocation4 + $0x60] sm:$0xff] %v4616
      %4633 = vst [vmem:[#allocation4 + $0x68] sm:$0xff] %v4617
      %4634 = vst [vmem:[#allocation4 + $0x70] sm:$0xff] %v4618
      %4635 = vst [vmem:[#allocation4 + $0x78] sm:$0xff] %v4619
      %v4636 = vld [vmem:[#allocation3 + $0x8] sm:$0xe]
      %v4637 = vld [vmem:[#allocation3 + $0xc] sm:$0xf]
      %v4638 = vld [vmem:[#allocation3 + $0x10] sm:$0xf]
      %v4639 = vld [vmem:[#allocation3 + $0x14] sm:$0xf]
      %v4640 = vld [vmem:[#allocation3 + $0x18] sm:$0xf]
      %v4641 = vld [vmem:[#allocation3 + $0x1c] sm:$0xf]
      %v4642 = vld [vmem:[#allocation3 + $0x20] sm:$0xf]
      %v4643 = vld [vmem:[#allocation3 + $0x24] sm:$0xf]
      %v4644 = vld [vmem:[#allocation3 + $0x28] sm:$0xf]
      %v4645 = vld [vmem:[#allocation3 + $0x2c] sm:$0xf]
      %v4646 = vld [vmem:[#allocation3 + $0x30] sm:$0xf]
      %v4647 = vld [vmem:[#allocation3 + $0x34] sm:$0xf]
      %v4648 = vld [vmem:[#allocation3 + $0x38] sm:$0xf]
      %v4649 = vld [vmem:[#allocation3 + $0x3c] sm:$0xf]
      %v4650 = vld [vmem:[#allocation3 + $0x40] sm:$0xf]
      %v4651 = vld [vmem:[#allocation3 + $0x44] sm:$0xf]
      %v4652 = vld [vmem:[#allocation3 + $0x48] sm:$0x1]
      %v4653 = vld [vmem:[#allocation4] sm:$0xff]
      %v4654 = vld [vmem:[#allocation4 + $0x8] sm:$0xff]
      %v4655 = vld [vmem:[#allocation4 + $0x10] sm:$0xff]
      %v4656 = vld [vmem:[#allocation4 + $0x18] sm:$0xff]
      %v4657 = vld [vmem:[#allocation4 + $0x20] sm:$0xff]
      %v4658 = vld [vmem:[#allocation4 + $0x28] sm:$0xff]
      %v4659 = vld [vmem:[#allocation4 + $0x30] sm:$0xff]
      %v4660 = vld [vmem:[#allocation4 + $0x38] sm:$0xff]
      %v4661 = vld [vmem:[#allocation4 + $0x40] sm:$0xff]
      %v4662 = vld [vmem:[#allocation4 + $0x48] sm:$0xff]
      %v4663 = vld [vmem:[#allocation4 + $0x50] sm:$0xff]
      %v4664 = vld [vmem:[#allocation4 + $0x58] sm:$0xff]
      %v4665 = vld [vmem:[#allocation4 + $0x60] sm:$0xff]
      %v4666 = vld [vmem:[#allocation4 + $0x68] sm:$0xff]
      %v4667 = vld [vmem:[#allocation4 + $0x70] sm:$0xff]
      %v4668 = vld [vmem:[#allocation4 + $0x78] sm:$0xff]
      %s4669 = scalar_lea.vmem %s4, 320
      %v4670 = vld [vmem:[%s4669] sm:$0xf]
      %v4671 = vld [vmem:[%s4669 + $0x4] sm:$0xf]
      %v4672 = vld [vmem:[%s4669 + $0x8] sm:$0xf]
      %v4673 = vld [vmem:[%s4669 + $0xc] sm:$0xf]
      %v4674 = vld [vmem:[%s4669 + $0x10] sm:$0xf]
      %v4675 = vld [vmem:[%s4669 + $0x14] sm:$0xf]
      %v4676 = vld [vmem:[%s4669 + $0x18] sm:$0xf]
      %v4677 = vld [vmem:[%s4669 + $0x1c] sm:$0xf]
      %v4678 = vld [vmem:[%s4669 + $0x20] sm:$0xf]
      %v4679 = vld [vmem:[%s4669 + $0x24] sm:$0xf]
      %v4680 = vld [vmem:[%s4669 + $0x28] sm:$0xf]
      %v4681 = vld [vmem:[%s4669 + $0x2c] sm:$0xf]
      %v4682 = vld [vmem:[%s4669 + $0x30] sm:$0xf]
      %v4683 = vld [vmem:[%s4669 + $0x34] sm:$0xf]
      %v4684 = vld [vmem:[%s4669 + $0x38] sm:$0xf]
      %v4685 = vld [vmem:[%s4669 + $0x3c] sm:$0xf]
      %v4703 = vunpack.c.l.b16 %v4636
      %v4704 = vunpack.c.l.b16 %v4637
      %v4705 = vunpack.c.l.b16 %v4638
      %v4706 = vunpack.c.l.b16 %v4639
      %v4707 = vunpack.c.l.b16 %v4640
      %v4708 = vunpack.c.l.b16 %v4641
      %v4709 = vunpack.c.l.b16 %v4642
      %v4710 = vunpack.c.l.b16 %v4643
      %v4711 = vunpack.c.l.b16 %v4644
      %v4712 = vunpack.c.l.b16 %v4645
      %v4713 = vunpack.c.l.b16 %v4646
      %v4714 = vunpack.c.l.b16 %v4647
      %v4715 = vunpack.c.l.b16 %v4648
      %v4716 = vunpack.c.l.b16 %v4649
      %v4717 = vunpack.c.l.b16 %v4650
      %v4718 = vunpack.c.l.b16 %v4651
      %v4719 = vunpack.c.l.b16 %v4652
      %v4720 = vpack.c.b16 %v4704, %v4703
      %v4721 = vpack.c.b16 %v4706, %v4705
      %v4722 = vpack.c.b16 %v4708, %v4707
      %v4723 = vpack.c.b16 %v4710, %v4709
      %v4724 = vpack.c.b16 %v4712, %v4711
      %v4725 = vpack.c.b16 %v4714, %v4713
      %v4726 = vpack.c.b16 %v4716, %v4715
      %v4727 = vpack.c.b16 %v4718, %v4717
      %v4728 = vpack.c.b16 %v4719, %v4719
      %v4729 = vrot.slane %v4720, 1
      %v4730 = vrot.slane %v4721, 1
      %v4731 = vsel %vm1134, %v4729, %v4730
      %v4732 = vrot.slane %v4722, 1
      %v4733 = vsel %vm1134, %v4730, %v4732
      %v4734 = vrot.slane %v4723, 1
      %v4735 = vsel %vm1134, %v4732, %v4734
      %v4736 = vrot.slane %v4724, 1
      %v4737 = vsel %vm1134, %v4734, %v4736
      %v4738 = vrot.slane %v4725, 1
      %v4739 = vsel %vm1134, %v4736, %v4738
      %v4740 = vrot.slane %v4726, 1
      %v4741 = vsel %vm1134, %v4738, %v4740
      %v4742 = vrot.slane %v4727, 1
      %v4743 = vsel %vm1134, %v4740, %v4742
      %v4744 = vrot.slane %v4728, 1
      %v4745 = vsel %vm1134, %v4742, %v4744
      %v4770 = vunpack.c.l.b16 %v4670
      %v4771 = vunpack.c.l.b16 %v4671
      %v4772 = vunpack.c.l.b16 %v4672
      %v4773 = vunpack.c.l.b16 %v4673
      %v4774 = vunpack.c.l.b16 %v4674
      %v4775 = vunpack.c.l.b16 %v4675
      %v4776 = vunpack.c.l.b16 %v4676
      %v4777 = vunpack.c.l.b16 %v4677
      %v4778 = vunpack.c.l.b16 %v4678
      %v4779 = vunpack.c.l.b16 %v4679
      %v4780 = vunpack.c.l.b16 %v4680
      %v4781 = vunpack.c.l.b16 %v4681
      %v4782 = vunpack.c.l.b16 %v4682
      %v4783 = vunpack.c.l.b16 %v4683
      %v4784 = vunpack.c.l.b16 %v4684
      %v4785 = vunpack.c.l.b16 %v4685
      %v4786 = vpack.c.b16 %v4771, %v4770
      %v4787 = vpack.c.b16 %v4773, %v4772
      %v4788 = vpack.c.b16 %v4775, %v4774
      %v4789 = vpack.c.b16 %v4777, %v4776
      %v4790 = vpack.c.b16 %v4779, %v4778
      %v4791 = vpack.c.b16 %v4781, %v4780
      %v4792 = vpack.c.b16 %v4783, %v4782
      %v4793 = vpack.c.b16 %v4785, %v4784
      %4802 = vmatpush.bf16.msra.mxu0 %v4793
      %4803 = vmatpush.bf16.msra.mxu0 %v4792
      %4804 = vmatpush.bf16.msra.mxu0 %v4791
      %4805 = vmatpush.bf16.msra.mxu0 %v4790
      %4806 = vmatpush.bf16.msra.mxu0 %v4789
      %4807 = vmatpush.bf16.msra.mxu0 %v4788
      %4808 = vmatpush.bf16.msra.mxu0 %v4787
      %4809 = vmatpush.bf16.msra.mxu0 %v4786
      %4810 = vmatmul.bf16.gmra.mxu0 %v4731
      %v4811 = vpop.f32.mrf.mxu0
      %v4812 = vadd.f32 0.0, %v4811
      %v4813 = vpop.f32.mrf.mxu0
      %v4814 = vadd.f32 0.0, %v4813
      %4815 = vmatmul.bf16.gmra.mxu0 %v4733
      %v4816 = vpop.f32.mrf.mxu0
      %v4817 = vadd.f32 0.0, %v4816
      %v4818 = vpop.f32.mrf.mxu0
      %v4819 = vadd.f32 0.0, %v4818
      %4820 = vmatmul.bf16.gmra.mxu0 %v4735
      %v4821 = vpop.f32.mrf.mxu0
      %v4822 = vadd.f32 0.0, %v4821
      %v4823 = vpop.f32.mrf.mxu0
      %v4824 = vadd.f32 0.0, %v4823
      %4825 = vmatmul.bf16.gmra.mxu0 %v4737
      %v4826 = vpop.f32.mrf.mxu0
      %v4827 = vadd.f32 0.0, %v4826
      %v4828 = vpop.f32.mrf.mxu0
      %v4829 = vadd.f32 0.0, %v4828
      %4830 = vmatmul.bf16.gmra.mxu0 %v4739
      %v4831 = vpop.f32.mrf.mxu0
      %v4832 = vadd.f32 0.0, %v4831
      %v4833 = vpop.f32.mrf.mxu0
      %v4834 = vadd.f32 0.0, %v4833
      %4835 = vmatmul.bf16.gmra.mxu0 %v4741
      %v4836 = vpop.f32.mrf.mxu0
      %v4837 = vadd.f32 0.0, %v4836
      %v4838 = vpop.f32.mrf.mxu0
      %v4839 = vadd.f32 0.0, %v4838
      %4840 = vmatmul.bf16.gmra.mxu0 %v4743
      %v4841 = vpop.f32.mrf.mxu0
      %v4842 = vadd.f32 0.0, %v4841
      %v4843 = vpop.f32.mrf.mxu0
      %v4844 = vadd.f32 0.0, %v4843
      %4845 = vmatmul.bf16.gmra.mxu0 %v4745
      %v4846 = vpop.f32.mrf.mxu0
      %v4847 = vadd.f32 0.0, %v4846
      %v4848 = vpop.f32.mrf.mxu0
      %v4849 = vadd.f32 0.0, %v4848
      %4850 = vdwg.mxu0
      %v4851 = vadd.f32 %v4653, %v4812
      %v4852 = vadd.f32 %v4654, %v4814
      %v4853 = vadd.f32 %v4655, %v4817
      %v4854 = vadd.f32 %v4656, %v4819
      %v4855 = vadd.f32 %v4657, %v4822
      %v4856 = vadd.f32 %v4658, %v4824
      %v4857 = vadd.f32 %v4659, %v4827
      %v4858 = vadd.f32 %v4660, %v4829
      %v4859 = vadd.f32 %v4661, %v4832
      %v4860 = vadd.f32 %v4662, %v4834
      %v4861 = vadd.f32 %v4663, %v4837
      %v4862 = vadd.f32 %v4664, %v4839
      %v4863 = vadd.f32 %v4665, %v4842
      %v4864 = vadd.f32 %v4666, %v4844
      %v4865 = vadd.f32 %v4667, %v4847
      %v4866 = vadd.f32 %v4668, %v4849
      %4867 = vst [vmem:[#allocation4] sm:$0xff] %v4851
      %4868 = vst [vmem:[#allocation4 + $0x8] sm:$0xff] %v4852
      %4869 = vst [vmem:[#allocation4 + $0x10] sm:$0xff] %v4853
      %4870 = vst [vmem:[#allocation4 + $0x18] sm:$0xff] %v4854
      %4871 = vst [vmem:[#allocation4 + $0x20] sm:$0xff] %v4855
      %4872 = vst [vmem:[#allocation4 + $0x28] sm:$0xff] %v4856
      %4873 = vst [vmem:[#allocation4 + $0x30] sm:$0xff] %v4857
      %4874 = vst [vmem:[#allocation4 + $0x38] sm:$0xff] %v4858
      %4875 = vst [vmem:[#allocation4 + $0x40] sm:$0xff] %v4859
      %4876 = vst [vmem:[#allocation4 + $0x48] sm:$0xff] %v4860
      %4877 = vst [vmem:[#allocation4 + $0x50] sm:$0xff] %v4861
      %4878 = vst [vmem:[#allocation4 + $0x58] sm:$0xff] %v4862
      %4879 = vst [vmem:[#allocation4 + $0x60] sm:$0xff] %v4863
      %4880 = vst [vmem:[#allocation4 + $0x68] sm:$0xff] %v4864
      %4881 = vst [vmem:[#allocation4 + $0x70] sm:$0xff] %v4865
      %4882 = vst [vmem:[#allocation4 + $0x78] sm:$0xff] %v4866
      %v4883 = vld [vmem:[#allocation3 + $0x10] sm:$0xf]
      %v4884 = vld [vmem:[#allocation3 + $0x14] sm:$0xf]
      %v4885 = vld [vmem:[#allocation3 + $0x18] sm:$0xf]
      %v4886 = vld [vmem:[#allocation3 + $0x1c] sm:$0xf]
      %v4887 = vld [vmem:[#allocation3 + $0x20] sm:$0xf]
      %v4888 = vld [vmem:[#allocation3 + $0x24] sm:$0xf]
      %v4889 = vld [vmem:[#allocation3 + $0x28] sm:$0xf]
      %v4890 = vld [vmem:[#allocation3 + $0x2c] sm:$0xf]
      %v4891 = vld [vmem:[#allocation3 + $0x30] sm:$0xf]
      %v4892 = vld [vmem:[#allocation3 + $0x34] sm:$0xf]
      %v4893 = vld [vmem:[#allocation3 + $0x38] sm:$0xf]
      %v4894 = vld [vmem:[#allocation3 + $0x3c] sm:$0xf]
      %v4895 = vld [vmem:[#allocation3 + $0x40] sm:$0xf]
      %v4896 = vld [vmem:[#allocation3 + $0x44] sm:$0xf]
      %v4897 = vld [vmem:[#allocation3 + $0x48] sm:$0xf]
      %v4898 = vld [vmem:[#allocation3 + $0x4c] sm:$0xf]
      %v4899 = vld [vmem:[#allocation4] sm:$0xff]
      %v4900 = vld [vmem:[#allocation4 + $0x8] sm:$0xff]
      %v4901 = vld [vmem:[#allocation4 + $0x10] sm:$0xff]
      %v4902 = vld [vmem:[#allocation4 + $0x18] sm:$0xff]
      %v4903 = vld [vmem:[#allocation4 + $0x20] sm:$0xff]
      %v4904 = vld [vmem:[#allocation4 + $0x28] sm:$0xff]
      %v4905 = vld [vmem:[#allocation4 + $0x30] sm:$0xff]
      %v4906 = vld [vmem:[#allocation4 + $0x38] sm:$0xff]
      %v4907 = vld [vmem:[#allocation4 + $0x40] sm:$0xff]
      %v4908 = vld [vmem:[#allocation4 + $0x48] sm:$0xff]
      %v4909 = vld [vmem:[#allocation4 + $0x50] sm:$0xff]
      %v4910 = vld [vmem:[#allocation4 + $0x58] sm:$0xff]
      %v4911 = vld [vmem:[#allocation4 + $0x60] sm:$0xff]
      %v4912 = vld [vmem:[#allocation4 + $0x68] sm:$0xff]
      %v4913 = vld [vmem:[#allocation4 + $0x70] sm:$0xff]
      %v4914 = vld [vmem:[#allocation4 + $0x78] sm:$0xff]
      %s4915 = scalar_lea.vmem %s4, 384
      %v4916 = vld [vmem:[%s4915] sm:$0xf]
      %v4917 = vld [vmem:[%s4915 + $0x4] sm:$0xf]
      %v4918 = vld [vmem:[%s4915 + $0x8] sm:$0xf]
      %v4919 = vld [vmem:[%s4915 + $0xc] sm:$0xf]
      %v4920 = vld [vmem:[%s4915 + $0x10] sm:$0xf]
      %v4921 = vld [vmem:[%s4915 + $0x14] sm:$0xf]
      %v4922 = vld [vmem:[%s4915 + $0x18] sm:$0xf]
      %v4923 = vld [vmem:[%s4915 + $0x1c] sm:$0xf]
      %v4924 = vld [vmem:[%s4915 + $0x20] sm:$0xf]
      %v4925 = vld [vmem:[%s4915 + $0x24] sm:$0xf]
      %v4926 = vld [vmem:[%s4915 + $0x28] sm:$0xf]
      %v4927 = vld [vmem:[%s4915 + $0x2c] sm:$0xf]
      %v4928 = vld [vmem:[%s4915 + $0x30] sm:$0xf]
      %v4929 = vld [vmem:[%s4915 + $0x34] sm:$0xf]
      %v4930 = vld [vmem:[%s4915 + $0x38] sm:$0xf]
      %v4931 = vld [vmem:[%s4915 + $0x3c] sm:$0xf]
      %v4948 = vunpack.c.l.b16 %v4883
      %v4949 = vunpack.c.l.b16 %v4884
      %v4950 = vunpack.c.l.b16 %v4885
      %v4951 = vunpack.c.l.b16 %v4886
      %v4952 = vunpack.c.l.b16 %v4887
      %v4953 = vunpack.c.l.b16 %v4888
      %v4954 = vunpack.c.l.b16 %v4889
      %v4955 = vunpack.c.l.b16 %v4890
      %v4956 = vunpack.c.l.b16 %v4891
      %v4957 = vunpack.c.l.b16 %v4892
      %v4958 = vunpack.c.l.b16 %v4893
      %v4959 = vunpack.c.l.b16 %v4894
      %v4960 = vunpack.c.l.b16 %v4895
      %v4961 = vunpack.c.l.b16 %v4896
      %v4962 = vunpack.c.l.b16 %v4897
      %v4963 = vunpack.c.l.b16 %v4898
      %v4964 = vpack.c.b16 %v4949, %v4948
      %v4965 = vpack.c.b16 %v4951, %v4950
      %v4966 = vpack.c.b16 %v4953, %v4952
      %v4967 = vpack.c.b16 %v4955, %v4954
      %v4968 = vpack.c.b16 %v4957, %v4956
      %v4969 = vpack.c.b16 %v4959, %v4958
      %v4970 = vpack.c.b16 %v4961, %v4960
      %v4971 = vpack.c.b16 %v4963, %v4962
      %v4996 = vunpack.c.l.b16 %v4916
      %v4997 = vunpack.c.l.b16 %v4917
      %v4998 = vunpack.c.l.b16 %v4918
      %v4999 = vunpack.c.l.b16 %v4919
      %v5000 = vunpack.c.l.b16 %v4920
      %v5001 = vunpack.c.l.b16 %v4921
      %v5002 = vunpack.c.l.b16 %v4922
      %v5003 = vunpack.c.l.b16 %v4923
      %v5004 = vunpack.c.l.b16 %v4924
      %v5005 = vunpack.c.l.b16 %v4925
      %v5006 = vunpack.c.l.b16 %v4926
      %v5007 = vunpack.c.l.b16 %v4927
      %v5008 = vunpack.c.l.b16 %v4928
      %v5009 = vunpack.c.l.b16 %v4929
      %v5010 = vunpack.c.l.b16 %v4930
      %v5011 = vunpack.c.l.b16 %v4931
      %v5012 = vpack.c.b16 %v4997, %v4996
      %v5013 = vpack.c.b16 %v4999, %v4998
      %v5014 = vpack.c.b16 %v5001, %v5000
      %v5015 = vpack.c.b16 %v5003, %v5002
      %v5016 = vpack.c.b16 %v5005, %v5004
      %v5017 = vpack.c.b16 %v5007, %v5006
      %v5018 = vpack.c.b16 %v5009, %v5008
      %v5019 = vpack.c.b16 %v5011, %v5010
      %5028 = vmatpush.bf16.msra.mxu0 %v5019
      %5029 = vmatpush.bf16.msra.mxu0 %v5018
      %5030 = vmatpush.bf16.msra.mxu0 %v5017
      %5031 = vmatpush.bf16.msra.mxu0 %v5016
      %5032 = vmatpush.bf16.msra.mxu0 %v5015
      %5033 = vmatpush.bf16.msra.mxu0 %v5014
      %5034 = vmatpush.bf16.msra.mxu0 %v5013
      %5035 = vmatpush.bf16.msra.mxu0 %v5012
      %5036 = vmatmul.bf16.gmra.mxu0 %v4964
      %v5037 = vpop.f32.mrf.mxu0
      %v5038 = vadd.f32 0.0, %v5037
      %v5039 = vpop.f32.mrf.mxu0
      %v5040 = vadd.f32 0.0, %v5039
      %5041 = vmatmul.bf16.gmra.mxu0 %v4965
      %v5042 = vpop.f32.mrf.mxu0
      %v5043 = vadd.f32 0.0, %v5042
      %v5044 = vpop.f32.mrf.mxu0
      %v5045 = vadd.f32 0.0, %v5044
      %5046 = vmatmul.bf16.gmra.mxu0 %v4966
      %v5047 = vpop.f32.mrf.mxu0
      %v5048 = vadd.f32 0.0, %v5047
      %v5049 = vpop.f32.mrf.mxu0
      %v5050 = vadd.f32 0.0, %v5049
      %5051 = vmatmul.bf16.gmra.mxu0 %v4967
      %v5052 = vpop.f32.mrf.mxu0
      %v5053 = vadd.f32 0.0, %v5052
      %v5054 = vpop.f32.mrf.mxu0
      %v5055 = vadd.f32 0.0, %v5054
      %5056 = vmatmul.bf16.gmra.mxu0 %v4968
      %v5057 = vpop.f32.mrf.mxu0
      %v5058 = vadd.f32 0.0, %v5057
      %v5059 = vpop.f32.mrf.mxu0
      %v5060 = vadd.f32 0.0, %v5059
      %5061 = vmatmul.bf16.gmra.mxu0 %v4969
      %v5062 = vpop.f32.mrf.mxu0
      %v5063 = vadd.f32 0.0, %v5062
      %v5064 = vpop.f32.mrf.mxu0
      %v5065 = vadd.f32 0.0, %v5064
      %5066 = vmatmul.bf16.gmra.mxu0 %v4970
      %v5067 = vpop.f32.mrf.mxu0
      %v5068 = vadd.f32 0.0, %v5067
      %v5069 = vpop.f32.mrf.mxu0
      %v5070 = vadd.f32 0.0, %v5069
      %5071 = vmatmul.bf16.gmra.mxu0 %v4971
      %v5072 = vpop.f32.mrf.mxu0
      %v5073 = vadd.f32 0.0, %v5072
      %v5074 = vpop.f32.mrf.mxu0
      %v5075 = vadd.f32 0.0, %v5074
      %5076 = vdwg.mxu0
      %v5077 = vadd.f32 %v4899, %v5038
      %v5078 = vadd.f32 %v4900, %v5040
      %v5079 = vadd.f32 %v4901, %v5043
      %v5080 = vadd.f32 %v4902, %v5045
      %v5081 = vadd.f32 %v4903, %v5048
      %v5082 = vadd.f32 %v4904, %v5050
      %v5083 = vadd.f32 %v4905, %v5053
      %v5084 = vadd.f32 %v4906, %v5055
      %v5085 = vadd.f32 %v4907, %v5058
      %v5086 = vadd.f32 %v4908, %v5060
      %v5087 = vadd.f32 %v4909, %v5063
      %v5088 = vadd.f32 %v4910, %v5065
      %v5089 = vadd.f32 %v4911, %v5068
      %v5090 = vadd.f32 %v4912, %v5070
      %v5091 = vadd.f32 %v4913, %v5073
      %v5092 = vadd.f32 %v4914, %v5075
      %5093 = vst [vmem:[#allocation4] sm:$0xff] %v5077
      %5094 = vst [vmem:[#allocation4 + $0x8] sm:$0xff] %v5078
      %5095 = vst [vmem:[#allocation4 + $0x10] sm:$0xff] %v5079
      %5096 = vst [vmem:[#allocation4 + $0x18] sm:$0xff] %v5080
      %5097 = vst [vmem:[#allocation4 + $0x20] sm:$0xff] %v5081
      %5098 = vst [vmem:[#allocation4 + $0x28] sm:$0xff] %v5082
      %5099 = vst [vmem:[#allocation4 + $0x30] sm:$0xff] %v5083
      %5100 = vst [vmem:[#allocation4 + $0x38] sm:$0xff] %v5084
      %5101 = vst [vmem:[#allocation4 + $0x40] sm:$0xff] %v5085
      %5102 = vst [vmem:[#allocation4 + $0x48] sm:$0xff] %v5086
      %5103 = vst [vmem:[#allocation4 + $0x50] sm:$0xff] %v5087
      %5104 = vst [vmem:[#allocation4 + $0x58] sm:$0xff] %v5088
      %5105 = vst [vmem:[#allocation4 + $0x60] sm:$0xff] %v5089
      %5106 = vst [vmem:[#allocation4 + $0x68] sm:$0xff] %v5090
      %5107 = vst [vmem:[#allocation4 + $0x70] sm:$0xff] %v5091
      %5108 = vst [vmem:[#allocation4 + $0x78] sm:$0xff] %v5092
      %v5109 = vld [vmem:[#allocation3 + $0x10] sm:$0xf]
      %v5110 = vld [vmem:[#allocation3 + $0x14] sm:$0xf]
      %v5111 = vld [vmem:[#allocation3 + $0x18] sm:$0xf]
      %v5112 = vld [vmem:[#allocation3 + $0x1c] sm:$0xf]
      %v5113 = vld [vmem:[#allocation3 + $0x20] sm:$0xf]
      %v5114 = vld [vmem:[#allocation3 + $0x24] sm:$0xf]
      %v5115 = vld [vmem:[#allocation3 + $0x28] sm:$0xf]
      %v5116 = vld [vmem:[#allocation3 + $0x2c] sm:$0xf]
      %v5117 = vld [vmem:[#allocation3 + $0x30] sm:$0xf]
      %v5118 = vld [vmem:[#allocation3 + $0x34] sm:$0xf]
      %v5119 = vld [vmem:[#allocation3 + $0x38] sm:$0xf]
      %v5120 = vld [vmem:[#allocation3 + $0x3c] sm:$0xf]
      %v5121 = vld [vmem:[#allocation3 + $0x40] sm:$0xf]
      %v5122 = vld [vmem:[#allocation3 + $0x44] sm:$0xf]
      %v5123 = vld [vmem:[#allocation3 + $0x48] sm:$0xf]
      %v5124 = vld [vmem:[#allocation3 + $0x4c] sm:$0xf]
      %v5125 = vld [vmem:[#allocation3 + $0x50] sm:$0x1]
      %v5126 = vld [vmem:[#allocation4] sm:$0xff]
      %v5127 = vld [vmem:[#allocation4 + $0x8] sm:$0xff]
      %v5128 = vld [vmem:[#allocation4 + $0x10] sm:$0xff]
      %v5129 = vld [vmem:[#allocation4 + $0x18] sm:$0xff]
      %v5130 = vld [vmem:[#allocation4 + $0x20] sm:$0xff]
      %v5131 = vld [vmem:[#allocation4 + $0x28] sm:$0xff]
      %v5132 = vld [vmem:[#allocation4 + $0x30] sm:$0xff]
      %v5133 = vld [vmem:[#allocation4 + $0x38] sm:$0xff]
      %v5134 = vld [vmem:[#allocation4 + $0x40] sm:$0xff]
      %v5135 = vld [vmem:[#allocation4 + $0x48] sm:$0xff]
      %v5136 = vld [vmem:[#allocation4 + $0x50] sm:$0xff]
      %v5137 = vld [vmem:[#allocation4 + $0x58] sm:$0xff]
      %v5138 = vld [vmem:[#allocation4 + $0x60] sm:$0xff]
      %v5139 = vld [vmem:[#allocation4 + $0x68] sm:$0xff]
      %v5140 = vld [vmem:[#allocation4 + $0x70] sm:$0xff]
      %v5141 = vld [vmem:[#allocation4 + $0x78] sm:$0xff]
      %s5142 = scalar_lea.vmem %s4, 448
      %v5143 = vld [vmem:[%s5142] sm:$0xf]
      %v5144 = vld [vmem:[%s5142 + $0x4] sm:$0xf]
      %v5145 = vld [vmem:[%s5142 + $0x8] sm:$0xf]
      %v5146 = vld [vmem:[%s5142 + $0xc] sm:$0xf]
      %v5147 = vld [vmem:[%s5142 + $0x10] sm:$0xf]
      %v5148 = vld [vmem:[%s5142 + $0x14] sm:$0xf]
      %v5149 = vld [vmem:[%s5142 + $0x18] sm:$0xf]
      %v5150 = vld [vmem:[%s5142 + $0x1c] sm:$0xf]
      %v5151 = vld [vmem:[%s5142 + $0x20] sm:$0xf]
      %v5152 = vld [vmem:[%s5142 + $0x24] sm:$0xf]
      %v5153 = vld [vmem:[%s5142 + $0x28] sm:$0xf]
      %v5154 = vld [vmem:[%s5142 + $0x2c] sm:$0xf]
      %v5155 = vld [vmem:[%s5142 + $0x30] sm:$0xf]
      %v5156 = vld [vmem:[%s5142 + $0x34] sm:$0xf]
      %v5157 = vld [vmem:[%s5142 + $0x38] sm:$0xf]
      %v5158 = vld [vmem:[%s5142 + $0x3c] sm:$0xf]
      %v5176 = vunpack.c.l.b16 %v5109
      %v5177 = vunpack.c.l.b16 %v5110
      %v5178 = vunpack.c.l.b16 %v5111
      %v5179 = vunpack.c.l.b16 %v5112
      %v5180 = vunpack.c.l.b16 %v5113
      %v5181 = vunpack.c.l.b16 %v5114
      %v5182 = vunpack.c.l.b16 %v5115
      %v5183 = vunpack.c.l.b16 %v5116
      %v5184 = vunpack.c.l.b16 %v5117
      %v5185 = vunpack.c.l.b16 %v5118
      %v5186 = vunpack.c.l.b16 %v5119
      %v5187 = vunpack.c.l.b16 %v5120
      %v5188 = vunpack.c.l.b16 %v5121
      %v5189 = vunpack.c.l.b16 %v5122
      %v5190 = vunpack.c.l.b16 %v5123
      %v5191 = vunpack.c.l.b16 %v5124
      %v5192 = vunpack.c.l.b16 %v5125
      %v5193 = vpack.c.b16 %v5177, %v5176
      %v5194 = vpack.c.b16 %v5179, %v5178
      %v5195 = vpack.c.b16 %v5181, %v5180
      %v5196 = vpack.c.b16 %v5183, %v5182
      %v5197 = vpack.c.b16 %v5185, %v5184
      %v5198 = vpack.c.b16 %v5187, %v5186
      %v5199 = vpack.c.b16 %v5189, %v5188
      %v5200 = vpack.c.b16 %v5191, %v5190
      %v5201 = vpack.c.b16 %v5192, %v5192
      %v5203 = vshrl.u32 %v5193, 16
      %v5205 = vshll.u32 %v5193, 16
      %v5207 = vrot.slane %v5205, 1
      %v5208 = vor.u32 %v5203, %v5207
      %v5210 = vshll.u32 %v5194, 16
      %v5212 = vrot.slane %v5210, 1
      %v5213 = vsel %vm770, %v5208, %v5212
      %v5214 = vshrl.u32 %v5194, 16
      %v5216 = vor.u32 %v5214, %v5212
      %v5218 = vshll.u32 %v5195, 16
      %v5220 = vrot.slane %v5218, 1
      %v5221 = vsel %vm770, %v5216, %v5220
      %v5222 = vshrl.u32 %v5195, 16
      %v5224 = vor.u32 %v5222, %v5220
      %v5226 = vshll.u32 %v5196, 16
      %v5228 = vrot.slane %v5226, 1
      %v5229 = vsel %vm770, %v5224, %v5228
      %v5230 = vshrl.u32 %v5196, 16
      %v5232 = vor.u32 %v5230, %v5228
      %v5234 = vshll.u32 %v5197, 16
      %v5236 = vrot.slane %v5234, 1
      %v5237 = vsel %vm770, %v5232, %v5236
      %v5238 = vshrl.u32 %v5197, 16
      %v5240 = vor.u32 %v5238, %v5236
      %v5242 = vshll.u32 %v5198, 16
      %v5244 = vrot.slane %v5242, 1
      %v5245 = vsel %vm770, %v5240, %v5244
      %v5246 = vshrl.u32 %v5198, 16
      %v5248 = vor.u32 %v5246, %v5244
      %v5250 = vshll.u32 %v5199, 16
      %v5252 = vrot.slane %v5250, 1
      %v5253 = vsel %vm770, %v5248, %v5252
      %v5254 = vshrl.u32 %v5199, 16
      %v5256 = vor.u32 %v5254, %v5252
      %v5258 = vshll.u32 %v5200, 16
      %v5260 = vrot.slane %v5258, 1
      %v5261 = vsel %vm770, %v5256, %v5260
      %v5262 = vshrl.u32 %v5200, 16
      %v5264 = vor.u32 %v5262, %v5260
      %v5266 = vshll.u32 %v5201, 16
      %v5268 = vrot.slane %v5266, 1
      %v5269 = vsel %vm770, %v5264, %v5268
      %v5294 = vunpack.c.l.b16 %v5143
      %v5295 = vunpack.c.l.b16 %v5144
      %v5296 = vunpack.c.l.b16 %v5145
      %v5297 = vunpack.c.l.b16 %v5146
      %v5298 = vunpack.c.l.b16 %v5147
      %v5299 = vunpack.c.l.b16 %v5148
      %v5300 = vunpack.c.l.b16 %v5149
      %v5301 = vunpack.c.l.b16 %v5150
      %v5302 = vunpack.c.l.b16 %v5151
      %v5303 = vunpack.c.l.b16 %v5152
      %v5304 = vunpack.c.l.b16 %v5153
      %v5305 = vunpack.c.l.b16 %v5154
      %v5306 = vunpack.c.l.b16 %v5155
      %v5307 = vunpack.c.l.b16 %v5156
      %v5308 = vunpack.c.l.b16 %v5157
      %v5309 = vunpack.c.l.b16 %v5158
      %v5310 = vpack.c.b16 %v5295, %v5294
      %v5311 = vpack.c.b16 %v5297, %v5296
      %v5312 = vpack.c.b16 %v5299, %v5298
      %v5313 = vpack.c.b16 %v5301, %v5300
      %v5314 = vpack.c.b16 %v5303, %v5302
      %v5315 = vpack.c.b16 %v5305, %v5304
      %v5316 = vpack.c.b16 %v5307, %v5306
      %v5317 = vpack.c.b16 %v5309, %v5308
      %5326 = vmatpush.bf16.msra.mxu0 %v5317
      %5327 = vmatpush.bf16.msra.mxu0 %v5316
      %5328 = vmatpush.bf16.msra.mxu0 %v5315
      %5329 = vmatpush.bf16.msra.mxu0 %v5314
      %5330 = vmatpush.bf16.msra.mxu0 %v5313
      %5331 = vmatpush.bf16.msra.mxu0 %v5312
      %5332 = vmatpush.bf16.msra.mxu0 %v5311
      %5333 = vmatpush.bf16.msra.mxu0 %v5310
      %5334 = vmatmul.bf16.gmra.mxu0 %v5213
      %v5335 = vpop.f32.mrf.mxu0
      %v5336 = vadd.f32 0.0, %v5335
      %v5337 = vpop.f32.mrf.mxu0
      %v5338 = vadd.f32 0.0, %v5337
      %5339 = vmatmul.bf16.gmra.mxu0 %v5221
      %v5340 = vpop.f32.mrf.mxu0
      %v5341 = vadd.f32 0.0, %v5340
      %v5342 = vpop.f32.mrf.mxu0
      %v5343 = vadd.f32 0.0, %v5342
      %5344 = vmatmul.bf16.gmra.mxu0 %v5229
      %v5345 = vpop.f32.mrf.mxu0
      %v5346 = vadd.f32 0.0, %v5345
      %v5347 = vpop.f32.mrf.mxu0
      %v5348 = vadd.f32 0.0, %v5347
      %5349 = vmatmul.bf16.gmra.mxu0 %v5237
      %v5350 = vpop.f32.mrf.mxu0
      %v5351 = vadd.f32 0.0, %v5350
      %v5352 = vpop.f32.mrf.mxu0
      %v5353 = vadd.f32 0.0, %v5352
      %5354 = vmatmul.bf16.gmra.mxu0 %v5245
      %v5355 = vpop.f32.mrf.mxu0
      %v5356 = vadd.f32 0.0, %v5355
      %v5357 = vpop.f32.mrf.mxu0
      %v5358 = vadd.f32 0.0, %v5357
      %5359 = vmatmul.bf16.gmra.mxu0 %v5253
      %v5360 = vpop.f32.mrf.mxu0
      %v5361 = vadd.f32 0.0, %v5360
      %v5362 = vpop.f32.mrf.mxu0
      %v5363 = vadd.f32 0.0, %v5362
      %5364 = vmatmul.bf16.gmra.mxu0 %v5261
      %v5365 = vpop.f32.mrf.mxu0
      %v5366 = vadd.f32 0.0, %v5365
      %v5367 = vpop.f32.mrf.mxu0
      %v5368 = vadd.f32 0.0, %v5367
      %5369 = vmatmul.bf16.gmra.mxu0 %v5269
      %v5370 = vpop.f32.mrf.mxu0
      %v5371 = vadd.f32 0.0, %v5370
      %v5372 = vpop.f32.mrf.mxu0
      %v5373 = vadd.f32 0.0, %v5372
      %5374 = vdwg.mxu0
      %v5375 = vadd.f32 %v5126, %v5336
      %v5376 = vadd.f32 %v5127, %v5338
      %v5377 = vadd.f32 %v5128, %v5341
      %v5378 = vadd.f32 %v5129, %v5343
      %v5379 = vadd.f32 %v5130, %v5346
      %v5380 = vadd.f32 %v5131, %v5348
      %v5381 = vadd.f32 %v5132, %v5351
      %v5382 = vadd.f32 %v5133, %v5353
      %v5383 = vadd.f32 %v5134, %v5356
      %v5384 = vadd.f32 %v5135, %v5358
      %v5385 = vadd.f32 %v5136, %v5361
      %v5386 = vadd.f32 %v5137, %v5363
      %v5387 = vadd.f32 %v5138, %v5366
      %v5388 = vadd.f32 %v5139, %v5368
      %v5389 = vadd.f32 %v5140, %v5371
      %v5390 = vadd.f32 %v5141, %v5373
      %5391 = vst [vmem:[#allocation4] sm:$0xff] %v5375
      %5392 = vst [vmem:[#allocation4 + $0x8] sm:$0xff] %v5376
      %5393 = vst [vmem:[#allocation4 + $0x10] sm:$0xff] %v5377
      %5394 = vst [vmem:[#allocation4 + $0x18] sm:$0xff] %v5378
      %5395 = vst [vmem:[#allocation4 + $0x20] sm:$0xff] %v5379
      %5396 = vst [vmem:[#allocation4 + $0x28] sm:$0xff] %v5380
      %5397 = vst [vmem:[#allocation4 + $0x30] sm:$0xff] %v5381
      %5398 = vst [vmem:[#allocation4 + $0x38] sm:$0xff] %v5382
      %5399 = vst [vmem:[#allocation4 + $0x40] sm:$0xff] %v5383
      %5400 = vst [vmem:[#allocation4 + $0x48] sm:$0xff] %v5384
      %5401 = vst [vmem:[#allocation4 + $0x50] sm:$0xff] %v5385
      %5402 = vst [vmem:[#allocation4 + $0x58] sm:$0xff] %v5386
      %5403 = vst [vmem:[#allocation4 + $0x60] sm:$0xff] %v5387
      %5404 = vst [vmem:[#allocation4 + $0x68] sm:$0xff] %v5388
      %5405 = vst [vmem:[#allocation4 + $0x70] sm:$0xff] %v5389
      %5406 = vst [vmem:[#allocation4 + $0x78] sm:$0xff] %v5390
      %v5407 = vld [vmem:[#allocation3 + $0x10] sm:$0xe]
      %v5408 = vld [vmem:[#allocation3 + $0x14] sm:$0xf]
      %v5409 = vld [vmem:[#allocation3 + $0x18] sm:$0xf]
      %v5410 = vld [vmem:[#allocation3 + $0x1c] sm:$0xf]
      %v5411 = vld [vmem:[#allocation3 + $0x20] sm:$0xf]
      %v5412 = vld [vmem:[#allocation3 + $0x24] sm:$0xf]
      %v5413 = vld [vmem:[#allocation3 + $0x28] sm:$0xf]
      %v5414 = vld [vmem:[#allocation3 + $0x2c] sm:$0xf]
      %v5415 = vld [vmem:[#allocation3 + $0x30] sm:$0xf]
      %v5416 = vld [vmem:[#allocation3 + $0x34] sm:$0xf]
      %v5417 = vld [vmem:[#allocation3 + $0x38] sm:$0xf]
      %v5418 = vld [vmem:[#allocation3 + $0x3c] sm:$0xf]
      %v5419 = vld [vmem:[#allocation3 + $0x40] sm:$0xf]
      %v5420 = vld [vmem:[#allocation3 + $0x44] sm:$0xf]
      %v5421 = vld [vmem:[#allocation3 + $0x48] sm:$0xf]
      %v5422 = vld [vmem:[#allocation3 + $0x4c] sm:$0xf]
      %v5423 = vld [vmem:[#allocation3 + $0x50] sm:$0x1]
      %v5424 = vld [vmem:[#allocation4] sm:$0xff]
      %v5425 = vld [vmem:[#allocation4 + $0x8] sm:$0xff]
      %v5426 = vld [vmem:[#allocation4 + $0x10] sm:$0xff]
      %v5427 = vld [vmem:[#allocation4 + $0x18] sm:$0xff]
      %v5428 = vld [vmem:[#allocation4 + $0x20] sm:$0xff]
      %v5429 = vld [vmem:[#allocation4 + $0x28] sm:$0xff]
      %v5430 = vld [vmem:[#allocation4 + $0x30] sm:$0xff]
      %v5431 = vld [vmem:[#allocation4 + $0x38] sm:$0xff]
      %v5432 = vld [vmem:[#allocation4 + $0x40] sm:$0xff]
      %v5433 = vld [vmem:[#allocation4 + $0x48] sm:$0xff]
      %v5434 = vld [vmem:[#allocation4 + $0x50] sm:$0xff]
      %v5435 = vld [vmem:[#allocation4 + $0x58] sm:$0xff]
      %v5436 = vld [vmem:[#allocation4 + $0x60] sm:$0xff]
      %v5437 = vld [vmem:[#allocation4 + $0x68] sm:$0xff]
      %v5438 = vld [vmem:[#allocation4 + $0x70] sm:$0xff]
      %v5439 = vld [vmem:[#allocation4 + $0x78] sm:$0xff]
      %s5440 = scalar_lea.vmem %s4, 512
      %v5441 = vld [vmem:[%s5440] sm:$0xf]
      %v5442 = vld [vmem:[%s5440 + $0x4] sm:$0xf]
      %v5443 = vld [vmem:[%s5440 + $0x8] sm:$0xf]
      %v5444 = vld [vmem:[%s5440 + $0xc] sm:$0xf]
      %v5445 = vld [vmem:[%s5440 + $0x10] sm:$0xf]
      %v5446 = vld [vmem:[%s5440 + $0x14] sm:$0xf]
      %v5447 = vld [vmem:[%s5440 + $0x18] sm:$0xf]
      %v5448 = vld [vmem:[%s5440 + $0x1c] sm:$0xf]
      %v5449 = vld [vmem:[%s5440 + $0x20] sm:$0xf]
      %v5450 = vld [vmem:[%s5440 + $0x24] sm:$0xf]
      %v5451 = vld [vmem:[%s5440 + $0x28] sm:$0xf]
      %v5452 = vld [vmem:[%s5440 + $0x2c] sm:$0xf]
      %v5453 = vld [vmem:[%s5440 + $0x30] sm:$0xf]
      %v5454 = vld [vmem:[%s5440 + $0x34] sm:$0xf]
      %v5455 = vld [vmem:[%s5440 + $0x38] sm:$0xf]
      %v5456 = vld [vmem:[%s5440 + $0x3c] sm:$0xf]
      %v5474 = vunpack.c.l.b16 %v5407
      %v5475 = vunpack.c.l.b16 %v5408
      %v5476 = vunpack.c.l.b16 %v5409
      %v5477 = vunpack.c.l.b16 %v5410
      %v5478 = vunpack.c.l.b16 %v5411
      %v5479 = vunpack.c.l.b16 %v5412
      %v5480 = vunpack.c.l.b16 %v5413
      %v5481 = vunpack.c.l.b16 %v5414
      %v5482 = vunpack.c.l.b16 %v5415
      %v5483 = vunpack.c.l.b16 %v5416
      %v5484 = vunpack.c.l.b16 %v5417
      %v5485 = vunpack.c.l.b16 %v5418
      %v5486 = vunpack.c.l.b16 %v5419
      %v5487 = vunpack.c.l.b16 %v5420
      %v5488 = vunpack.c.l.b16 %v5421
      %v5489 = vunpack.c.l.b16 %v5422
      %v5490 = vunpack.c.l.b16 %v5423
      %v5491 = vpack.c.b16 %v5475, %v5474
      %v5492 = vpack.c.b16 %v5477, %v5476
      %v5493 = vpack.c.b16 %v5479, %v5478
      %v5494 = vpack.c.b16 %v5481, %v5480
      %v5495 = vpack.c.b16 %v5483, %v5482
      %v5496 = vpack.c.b16 %v5485, %v5484
      %v5497 = vpack.c.b16 %v5487, %v5486
      %v5498 = vpack.c.b16 %v5489, %v5488
      %v5499 = vpack.c.b16 %v5490, %v5490
      %v5500 = vrot.slane %v5491, 1
      %v5501 = vrot.slane %v5492, 1
      %v5502 = vsel %vm1134, %v5500, %v5501
      %v5503 = vrot.slane %v5493, 1
      %v5504 = vsel %vm1134, %v5501, %v5503
      %v5505 = vrot.slane %v5494, 1
      %v5506 = vsel %vm1134, %v5503, %v5505
      %v5507 = vrot.slane %v5495, 1
      %v5508 = vsel %vm1134, %v5505, %v5507
      %v5509 = vrot.slane %v5496, 1
      %v5510 = vsel %vm1134, %v5507, %v5509
      %v5511 = vrot.slane %v5497, 1
      %v5512 = vsel %vm1134, %v5509, %v5511
      %v5513 = vrot.slane %v5498, 1
      %v5514 = vsel %vm1134, %v5511, %v5513
      %v5515 = vrot.slane %v5499, 1
      %v5516 = vsel %vm1134, %v5513, %v5515
      %v5541 = vunpack.c.l.b16 %v5441
      %v5542 = vunpack.c.l.b16 %v5442
      %v5543 = vunpack.c.l.b16 %v5443
      %v5544 = vunpack.c.l.b16 %v5444
      %v5545 = vunpack.c.l.b16 %v5445
      %v5546 = vunpack.c.l.b16 %v5446
      %v5547 = vunpack.c.l.b16 %v5447
      %v5548 = vunpack.c.l.b16 %v5448
      %v5549 = vunpack.c.l.b16 %v5449
      %v5550 = vunpack.c.l.b16 %v5450
      %v5551 = vunpack.c.l.b16 %v5451
      %v5552 = vunpack.c.l.b16 %v5452
      %v5553 = vunpack.c.l.b16 %v5453
      %v5554 = vunpack.c.l.b16 %v5454
      %v5555 = vunpack.c.l.b16 %v5455
      %v5556 = vunpack.c.l.b16 %v5456
      %v5557 = vpack.c.b16 %v5542, %v5541
      %v5558 = vpack.c.b16 %v5544, %v5543
      %v5559 = vpack.c.b16 %v5546, %v5545
      %v5560 = vpack.c.b16 %v5548, %v5547
      %v5561 = vpack.c.b16 %v5550, %v5549
      %v5562 = vpack.c.b16 %v5552, %v5551
      %v5563 = vpack.c.b16 %v5554, %v5553
      %v5564 = vpack.c.b16 %v5556, %v5555
      %5573 = vmatpush.bf16.msra.mxu0 %v5564
      %5574 = vmatpush.bf16.msra.mxu0 %v5563
      %5575 = vmatpush.bf16.msra.mxu0 %v5562
      %5576 = vmatpush.bf16.msra.mxu0 %v5561
      %5577 = vmatpush.bf16.msra.mxu0 %v5560
      %5578 = vmatpush.bf16.msra.mxu0 %v5559
      %5579 = vmatpush.bf16.msra.mxu0 %v5558
      %5580 = vmatpush.bf16.msra.mxu0 %v5557
      %5581 = vmatmul.bf16.gmra.mxu0 %v5502
      %v5582 = vpop.f32.mrf.mxu0
      %v5583 = vadd.f32 0.0, %v5582
      %v5584 = vpop.f32.mrf.mxu0
      %v5585 = vadd.f32 0.0, %v5584
      %5586 = vmatmul.bf16.gmra.mxu0 %v5504
      %v5587 = vpop.f32.mrf.mxu0
      %v5588 = vadd.f32 0.0, %v5587
      %v5589 = vpop.f32.mrf.mxu0
      %v5590 = vadd.f32 0.0, %v5589
      %5591 = vmatmul.bf16.gmra.mxu0 %v5506
      %v5592 = vpop.f32.mrf.mxu0
      %v5593 = vadd.f32 0.0, %v5592
      %v5594 = vpop.f32.mrf.mxu0
      %v5595 = vadd.f32 0.0, %v5594
      %5596 = vmatmul.bf16.gmra.mxu0 %v5508
      %v5597 = vpop.f32.mrf.mxu0
      %v5598 = vadd.f32 0.0, %v5597
      %v5599 = vpop.f32.mrf.mxu0
      %v5600 = vadd.f32 0.0, %v5599
      %5601 = vmatmul.bf16.gmra.mxu0 %v5510
      %v5602 = vpop.f32.mrf.mxu0
      %v5603 = vadd.f32 0.0, %v5602
      %v5604 = vpop.f32.mrf.mxu0
      %v5605 = vadd.f32 0.0, %v5604
      %5606 = vmatmul.bf16.gmra.mxu0 %v5512
      %v5607 = vpop.f32.mrf.mxu0
      %v5608 = vadd.f32 0.0, %v5607
      %v5609 = vpop.f32.mrf.mxu0
      %v5610 = vadd.f32 0.0, %v5609
      %5611 = vmatmul.bf16.gmra.mxu0 %v5514
      %v5612 = vpop.f32.mrf.mxu0
      %v5613 = vadd.f32 0.0, %v5612
      %v5614 = vpop.f32.mrf.mxu0
      %v5615 = vadd.f32 0.0, %v5614
      %5616 = vmatmul.bf16.gmra.mxu0 %v5516
      %v5617 = vpop.f32.mrf.mxu0
      %v5618 = vadd.f32 0.0, %v5617
      %v5619 = vpop.f32.mrf.mxu0
      %v5620 = vadd.f32 0.0, %v5619
      %5621 = vdwg.mxu0
      %v5622 = vadd.f32 %v5424, %v5583
      %v5623 = vadd.f32 %v5425, %v5585
      %v5624 = vadd.f32 %v5426, %v5588
      %v5625 = vadd.f32 %v5427, %v5590
      %v5626 = vadd.f32 %v5428, %v5593
      %v5627 = vadd.f32 %v5429, %v5595
      %v5628 = vadd.f32 %v5430, %v5598
      %v5629 = vadd.f32 %v5431, %v5600
      %v5630 = vadd.f32 %v5432, %v5603
      %v5631 = vadd.f32 %v5433, %v5605
      %v5632 = vadd.f32 %v5434, %v5608
      %v5633 = vadd.f32 %v5435, %v5610
      %v5634 = vadd.f32 %v5436, %v5613
      %v5635 = vadd.f32 %v5437, %v5615
      %v5636 = vadd.f32 %v5438, %v5618
      %v5637 = vadd.f32 %v5439, %v5620
      %5638 = vst [vmem:[#allocation4] sm:$0xff] %v5622
      %5639 = vst [vmem:[#allocation4 + $0x8] sm:$0xff] %v5623
      %5640 = vst [vmem:[#allocation4 + $0x10] sm:$0xff] %v5624
      %5641 = vst [vmem:[#allocation4 + $0x18] sm:$0xff] %v5625
      %5642 = vst [vmem:[#allocation4 + $0x20] sm:$0xff] %v5626
      %5643 = vst [vmem:[#allocation4 + $0x28] sm:$0xff] %v5627
      %5644 = vst [vmem:[#allocation4 + $0x30] sm:$0xff] %v5628
      %5645 = vst [vmem:[#allocation4 + $0x38] sm:$0xff] %v5629
      %5646 = vst [vmem:[#allocation4 + $0x40] sm:$0xff] %v5630
      %5647 = vst [vmem:[#allocation4 + $0x48] sm:$0xff] %v5631
      %5648 = vst [vmem:[#allocation4 + $0x50] sm:$0xff] %v5632
      %5649 = vst [vmem:[#allocation4 + $0x58] sm:$0xff] %v5633
      %5650 = vst [vmem:[#allocation4 + $0x60] sm:$0xff] %v5634
      %5651 = vst [vmem:[#allocation4 + $0x68] sm:$0xff] %v5635
      %5652 = vst [vmem:[#allocation4 + $0x70] sm:$0xff] %v5636
      %5653 = vst [vmem:[#allocation4 + $0x78] sm:$0xff] %v5637
      %v5654 = vld [vmem:[#allocation4] sm:$0xff]
      %v5655 = vld [vmem:[#allocation4 + $0x8] sm:$0xff]
      %v5656 = vld [vmem:[#allocation4 + $0x10] sm:$0xff]
      %v5657 = vld [vmem:[#allocation4 + $0x18] sm:$0xff]
      %v5658 = vld [vmem:[#allocation4 + $0x20] sm:$0xff]
      %v5659 = vld [vmem:[#allocation4 + $0x28] sm:$0xff]
      %v5660 = vld [vmem:[#allocation4 + $0x30] sm:$0xff]
      %v5661 = vld [vmem:[#allocation4 + $0x38] sm:$0xff]
      %v5662 = vld [vmem:[#allocation4 + $0x40] sm:$0xff]
      %v5663 = vld [vmem:[#allocation4 + $0x48] sm:$0xff]
      %v5664 = vld [vmem:[#allocation4 + $0x50] sm:$0xff]
      %v5665 = vld [vmem:[#allocation4 + $0x58] sm:$0xff]
      %v5666 = vld [vmem:[#allocation4 + $0x60] sm:$0xff]
      %v5667 = vld [vmem:[#allocation4 + $0x68] sm:$0xff]
      %v5668 = vld [vmem:[#allocation4 + $0x70] sm:$0xff]
      %v5669 = vld [vmem:[#allocation4 + $0x78] sm:$0xff]
      %v5670 = vld [vmem:[%s5] sm:$0x1]
      %v5672 = vperm.slane %v5670, 0
      %v5674 = vmul.f32 %v5654, %v5672
      %v5675 = vmul.f32 %v5655, %v5672
      %v5676 = vmul.f32 %v5656, %v5672
      %v5677 = vmul.f32 %v5657, %v5672
      %v5678 = vmul.f32 %v5658, %v5672
      %v5679 = vmul.f32 %v5659, %v5672
      %v5680 = vmul.f32 %v5660, %v5672
      %v5681 = vmul.f32 %v5661, %v5672
      %v5682 = vmul.f32 %v5662, %v5672
      %v5683 = vmul.f32 %v5663, %v5672
      %v5684 = vmul.f32 %v5664, %v5672
      %v5685 = vmul.f32 %v5665, %v5672
      %v5686 = vmul.f32 %v5666, %v5672
      %v5687 = vmul.f32 %v5667, %v5672
      %v5688 = vmul.f32 %v5668, %v5672
      %v5689 = vmul.f32 %v5669, %v5672
      %v5690 = vld [vmem:[%s6] sm:$0x1]
      %v5692 = vperm.slane %v5690, 0
      %v5694 = vadd.f32 %v5674, %v5692
      %v5695 = vadd.f32 %v5675, %v5692
      %v5696 = vadd.f32 %v5676, %v5692
      %v5697 = vadd.f32 %v5677, %v5692
      %v5698 = vadd.f32 %v5678, %v5692
      %v5699 = vadd.f32 %v5679, %v5692
      %v5700 = vadd.f32 %v5680, %v5692
      %v5701 = vadd.f32 %v5681, %v5692
      %v5702 = vadd.f32 %v5682, %v5692
      %v5703 = vadd.f32 %v5683, %v5692
      %v5704 = vadd.f32 %v5684, %v5692
      %v5705 = vadd.f32 %v5685, %v5692
      %v5706 = vadd.f32 %v5686, %v5692
      %v5707 = vadd.f32 %v5687, %v5692
      %v5708 = vadd.f32 %v5688, %v5692
      %v5709 = vadd.f32 %v5689, %v5692
      %v5710 = vmax.f32 %v5694, 0.0
      %v5711 = vmax.f32 %v5695, 0.0
      %v5712 = vmax.f32 %v5696, 0.0
      %v5713 = vmax.f32 %v5697, 0.0
      %v5714 = vmax.f32 %v5698, 0.0
      %v5715 = vmax.f32 %v5699, 0.0
      %v5716 = vmax.f32 %v5700, 0.0
      %v5717 = vmax.f32 %v5701, 0.0
      %v5718 = vmax.f32 %v5702, 0.0
      %v5719 = vmax.f32 %v5703, 0.0
      %v5720 = vmax.f32 %v5704, 0.0
      %v5721 = vmax.f32 %v5705, 0.0
      %v5722 = vmax.f32 %v5706, 0.0
      %v5723 = vmax.f32 %v5707, 0.0
      %v5724 = vmax.f32 %v5708, 0.0
      %v5725 = vmax.f32 %v5709, 0.0
      %v5726 = vpack.c.bf16 %v5711, %v5710
      %v5727 = vpack.c.bf16 %v5713, %v5712
      %v5728 = vpack.c.bf16 %v5715, %v5714
      %v5729 = vpack.c.bf16 %v5717, %v5716
      %v5730 = vpack.c.bf16 %v5719, %v5718
      %v5731 = vpack.c.bf16 %v5721, %v5720
      %v5732 = vpack.c.bf16 %v5723, %v5722
      %v5733 = vpack.c.bf16 %v5725, %v5724
      %v5734 = vld [vmem:[%s7] sm:$0xff]
      %v5735 = vld [vmem:[%s7 + $0x8] sm:$0xff]
      %v5736 = vld [vmem:[%s7 + $0x10] sm:$0xff]
      %v5737 = vld [vmem:[%s7 + $0x18] sm:$0xff]
      %v5738 = vld [vmem:[%s7 + $0x20] sm:$0xff]
      %v5739 = vld [vmem:[%s7 + $0x28] sm:$0xff]
      %v5740 = vld [vmem:[%s7 + $0x30] sm:$0xff]
      %v5741 = vld [vmem:[%s7 + $0x38] sm:$0xff]
      %v5742 = vld [vmem:[%s7 + $0x40] sm:$0xff]
      %v5743 = vld [vmem:[%s7 + $0x48] sm:$0xff]
      %v5744 = vld [vmem:[%s7 + $0x50] sm:$0xff]
      %v5745 = vld [vmem:[%s7 + $0x58] sm:$0xff]
      %v5746 = vld [vmem:[%s7 + $0x60] sm:$0xff]
      %v5747 = vld [vmem:[%s7 + $0x68] sm:$0xff]
      %v5748 = vld [vmem:[%s7 + $0x70] sm:$0xff]
      %v5749 = vld [vmem:[%s7 + $0x78] sm:$0xff]
      %v5750 = vld [vmem:[%s7 + $0x80] sm:$0xff]
      %v5751 = vld [vmem:[%s7 + $0x88] sm:$0xff]
      %v5752 = vld [vmem:[%s7 + $0x90] sm:$0xff]
      %v5753 = vld [vmem:[%s7 + $0x98] sm:$0xff]
      %v5754 = vld [vmem:[%s7 + $0xa0] sm:$0xff]
      %v5755 = vld [vmem:[%s7 + $0xa8] sm:$0xff]
      %v5756 = vld [vmem:[%s7 + $0xb0] sm:$0xff]
      %v5757 = vld [vmem:[%s7 + $0xb8] sm:$0xff]
      %v5758 = vld [vmem:[%s7 + $0xc0] sm:$0xff]
      %v5759 = vld [vmem:[%s7 + $0xc8] sm:$0xff]
      %v5760 = vld [vmem:[%s7 + $0xd0] sm:$0xff]
      %v5761 = vld [vmem:[%s7 + $0xd8] sm:$0xff]
      %v5762 = vld [vmem:[%s7 + $0xe0] sm:$0xff]
      %v5763 = vld [vmem:[%s7 + $0xe8] sm:$0xff]
      %v5764 = vld [vmem:[%s7 + $0xf0] sm:$0xff]
      %v5765 = vld [vmem:[%s7 + $0xf8] sm:$0xff]
      %v5766 = vld [vmem:[%s8] sm:$0xf]
      %v5768 = vperm.slane %v5766, 0
      %v5769 = vperm.slane %v5766, 1
      %v5770 = vperm.slane %v5766, 2
      %v5771 = vperm.slane %v5766, 3
      %v5808 = vunpack.c.l.b16 %v5734
      %v5809 = vunpack.c.h.b16 %v5734
      %v5810 = vunpack.c.l.b16 %v5735
      %v5811 = vunpack.c.h.b16 %v5735
      %v5812 = vunpack.c.l.b16 %v5736
      %v5813 = vunpack.c.h.b16 %v5736
      %v5814 = vunpack.c.l.b16 %v5737
      %v5815 = vunpack.c.h.b16 %v5737
      %v5816 = vunpack.c.l.b16 %v5738
      %v5817 = vunpack.c.h.b16 %v5738
      %v5818 = vunpack.c.l.b16 %v5739
      %v5819 = vunpack.c.h.b16 %v5739
      %v5820 = vunpack.c.l.b16 %v5740
      %v5821 = vunpack.c.h.b16 %v5740
      %v5822 = vunpack.c.l.b16 %v5741
      %v5823 = vunpack.c.h.b16 %v5741
      %v5824 = vunpack.c.l.b16 %v5742
      %v5825 = vunpack.c.h.b16 %v5742
      %v5826 = vunpack.c.l.b16 %v5743
      %v5827 = vunpack.c.h.b16 %v5743
      %v5828 = vunpack.c.l.b16 %v5744
      %v5829 = vunpack.c.h.b16 %v5744
      %v5830 = vunpack.c.l.b16 %v5745
      %v5831 = vunpack.c.h.b16 %v5745
      %v5832 = vunpack.c.l.b16 %v5746
      %v5833 = vunpack.c.h.b16 %v5746
      %v5834 = vunpack.c.l.b16 %v5747
      %v5835 = vunpack.c.h.b16 %v5747
      %v5836 = vunpack.c.l.b16 %v5748
      %v5837 = vunpack.c.h.b16 %v5748
      %v5838 = vunpack.c.l.b16 %v5749
      %v5839 = vunpack.c.h.b16 %v5749
      %v5840 = vunpack.c.l.b16 %v5750
      %v5841 = vunpack.c.h.b16 %v5750
      %v5842 = vunpack.c.l.b16 %v5751
      %v5843 = vunpack.c.h.b16 %v5751
      %v5844 = vunpack.c.l.b16 %v5752
      %v5845 = vunpack.c.h.b16 %v5752
      %v5846 = vunpack.c.l.b16 %v5753
      %v5847 = vunpack.c.h.b16 %v5753
      %v5848 = vunpack.c.l.b16 %v5754
      %v5849 = vunpack.c.h.b16 %v5754
      %v5850 = vunpack.c.l.b16 %v5755
      %v5851 = vunpack.c.h.b16 %v5755
      %v5852 = vunpack.c.l.b16 %v5756
      %v5853 = vunpack.c.h.b16 %v5756
      %v5854 = vunpack.c.l.b16 %v5757
      %v5855 = vunpack.c.h.b16 %v5757
      %v5856 = vunpack.c.l.b16 %v5758
      %v5857 = vunpack.c.h.b16 %v5758
      %v5858 = vunpack.c.l.b16 %v5759
      %v5859 = vunpack.c.h.b16 %v5759
      %v5860 = vunpack.c.l.b16 %v5760
      %v5861 = vunpack.c.h.b16 %v5760
      %v5862 = vunpack.c.l.b16 %v5761
      %v5863 = vunpack.c.h.b16 %v5761
      %v5864 = vunpack.c.l.b16 %v5762
      %v5865 = vunpack.c.h.b16 %v5762
      %v5866 = vunpack.c.l.b16 %v5763
      %v5867 = vunpack.c.h.b16 %v5763
      %v5868 = vunpack.c.l.b16 %v5764
      %v5869 = vunpack.c.h.b16 %v5764
      %v5870 = vunpack.c.l.b16 %v5765
      %v5871 = vunpack.c.h.b16 %v5765
      %v5872 = vpack.c.b16 %v5812, %v5808
      %v5873 = vpack.c.b16 %v5813, %v5809
      %v5874 = vpack.c.b16 %v5814, %v5810
      %v5875 = vpack.c.b16 %v5815, %v5811
      %v5876 = vpack.c.b16 %v5820, %v5816
      %v5877 = vpack.c.b16 %v5821, %v5817
      %v5878 = vpack.c.b16 %v5822, %v5818
      %v5879 = vpack.c.b16 %v5823, %v5819
      %v5880 = vpack.c.b16 %v5828, %v5824
      %v5881 = vpack.c.b16 %v5829, %v5825
      %v5882 = vpack.c.b16 %v5830, %v5826
      %v5883 = vpack.c.b16 %v5831, %v5827
      %v5884 = vpack.c.b16 %v5836, %v5832
      %v5885 = vpack.c.b16 %v5837, %v5833
      %v5886 = vpack.c.b16 %v5838, %v5834
      %v5887 = vpack.c.b16 %v5839, %v5835
      %v5888 = vpack.c.b16 %v5844, %v5840
      %v5889 = vpack.c.b16 %v5845, %v5841
      %v5890 = vpack.c.b16 %v5846, %v5842
      %v5891 = vpack.c.b16 %v5847, %v5843
      %v5892 = vpack.c.b16 %v5852, %v5848
      %v5893 = vpack.c.b16 %v5853, %v5849
      %v5894 = vpack.c.b16 %v5854, %v5850
      %v5895 = vpack.c.b16 %v5855, %v5851
      %v5896 = vpack.c.b16 %v5860, %v5856
      %v5897 = vpack.c.b16 %v5861, %v5857
      %v5898 = vpack.c.b16 %v5862, %v5858
      %v5899 = vpack.c.b16 %v5863, %v5859
      %v5900 = vpack.c.b16 %v5868, %v5864
      %v5901 = vpack.c.b16 %v5869, %v5865
      %v5902 = vpack.c.b16 %v5870, %v5866
      %v5903 = vpack.c.b16 %v5871, %v5867
      %5936 = vmatpush.bf16.msra.mxu0 %v5900
      %5937 = vmatpush.bf16.msra.mxu0 %v5896
      %5938 = vmatpush.bf16.msra.mxu0 %v5892
      %5939 = vmatpush.bf16.msra.mxu0 %v5888
      %5940 = vmatpush.bf16.msra.mxu0 %v5884
      %5941 = vmatpush.bf16.msra.mxu0 %v5880
      %5942 = vmatpush.bf16.msra.mxu0 %v5876
      %5943 = vmatpush.bf16.msra.mxu0 %v5872
      %5944 = vmatmul.bf16.gmra.mxu0 %v5726
      %v5945 = vpop.f32.mrf.mxu0
      %v5946 = vadd.f32 %v5768, %v5945
      %v5947 = vpop.f32.mrf.mxu0
      %v5948 = vadd.f32 %v5768, %v5947
      %5949 = vmatmul.bf16.gmra.mxu0 %v5727
      %v5950 = vpop.f32.mrf.mxu0
      %v5951 = vadd.f32 %v5768, %v5950
      %v5952 = vpop.f32.mrf.mxu0
      %v5953 = vadd.f32 %v5768, %v5952
      %5954 = vmatmul.bf16.gmra.mxu0 %v5728
      %v5955 = vpop.f32.mrf.mxu0
      %v5956 = vadd.f32 %v5768, %v5955
      %v5957 = vpop.f32.mrf.mxu0
      %v5958 = vadd.f32 %v5768, %v5957
      %5959 = vmatmul.bf16.gmra.mxu0 %v5729
      %v5960 = vpop.f32.mrf.mxu0
      %v5961 = vadd.f32 %v5768, %v5960
      %v5962 = vpop.f32.mrf.mxu0
      %v5963 = vadd.f32 %v5768, %v5962
      %5964 = vmatmul.bf16.gmra.mxu0 %v5730
      %v5965 = vpop.f32.mrf.mxu0
      %v5966 = vadd.f32 %v5768, %v5965
      %v5967 = vpop.f32.mrf.mxu0
      %v5968 = vadd.f32 %v5768, %v5967
      %5969 = vmatmul.bf16.gmra.mxu0 %v5731
      %v5970 = vpop.f32.mrf.mxu0
      %v5971 = vadd.f32 %v5768, %v5970
      %v5972 = vpop.f32.mrf.mxu0
      %v5973 = vadd.f32 %v5768, %v5972
      %5974 = vmatmul.bf16.gmra.mxu0 %v5732
      %v5975 = vpop.f32.mrf.mxu0
      %v5976 = vadd.f32 %v5768, %v5975
      %v5977 = vpop.f32.mrf.mxu0
      %v5978 = vadd.f32 %v5768, %v5977
      %5979 = vmatmul.bf16.gmra.mxu0 %v5733
      %v5980 = vpop.f32.mrf.mxu0
      %v5981 = vadd.f32 %v5768, %v5980
      %v5982 = vpop.f32.mrf.mxu0
      %v5983 = vadd.f32 %v5768, %v5982
      %5984 = vdwg.mxu0
      %5985 = vmatpush.bf16.msra.mxu0 %v5901
      %5986 = vmatpush.bf16.msra.mxu0 %v5897
      %5987 = vmatpush.bf16.msra.mxu0 %v5893
      %5988 = vmatpush.bf16.msra.mxu0 %v5889
      %5989 = vmatpush.bf16.msra.mxu0 %v5885
      %5990 = vmatpush.bf16.msra.mxu0 %v5881
      %5991 = vmatpush.bf16.msra.mxu0 %v5877
      %5992 = vmatpush.bf16.msra.mxu0 %v5873
      %5993 = vmatmul.bf16.gmra.mxu0 %v5726
      %v5994 = vpop.f32.mrf.mxu0
      %v5995 = vadd.f32 %v5769, %v5994
      %v5996 = vpop.f32.mrf.mxu0
      %v5997 = vadd.f32 %v5769, %v5996
      %5998 = vmatmul.bf16.gmra.mxu0 %v5727
      %v5999 = vpop.f32.mrf.mxu0
      %v6000 = vadd.f32 %v5769, %v5999
      %v6001 = vpop.f32.mrf.mxu0
      %v6002 = vadd.f32 %v5769, %v6001
      %6003 = vmatmul.bf16.gmra.mxu0 %v5728
      %v6004 = vpop.f32.mrf.mxu0
      %v6005 = vadd.f32 %v5769, %v6004
      %v6006 = vpop.f32.mrf.mxu0
      %v6007 = vadd.f32 %v5769, %v6006
      %6008 = vmatmul.bf16.gmra.mxu0 %v5729
      %v6009 = vpop.f32.mrf.mxu0
      %v6010 = vadd.f32 %v5769, %v6009
      %v6011 = vpop.f32.mrf.mxu0
      %v6012 = vadd.f32 %v5769, %v6011
      %6013 = vmatmul.bf16.gmra.mxu0 %v5730
      %v6014 = vpop.f32.mrf.mxu0
      %v6015 = vadd.f32 %v5769, %v6014
      %v6016 = vpop.f32.mrf.mxu0
      %v6017 = vadd.f32 %v5769, %v6016
      %6018 = vmatmul.bf16.gmra.mxu0 %v5731
      %v6019 = vpop.f32.mrf.mxu0
      %v6020 = vadd.f32 %v5769, %v6019
      %v6021 = vpop.f32.mrf.mxu0
      %v6022 = vadd.f32 %v5769, %v6021
      %6023 = vmatmul.bf16.gmra.mxu0 %v5732
      %v6024 = vpop.f32.mrf.mxu0
      %v6025 = vadd.f32 %v5769, %v6024
      %v6026 = vpop.f32.mrf.mxu0
      %v6027 = vadd.f32 %v5769, %v6026
      %6028 = vmatmul.bf16.gmra.mxu0 %v5733
      %v6029 = vpop.f32.mrf.mxu0
      %v6030 = vadd.f32 %v5769, %v6029
      %v6031 = vpop.f32.mrf.mxu0
      %v6032 = vadd.f32 %v5769, %v6031
      %6033 = vdwg.mxu0
      %6034 = vmatpush.bf16.msra.mxu0 %v5902
      %6035 = vmatpush.bf16.msra.mxu0 %v5898
      %6036 = vmatpush.bf16.msra.mxu0 %v5894
      %6037 = vmatpush.bf16.msra.mxu0 %v5890
      %6038 = vmatpush.bf16.msra.mxu0 %v5886
      %6039 = vmatpush.bf16.msra.mxu0 %v5882
      %6040 = vmatpush.bf16.msra.mxu0 %v5878
      %6041 = vmatpush.bf16.msra.mxu0 %v5874
      %6042 = vmatmul.bf16.gmra.mxu0 %v5726
      %v6043 = vpop.f32.mrf.mxu0
      %v6044 = vadd.f32 %v5770, %v6043
      %v6045 = vpop.f32.mrf.mxu0
      %v6046 = vadd.f32 %v5770, %v6045
      %6047 = vmatmul.bf16.gmra.mxu0 %v5727
      %v6048 = vpop.f32.mrf.mxu0
      %v6049 = vadd.f32 %v5770, %v6048
      %v6050 = vpop.f32.mrf.mxu0
      %v6051 = vadd.f32 %v5770, %v6050
      %6052 = vmatmul.bf16.gmra.mxu0 %v5728
      %v6053 = vpop.f32.mrf.mxu0
      %v6054 = vadd.f32 %v5770, %v6053
      %v6055 = vpop.f32.mrf.mxu0
      %v6056 = vadd.f32 %v5770, %v6055
      %6057 = vmatmul.bf16.gmra.mxu0 %v5729
      %v6058 = vpop.f32.mrf.mxu0
      %v6059 = vadd.f32 %v5770, %v6058
      %v6060 = vpop.f32.mrf.mxu0
      %v6061 = vadd.f32 %v5770, %v6060
      %6062 = vmatmul.bf16.gmra.mxu0 %v5730
      %v6063 = vpop.f32.mrf.mxu0
      %v6064 = vadd.f32 %v5770, %v6063
      %v6065 = vpop.f32.mrf.mxu0
      %v6066 = vadd.f32 %v5770, %v6065
      %6067 = vmatmul.bf16.gmra.mxu0 %v5731
      %v6068 = vpop.f32.mrf.mxu0
      %v6069 = vadd.f32 %v5770, %v6068
      %v6070 = vpop.f32.mrf.mxu0
      %v6071 = vadd.f32 %v5770, %v6070
      %6072 = vmatmul.bf16.gmra.mxu0 %v5732
      %v6073 = vpop.f32.mrf.mxu0
      %v6074 = vadd.f32 %v5770, %v6073
      %v6075 = vpop.f32.mrf.mxu0
      %v6076 = vadd.f32 %v5770, %v6075
      %6077 = vmatmul.bf16.gmra.mxu0 %v5733
      %v6078 = vpop.f32.mrf.mxu0
      %v6079 = vadd.f32 %v5770, %v6078
      %v6080 = vpop.f32.mrf.mxu0
      %v6081 = vadd.f32 %v5770, %v6080
      %6082 = vdwg.mxu0
      %6083 = vmatpush.bf16.msra.mxu0 %v5903
      %6084 = vmatpush.bf16.msra.mxu0 %v5899
      %6085 = vmatpush.bf16.msra.mxu0 %v5895
      %6086 = vmatpush.bf16.msra.mxu0 %v5891
      %6087 = vmatpush.bf16.msra.mxu0 %v5887
      %6088 = vmatpush.bf16.msra.mxu0 %v5883
      %6089 = vmatpush.bf16.msra.mxu0 %v5879
      %6090 = vmatpush.bf16.msra.mxu0 %v5875
      %6091 = vmatmul.bf16.gmra.mxu0 %v5726
      %v6092 = vpop.f32.mrf.mxu0
      %v6093 = vadd.f32 %v5771, %v6092
      %v6094 = vpop.f32.mrf.mxu0
      %v6095 = vadd.f32 %v5771, %v6094
      %6096 = vmatmul.bf16.gmra.mxu0 %v5727
      %v6097 = vpop.f32.mrf.mxu0
      %v6098 = vadd.f32 %v5771, %v6097
      %v6099 = vpop.f32.mrf.mxu0
      %v6100 = vadd.f32 %v5771, %v6099
      %6101 = vmatmul.bf16.gmra.mxu0 %v5728
      %v6102 = vpop.f32.mrf.mxu0
      %v6103 = vadd.f32 %v5771, %v6102
      %v6104 = vpop.f32.mrf.mxu0
      %v6105 = vadd.f32 %v5771, %v6104
      %6106 = vmatmul.bf16.gmra.mxu0 %v5729
      %v6107 = vpop.f32.mrf.mxu0
      %v6108 = vadd.f32 %v5771, %v6107
      %v6109 = vpop.f32.mrf.mxu0
      %v6110 = vadd.f32 %v5771, %v6109
      %6111 = vmatmul.bf16.gmra.mxu0 %v5730
      %v6112 = vpop.f32.mrf.mxu0
      %v6113 = vadd.f32 %v5771, %v6112
      %v6114 = vpop.f32.mrf.mxu0
      %v6115 = vadd.f32 %v5771, %v6114
      %6116 = vmatmul.bf16.gmra.mxu0 %v5731
      %v6117 = vpop.f32.mrf.mxu0
      %v6118 = vadd.f32 %v5771, %v6117
      %v6119 = vpop.f32.mrf.mxu0
      %v6120 = vadd.f32 %v5771, %v6119
      %6121 = vmatmul.bf16.gmra.mxu0 %v5732
      %v6122 = vpop.f32.mrf.mxu0
      %v6123 = vadd.f32 %v5771, %v6122
      %v6124 = vpop.f32.mrf.mxu0
      %v6125 = vadd.f32 %v5771, %v6124
      %6126 = vmatmul.bf16.gmra.mxu0 %v5733
      %v6127 = vpop.f32.mrf.mxu0
      %v6128 = vadd.f32 %v5771, %v6127
      %v6129 = vpop.f32.mrf.mxu0
      %v6130 = vadd.f32 %v5771, %v6129
      %6131 = vdwg.mxu0
      %v6132 = vpack.c.bf16 %v5995, %v5946
      %v6133 = vpack.c.bf16 %v6093, %v6044
      %v6134 = vpack.c.bf16 %v5997, %v5948
      %v6135 = vpack.c.bf16 %v6095, %v6046
      %v6136 = vpack.c.bf16 %v6000, %v5951
      %v6137 = vpack.c.bf16 %v6098, %v6049
      %v6138 = vpack.c.bf16 %v6002, %v5953
      %v6139 = vpack.c.bf16 %v6100, %v6051
      %v6140 = vpack.c.bf16 %v6005, %v5956
      %v6141 = vpack.c.bf16 %v6103, %v6054
      %v6142 = vpack.c.bf16 %v6007, %v5958
      %v6143 = vpack.c.bf16 %v6105, %v6056
      %v6144 = vpack.c.bf16 %v6010, %v5961
      %v6145 = vpack.c.bf16 %v6108, %v6059
      %v6146 = vpack.c.bf16 %v6012, %v5963
      %v6147 = vpack.c.bf16 %v6110, %v6061
      %v6148 = vpack.c.bf16 %v6015, %v5966
      %v6149 = vpack.c.bf16 %v6113, %v6064
      %v6150 = vpack.c.bf16 %v6017, %v5968
      %v6151 = vpack.c.bf16 %v6115, %v6066
      %v6152 = vpack.c.bf16 %v6020, %v5971
      %v6153 = vpack.c.bf16 %v6118, %v6069
      %v6154 = vpack.c.bf16 %v6022, %v5973
      %v6155 = vpack.c.bf16 %v6120, %v6071
      %v6156 = vpack.c.bf16 %v6025, %v5976
      %v6157 = vpack.c.bf16 %v6123, %v6074
      %v6158 = vpack.c.bf16 %v6027, %v5978
      %v6159 = vpack.c.bf16 %v6125, %v6076
      %v6160 = vpack.c.bf16 %v6030, %v5981
      %v6161 = vpack.c.bf16 %v6128, %v6079
      %v6162 = vpack.c.bf16 %v6032, %v5983
      %v6163 = vpack.c.bf16 %v6130, %v6081
      %6164 = vst [vmem:[%s308] sm:$0xff] %v6132
      %6165 = vst [vmem:[%s308 + $0x8] sm:$0xff] %v6133
      %6166 = vst [vmem:[%s308 + $0x10] sm:$0xff] %v6134
      %6167 = vst [vmem:[%s308 + $0x18] sm:$0xff] %v6135
      %6168 = vst [vmem:[%s308 + $0x20] sm:$0xff] %v6136
      %6169 = vst [vmem:[%s308 + $0x28] sm:$0xff] %v6137
      %6170 = vst [vmem:[%s308 + $0x30] sm:$0xff] %v6138
      %6171 = vst [vmem:[%s308 + $0x38] sm:$0xff] %v6139
      %6172 = vst [vmem:[%s308 + $0x40] sm:$0xff] %v6140
      %6173 = vst [vmem:[%s308 + $0x48] sm:$0xff] %v6141
      %6174 = vst [vmem:[%s308 + $0x50] sm:$0xff] %v6142
      %6175 = vst [vmem:[%s308 + $0x58] sm:$0xff] %v6143
      %6176 = vst [vmem:[%s308 + $0x60] sm:$0xff] %v6144
      %6177 = vst [vmem:[%s308 + $0x68] sm:$0xff] %v6145
      %6178 = vst [vmem:[%s308 + $0x70] sm:$0xff] %v6146
      %6179 = vst [vmem:[%s308 + $0x78] sm:$0xff] %v6147
      %6180 = vst [vmem:[%s308 + $0x80] sm:$0xff] %v6148
      %6181 = vst [vmem:[%s308 + $0x88] sm:$0xff] %v6149
      %6182 = vst [vmem:[%s308 + $0x90] sm:$0xff] %v6150
      %6183 = vst [vmem:[%s308 + $0x98] sm:$0xff] %v6151
      %6184 = vst [vmem:[%s308 + $0xa0] sm:$0xff] %v6152
      %6185 = vst [vmem:[%s308 + $0xa8] sm:$0xff] %v6153
      %6186 = vst [vmem:[%s308 + $0xb0] sm:$0xff] %v6154
      %6187 = vst [vmem:[%s308 + $0xb8] sm:$0xff] %v6155
      %6188 = vst [vmem:[%s308 + $0xc0] sm:$0xff] %v6156
      %6189 = vst [vmem:[%s308 + $0xc8] sm:$0xff] %v6157
      %6190 = vst [vmem:[%s308 + $0xd0] sm:$0xff] %v6158
      %6191 = vst [vmem:[%s308 + $0xd8] sm:$0xff] %v6159
      %6192 = vst [vmem:[%s308 + $0xe0] sm:$0xff] %v6160
      %6193 = vst [vmem:[%s308 + $0xe8] sm:$0xff] %v6161
      %6194 = vst [vmem:[%s308 + $0xf0] sm:$0xff] %v6162
      %6195 = vst [vmem:[%s308 + $0xf8] sm:$0xff] %v6163
      %p6196 = scmp.lt.s32.totalorder %s24, 1
      %s6197 = scalar_select %p6196, %s24, 1
      %p6198 = scmp.lt.s32.totalorder %s25, 1
      %s6199 = scalar_select %p6198, %s25, 1
      %s6200 = smul.addr %s6199, 64
      %s6201 = smul.addr %s6197, 128
      %s6202 = sadd.s32 %s6200, %s6201
      %s6203 = smul.addr %s6202, 4
      %s6204 = scalar_lea.vmem %s9, %s6203
      // Predicated region
      $region72: #{decoder_block_forward.1} parent=51 // pred_check
        %p6205 = pneg %p220
      $region73: #{decoder_block_forward.1} parent=51 // pred_check_branch
        %6207 = sbr.rel (%p6205) target = $region75
      $region74: #{decoder_block_forward.1} parent=51 // pred_region
        _
      $region75: #{decoder_block_forward.1} parent=51 // pred_fallthru
        _
    $region52: #{decoder_block_forward.1} parent=5 // pred_fallthru
      _
    %p6208 = scmp.le.s32.totalorder 2, %s15
    // Predicated region
    $region76: #{decoder_block_forward.1} parent=5 // pred_check
      %p6209 = pneg %p6208
    $region77: #{decoder_block_forward.1} parent=5 // pred_check_branch
      %6211 = sbr.rel (%p6209) target = $region79
    $region78: #{decoder_block_forward.1} parent=5 // pred_region
      %s6212 = ssub.s32 %s15, 2
      // Predicated region
      $region80: #{decoder_block_forward.1} parent=78 // pred_check
        %p6213 = pneg %p226
      $region81: #{decoder_block_forward.1} parent=78 // pred_check_branch
        %6215 = sbr.rel (%p6213) target = $region83
      $region82: #{decoder_block_forward.1} parent=78 // pred_region
        %p6216 = scmp.lt.s32.totalorder %s26, 1
        %s6217 = scalar_select %p6216, %s26, 1
        %p6218 = scmp.lt.s32.totalorder %s27, 1
        %s6219 = scalar_select %p6218, %s27, 1
        %s6220 = smul.addr %s6219, 64
        %s6221 = smul.addr %s6217, 128
        %s6222 = sadd.s32 %s6220, %s6221
        %s6223 = smul.addr %s6222, 4
        %s6224 = scalar_lea.vmem %s9, %s6223
      $region83: #{decoder_block_forward.1} parent=78 // pred_fallthru
        _
    $region79: #{decoder_block_forward.1} parent=5 // pred_fallthru
      _
  $region6: #{decoder_block_forward.1} parent=0 // loop_footer
    %s19 = sadd.s32 1, %s15
  $region7: #{decoder_block_forward.1} parent=0 // loop_footer_branch
    %14 = sbr.rel target = $region3
  $region8: #{decoder_block_forward.1} parent=0 // loop_exit
    _
  %6225 = vsyncmov [#allocation5]
  %s6226 = vpop.sfrf %6225
  %p6227 = scmp.eq.s32.totalorder %s6226, 0
  %p6228 = pneg %p6227
  %6230 = shalt.err (%p6228)

</llo_original>
